<compile_context>
chip_gen: v6e
topology: v6e:2x2x1
jax: 0.10.0
libtpu: 0.0.40
codegen_flags: <defaults>
</compile_context>

<pallas_src>
import math
import functools

import jax
import jax.numpy as jnp
from jax.experimental import pallas as pl
from jax.experimental.pallas import tpu as pltpu


def mha_kernel(q_ref, k_ref, v_ref,      # (tq, D), (S, D), (S, D) activations (batch squeezed)
               wqkv_ref,                 # (3, D, D) bf16; W_q pre-scaled by 1/sqrt(d_k)
               bqkv_ref,                 # (3, 1, D) f32;  b_q pre-scaled
               wo_ref,                   # (H, d_k, D) bf16 head-major output projection
               bo_ref,                   # (1, D) f32
               o_ref,                    # (tq, D) output (batch squeezed)
               *, num_heads):
    H = num_heads
    tq, D = q_ref.shape
    d_k = D // H
    bf16 = jnp.bfloat16
    f32 = jnp.float32

    # Lane-dense, full-width projections (N = D): bf16 operands, f32 accumulation.
    # The 1/sqrt(d_k) scale is already folded into wqkv_ref[0] / bqkv_ref[0].
    q = (jnp.dot(q_ref[...].astype(bf16), wqkv_ref[0],
                 preferred_element_type=f32) + bqkv_ref[0]).astype(bf16)   # (tq, D)
    k = (jnp.dot(k_ref[...].astype(bf16), wqkv_ref[1],
                 preferred_element_type=f32) + bqkv_ref[1]).astype(bf16)   # (S, D)
    v = (jnp.dot(v_ref[...].astype(bf16), wqkv_ref[2],
                 preferred_element_type=f32) + bqkv_ref[2]).astype(bf16)   # (S, D)

    # Per-head attention + output projection, statically unrolled (H is small).
    # Only (tq, S) / (tq, d_k) temporaries are live within one head iteration.
    acc = jnp.zeros((tq, D), f32)
    for h in range(H):
        lo = h * d_k
        qh = q[:, lo:lo + d_k]                                    # (tq, d_k) bf16
        kh = k[:, lo:lo + d_k]                                    # (S,  d_k) bf16
        vh = v[:, lo:lo + d_k]                                    # (S,  d_k) bf16

        s = jnp.einsum('qd,kd->qk', qh, kh,
                       preferred_element_type=f32)                # (tq, S) f32, pre-scaled
        m = jnp.max(s, axis=-1, keepdims=True)
        e = jnp.exp(s - m)                                        # stable softmax numerator
        l = jnp.sum(e, axis=-1, keepdims=True)                    # (tq, 1)

        pv = jnp.einsum('qk,kd->qd', e.astype(bf16), vh,
                        preferred_element_type=f32)               # (tq, d_k)
        attn_h = pv * (1.0 / l)                                   # exact divide on (tq, 1)

        # Output projection with combine_heads folded in (accumulating head loop).
        acc = acc + jnp.dot(attn_h.astype(bf16), wo_ref[h],
                            preferred_element_type=f32)           # (tq, D)

    o_ref[...] = (acc + bo_ref[...]).astype(o_ref.dtype)


def _const_spec(block_shape, single_buffer):
    """BlockSpec for a grid-constant operand (weights/biases)."""
    zeros = (0,) * len(block_shape)
    index_map = lambda b, qi: zeros
    if single_buffer:
        # Constant block index -> no need to double-buffer; halves weight residency.
        return pl.BlockSpec(block_shape, index_map,
                            pipeline_mode=pl.Buffered(buffer_count=1))
    return pl.BlockSpec(block_shape, index_map)


def _vmem_limit_bytes(S, D, H, d_k, tq):
    """Per-step VMEM footprint estimate (blocks + temporaries) with headroom."""
    f32, bf16 = 4, 2
    weights = (3 * D * D + H * d_k * D) * bf16 + (3 * D + D) * f32  # single-buffered
    act_blocks = 2 * (tq * D + 2 * S * D) * f32                     # Q/K/V, double-buffered
    out_block = 2 * tq * D * f32
    temps = (tq + 2 * S) * D * bf16 + 2 * tq * S * f32 + 2 * tq * D * f32
    est = weights + act_blocks + out_block + temps
    return int(min(100 * 1024 * 1024, max(2 * est, 32 * 1024 * 1024)))


def _mha_pallas(Q, K, V, w_qkv, b_qkv, wo_h, bo_f, *,
                num_heads, tq, single_buffer_weights):
    B, S, D = Q.shape
    d_k = D // num_heads
    n_q = S // tq

    act_q = pl.BlockSpec((pl.Squeezed(), tq, D), lambda b, qi: (b, qi, 0))
    act_kv = pl.BlockSpec((pl.Squeezed(), S, D), lambda b, qi: (b, 0, 0))
    in_specs = [
        act_q, act_kv, act_kv,
        _const_spec((3, D, D), single_buffer_weights),
        _const_spec((3, 1, D), single_buffer_weights),
        _const_spec((num_heads, d_k, D), single_buffer_weights),
        _const_spec((1, D), single_buffer_weights),
    ]
    out_spec = pl.BlockSpec((pl.Squeezed(), tq, D), lambda b, qi: (b, qi, 0))

    kern = functools.partial(mha_kernel, num_heads=num_heads)

    return pl.pallas_call(
        kern,
        out_shape=jax.ShapeDtypeStruct((B, S, D), Q.dtype),
        grid=(B, n_q),
        in_specs=in_specs,
        out_specs=out_spec,
        compiler_params=pltpu.CompilerParams(
            dimension_semantics=("parallel", "parallel"),
            vmem_limit_bytes=_vmem_limit_bytes(S, D, num_heads, d_k, tq)),
    )(Q, K, V, w_qkv, b_qkv, wo_h, bo_f)


def multi_head_attention(Q, K, V, params, num_heads):
    """Pallas-backed forward of the torch MultiHeadAttention module (mask=None)."""
    B, S, D = Q.shape
    assert D % num_heads == 0
    d_k = D // num_heads
    wq, bq, wk, bk, wv, bv, wo, bo = params
    bf16 = jnp.bfloat16
    f32 = jnp.float32

    # Host-side (XLA) one-time weight packing:
    #  - fold the softmax scale into W_q / b_q,
    #  - stack W_q/W_k/W_v and biases (single DMA each),
    #  - head-major W_o for the accumulating per-head output projection.
    scale = 1.0 / math.sqrt(d_k)
    w_qkv = jnp.stack([wq * scale, wk, wv]).astype(bf16)          # (3, D, D)
    b_qkv = jnp.stack([bq * scale, bk, bv]).astype(f32)           # (3, 1, D)
    wo_h = wo.reshape(num_heads, d_k, D).astype(bf16)             # (H, d_k, D)
    bo_f = bo.astype(f32)                                         # (1, D)

    # Query-tile size: lane/sublane friendly and divides S (full S if small).
    tq = S
    for cand in (512, 256, 128):
        if S % cand == 0:
            tq = cand
            break

    call = functools.partial(_mha_pallas, Q, K, V, w_qkv, b_qkv, wo_h, bo_f,
                             num_heads=num_heads, tq=tq)
    try:
        return jax.block_until_ready(call(single_buffer_weights=True))
    except Exception:
        # pl.Buffered(1) unsupported on this jax/libtpu -> default double buffering.
        return jax.block_until_ready(call(single_buffer_weights=False))


def init_params(key, d_model):
    """Deterministic nn.Linear-style init: W (D_in, D_out) pre-transposed, b (1, D)."""
    ks = jax.random.split(key, 8)
    bound = 1.0 / math.sqrt(d_model)

    def lin(kw, kb):
        w = jax.random.uniform(kw, (d_model, d_model), jnp.float32, -bound, bound)
        b = jax.random.uniform(kb, (1, d_model), jnp.float32, -bound, bound)
        return w, b

    wq, bq = lin(ks[0], ks[1])
    wk, bk = lin(ks[2], ks[3])
    wv, bv = lin(ks[4], ks[5])
    wo, bo = lin(ks[6], ks[7])
    return (wq, bq, wk, bk, wv, bv, wo, bo)


def reference_mha(Q, K, V, params, num_heads):
    """Pure-JAX f32 reference mirroring the torch module exactly (mask=None)."""
    wq, bq, wk, bk, wv, bv, wo, bo = params
    B, S, D = Q.shape
    d_k = D // num_heads

    def split_heads(x):
        return x.reshape(B, S, num_heads, d_k).transpose(0, 2, 1, 3)

    q = split_heads(Q @ wq + bq)
    k = split_heads(K @ wk + bk)
    v = split_heads(V @ wv + bv)
    scores = jnp.einsum("bhqd,bhkd->bhqk", q, k) / math.sqrt(d_k)
    probs = jax.nn.softmax(scores, axis=-1)
    attn = jnp.einsum("bhqk,bhkd->bhqd", probs, v)
    attn = attn.transpose(0, 2, 1, 3).reshape(B, S, D)
    return attn @ wo + bo


if __name__ == "__main__":
    B, S, D, H = 2, 8, 32, 4

    key = jax.random.PRNGKey(0)
    k_in, k_params = jax.random.split(key)
    kq, kk, kv = jax.random.split(k_in, 3)

    Q = jax.random.normal(kq, (B, S, D), jnp.float32)
    K = jax.random.normal(kk, (B, S, D), jnp.float32)
    V = jax.random.normal(kv, (B, S, D), jnp.float32)
    params = init_params(k_params, D)

    out = multi_head_attention(Q, K, V, params, H)
    out = jax.block_until_ready(out)

    ref = reference_mha(Q, K, V, params, H)
    assert out.shape == (B, S, D)
    # bf16 MXU operands (f32 accumulation) => relaxed tolerance vs pure-f32 reference.
    max_err = float(jnp.max(jnp.abs(out - ref)))
    assert jnp.allclose(out, ref, atol=3e-2, rtol=3e-2), f"max err {max_err}"

    print("KERNEL_OK")
</pallas_src>

<mosaic_0001>
module attributes {stable_mosaic.version = 11 : i64} {
  func.func @mha_kernel(%arg0: i32, %arg1: i32, %arg2: memref<1x8x32xf32, #tpu.memory_space<vmem>>, %arg3: memref<1x8x32xf32, #tpu.memory_space<vmem>>, %arg4: memref<1x8x32xf32, #tpu.memory_space<vmem>>, %arg5: memref<3x32x32xbf16, #tpu.memory_space<vmem>>, %arg6: memref<3x1x32xf32, #tpu.memory_space<vmem>>, %arg7: memref<4x8x32xbf16, #tpu.memory_space<vmem>>, %arg8: memref<1x32xf32, #tpu.memory_space<vmem>>, %arg9: memref<1x8x32xf32, #tpu.memory_space<vmem>>) attributes {dimension_semantics = [#tpu.dimension_semantics<parallel>, #tpu.dimension_semantics<parallel>], iteration_bounds = array<i64: 2, 1>, scalar_prefetch = 0 : i64, scratch_operands = 0 : i64, tpu.core_type = #tpu.core_type<tc>, window_params = [{transform_indices = @transform_0, window_bounds = array<i64: 1, 8, 32>}, {transform_indices = @transform_1, window_bounds = array<i64: 1, 8, 32>}, {transform_indices = @transform_2, window_bounds = array<i64: 1, 8, 32>}, {pipeline_mode = #tpu.pipeline_mode<synchronous>, transform_indices = @transform_3, window_bounds = array<i64: 3, 32, 32>}, {pipeline_mode = #tpu.pipeline_mode<synchronous>, transform_indices = @transform_4, window_bounds = array<i64: 3, 1, 32>}, {pipeline_mode = #tpu.pipeline_mode<synchronous>, transform_indices = @transform_5, window_bounds = array<i64: 4, 8, 32>}, {pipeline_mode = #tpu.pipeline_mode<synchronous>, transform_indices = @transform_6, window_bounds = array<i64: 1, 32>}, {transform_indices = @transform_7, window_bounds = array<i64: 1, 8, 32>}]} {
    %c0 = arith.constant 0 : index
    %c0_0 = arith.constant 0 : index
    %c0_1 = arith.constant 0 : index
    %0 = vector.load %arg2[%c0, %c0_0, %c0_1] : memref<1x8x32xf32, #tpu.memory_space<vmem>>, vector<1x8x32xf32>
    %1 = vector.shape_cast %0 : vector<1x8x32xf32> to vector<8x32xf32>
    %2 = arith.truncf %1 : vector<8x32xf32> to vector<8x32xbf16>
    %c0_2 = arith.constant 0 : index
    %c0_3 = arith.constant 0 : index
    %c0_4 = arith.constant 0 : index
    %3 = vector.load %arg5[%c0_2, %c0_3, %c0_4] : memref<3x32x32xbf16, #tpu.memory_space<vmem>>, vector<1x32x32xbf16>
    %4 = vector.shape_cast %3 : vector<1x32x32xbf16> to vector<32x32xbf16>
    %cst = arith.constant dense<0.000000e+00> : vector<8x32xf32>
    %5 = tpu.matmul %2, %4, %cst {dimension_numbers = #tpu.dot_dimension_numbers<[1], [0], [0], [1], [0, 0, 1, 1], [], []>} : vector<8x32xbf16>, vector<32x32xbf16>, vector<8x32xf32> -> vector<8x32xf32>
    %c0_5 = arith.constant 0 : index
    %c0_6 = arith.constant 0 : index
    %c0_7 = arith.constant 0 : index
    %6 = vector.load %arg6[%c0_5, %c0_6, %c0_7] : memref<3x1x32xf32, #tpu.memory_space<vmem>>, vector<1x1x32xf32>
    %7 = vector.shape_cast %6 : vector<1x1x32xf32> to vector<1x32xf32>
    %8 = vector.broadcast %7 : vector<1x32xf32> to vector<8x32xf32>
    %9 = arith.addf %5, %8 : vector<8x32xf32>
    %10 = arith.truncf %9 : vector<8x32xf32> to vector<8x32xbf16>
    %c0_8 = arith.constant 0 : index
    %c0_9 = arith.constant 0 : index
    %c0_10 = arith.constant 0 : index
    %11 = vector.load %arg3[%c0_8, %c0_9, %c0_10] : memref<1x8x32xf32, #tpu.memory_space<vmem>>, vector<1x8x32xf32>
    %12 = vector.shape_cast %11 : vector<1x8x32xf32> to vector<8x32xf32>
    %13 = arith.truncf %12 : vector<8x32xf32> to vector<8x32xbf16>
    %c1 = arith.constant 1 : index
    %c0_11 = arith.constant 0 : index
    %c0_12 = arith.constant 0 : index
    %14 = vector.load %arg5[%c1, %c0_11, %c0_12] : memref<3x32x32xbf16, #tpu.memory_space<vmem>>, vector<1x32x32xbf16>
    %15 = vector.shape_cast %14 : vector<1x32x32xbf16> to vector<32x32xbf16>
    %cst_13 = arith.constant dense<0.000000e+00> : vector<8x32xf32>
    %16 = tpu.matmul %13, %15, %cst_13 {dimension_numbers = #tpu.dot_dimension_numbers<[1], [0], [0], [1], [0, 0, 1, 1], [], []>} : vector<8x32xbf16>, vector<32x32xbf16>, vector<8x32xf32> -> vector<8x32xf32>
    %c1_14 = arith.constant 1 : index
    %c0_15 = arith.constant 0 : index
    %c0_16 = arith.constant 0 : index
    %17 = vector.load %arg6[%c1_14, %c0_15, %c0_16] : memref<3x1x32xf32, #tpu.memory_space<vmem>>, vector<1x1x32xf32>
    %18 = vector.shape_cast %17 : vector<1x1x32xf32> to vector<1x32xf32>
    %19 = vector.broadcast %18 : vector<1x32xf32> to vector<8x32xf32>
    %20 = arith.addf %16, %19 : vector<8x32xf32>
    %21 = arith.truncf %20 : vector<8x32xf32> to vector<8x32xbf16>
    %c0_17 = arith.constant 0 : index
    %c0_18 = arith.constant 0 : index
    %c0_19 = arith.constant 0 : index
    %22 = vector.load %arg4[%c0_17, %c0_18, %c0_19] : memref<1x8x32xf32, #tpu.memory_space<vmem>>, vector<1x8x32xf32>
    %23 = vector.shape_cast %22 : vector<1x8x32xf32> to vector<8x32xf32>
    %24 = arith.truncf %23 : vector<8x32xf32> to vector<8x32xbf16>
    %c2 = arith.constant 2 : index
    %c0_20 = arith.constant 0 : index
    %c0_21 = arith.constant 0 : index
    %25 = vector.load %arg5[%c2, %c0_20, %c0_21] : memref<3x32x32xbf16, #tpu.memory_space<vmem>>, vector<1x32x32xbf16>
    %26 = vector.shape_cast %25 : vector<1x32x32xbf16> to vector<32x32xbf16>
    %cst_22 = arith.constant dense<0.000000e+00> : vector<8x32xf32>
    %27 = tpu.matmul %24, %26, %cst_22 {dimension_numbers = #tpu.dot_dimension_numbers<[1], [0], [0], [1], [0, 0, 1, 1], [], []>} : vector<8x32xbf16>, vector<32x32xbf16>, vector<8x32xf32> -> vector<8x32xf32>
    %c2_23 = arith.constant 2 : index
    %c0_24 = arith.constant 0 : index
    %c0_25 = arith.constant 0 : index
    %28 = vector.load %arg6[%c2_23, %c0_24, %c0_25] : memref<3x1x32xf32, #tpu.memory_space<vmem>>, vector<1x1x32xf32>
    %29 = vector.shape_cast %28 : vector<1x1x32xf32> to vector<1x32xf32>
    %30 = vector.broadcast %29 : vector<1x32xf32> to vector<8x32xf32>
    %31 = arith.addf %27, %30 : vector<8x32xf32>
    %32 = arith.truncf %31 : vector<8x32xf32> to vector<8x32xbf16>
    %cst_26 = arith.constant 0.000000e+00 : f32
    %33 = vector.broadcast %cst_26 : f32 to vector<8x32xf32>
    %34 = vector.extract_strided_slice %10 {offsets = [0, 0], sizes = [8, 8], strides = [1, 1]} : vector<8x32xbf16> to vector<8x8xbf16>
    %35 = vector.extract_strided_slice %21 {offsets = [0, 0], sizes = [8, 8], strides = [1, 1]} : vector<8x32xbf16> to vector<8x8xbf16>
    %36 = vector.extract_strided_slice %32 {offsets = [0, 0], sizes = [8, 8], strides = [1, 1]} : vector<8x32xbf16> to vector<8x8xbf16>
    "tpu.trace_start"() <{level = 10 : i32, message = "qd,kd->qk"}> : () -> ()
    %cst_27 = arith.constant dense<0.000000e+00> : vector<8x8xf32>
    %37 = tpu.matmul %34, %35, %cst_27 {dimension_numbers = #tpu.dot_dimension_numbers<[1], [1], [0], [0], [0, 0, 1, 0], [], []>} : vector<8x8xbf16>, vector<8x8xbf16>, vector<8x8xf32> -> vector<8x8xf32>
    "tpu.trace_stop"() : () -> ()
    %cst_28 = arith.constant dense<0xFF800000> : vector<8xf32>
    %38 = vector.multi_reduction <maximumf>, %37, %cst_28 [1] : vector<8x8xf32> to vector<8xf32>
    %39 = vector.shape_cast %38 : vector<8xf32> to vector<8x1xf32>
    %40 = vector.broadcast %39 : vector<8x1xf32> to vector<8x8xf32>
    %41 = arith.subf %37, %40 : vector<8x8xf32>
    %42 = math.exp %41 : vector<8x8xf32>
    %cst_29 = arith.constant dense<0.000000e+00> : vector<8xf32>
    %43 = vector.multi_reduction <add>, %42, %cst_29 [1] : vector<8x8xf32> to vector<8xf32>
    %44 = vector.shape_cast %43 : vector<8xf32> to vector<8x1xf32>
    %45 = arith.truncf %42 : vector<8x8xf32> to vector<8x8xbf16>
    "tpu.trace_start"() <{level = 10 : i32, message = "qk,kd->qd"}> : () -> ()
    %cst_30 = arith.constant dense<0.000000e+00> : vector<8x8xf32>
    %46 = tpu.matmul %45, %36, %cst_30 {dimension_numbers = #tpu.dot_dimension_numbers<[1], [0], [0], [1], [0, 0, 1, 1], [], []>} : vector<8x8xbf16>, vector<8x8xbf16>, vector<8x8xf32> -> vector<8x8xf32>
    "tpu.trace_stop"() : () -> ()
    %cst_31 = arith.constant 1.000000e+00 : f32
    %47 = vector.broadcast %cst_31 : f32 to vector<8x1xf32>
    %48 = arith.divf %47, %44 : vector<8x1xf32>
    %49 = vector.broadcast %48 : vector<8x1xf32> to vector<8x8xf32>
    %50 = arith.mulf %46, %49 : vector<8x8xf32>
    %51 = arith.truncf %50 : vector<8x8xf32> to vector<8x8xbf16>
    %c0_32 = arith.constant 0 : index
    %c0_33 = arith.constant 0 : index
    %c0_34 = arith.constant 0 : index
    %52 = vector.load %arg7[%c0_32, %c0_33, %c0_34] : memref<4x8x32xbf16, #tpu.memory_space<vmem>>, vector<1x8x32xbf16>
    %53 = vector.shape_cast %52 : vector<1x8x32xbf16> to vector<8x32xbf16>
    %cst_35 = arith.constant dense<0.000000e+00> : vector<8x32xf32>
    %54 = tpu.matmul %51, %53, %cst_35 {dimension_numbers = #tpu.dot_dimension_numbers<[1], [0], [0], [1], [0, 0, 1, 1], [], []>} : vector<8x8xbf16>, vector<8x32xbf16>, vector<8x32xf32> -> vector<8x32xf32>
    %55 = arith.addf %33, %54 : vector<8x32xf32>
    %56 = vector.extract_strided_slice %10 {offsets = [0, 8], sizes = [8, 8], strides = [1, 1]} : vector<8x32xbf16> to vector<8x8xbf16>
    %57 = vector.extract_strided_slice %21 {offsets = [0, 8], sizes = [8, 8], strides = [1, 1]} : vector<8x32xbf16> to vector<8x8xbf16>
    %58 = vector.extract_strided_slice %32 {offsets = [0, 8], sizes = [8, 8], strides = [1, 1]} : vector<8x32xbf16> to vector<8x8xbf16>
    "tpu.trace_start"() <{level = 10 : i32, message = "qd,kd->qk"}> : () -> ()
    %cst_36 = arith.constant dense<0.000000e+00> : vector<8x8xf32>
    %59 = tpu.matmul %56, %57, %cst_36 {dimension_numbers = #tpu.dot_dimension_numbers<[1], [1], [0], [0], [0, 0, 1, 0], [], []>} : vector<8x8xbf16>, vector<8x8xbf16>, vector<8x8xf32> -> vector<8x8xf32>
    "tpu.trace_stop"() : () -> ()
    %cst_37 = arith.constant dense<0xFF800000> : vector<8xf32>
    %60 = vector.multi_reduction <maximumf>, %59, %cst_37 [1] : vector<8x8xf32> to vector<8xf32>
    %61 = vector.shape_cast %60 : vector<8xf32> to vector<8x1xf32>
    %62 = vector.broadcast %61 : vector<8x1xf32> to vector<8x8xf32>
    %63 = arith.subf %59, %62 : vector<8x8xf32>
    %64 = math.exp %63 : vector<8x8xf32>
    %cst_38 = arith.constant dense<0.000000e+00> : vector<8xf32>
    %65 = vector.multi_reduction <add>, %64, %cst_38 [1] : vector<8x8xf32> to vector<8xf32>
    %66 = vector.shape_cast %65 : vector<8xf32> to vector<8x1xf32>
    %67 = arith.truncf %64 : vector<8x8xf32> to vector<8x8xbf16>
    "tpu.trace_start"() <{level = 10 : i32, message = "qk,kd->qd"}> : () -> ()
    %cst_39 = arith.constant dense<0.000000e+00> : vector<8x8xf32>
    %68 = tpu.matmul %67, %58, %cst_39 {dimension_numbers = #tpu.dot_dimension_numbers<[1], [0], [0], [1], [0, 0, 1, 1], [], []>} : vector<8x8xbf16>, vector<8x8xbf16>, vector<8x8xf32> -> vector<8x8xf32>
    "tpu.trace_stop"() : () -> ()
    %cst_40 = arith.constant 1.000000e+00 : f32
    %69 = vector.broadcast %cst_40 : f32 to vector<8x1xf32>
    %70 = arith.divf %69, %66 : vector<8x1xf32>
    %71 = vector.broadcast %70 : vector<8x1xf32> to vector<8x8xf32>
    %72 = arith.mulf %68, %71 : vector<8x8xf32>
    %73 = arith.truncf %72 : vector<8x8xf32> to vector<8x8xbf16>
    %c1_41 = arith.constant 1 : index
    %c0_42 = arith.constant 0 : index
    %c0_43 = arith.constant 0 : index
    %74 = vector.load %arg7[%c1_41, %c0_42, %c0_43] : memref<4x8x32xbf16, #tpu.memory_space<vmem>>, vector<1x8x32xbf16>
    %75 = vector.shape_cast %74 : vector<1x8x32xbf16> to vector<8x32xbf16>
    %cst_44 = arith.constant dense<0.000000e+00> : vector<8x32xf32>
    %76 = tpu.matmul %73, %75, %cst_44 {dimension_numbers = #tpu.dot_dimension_numbers<[1], [0], [0], [1], [0, 0, 1, 1], [], []>} : vector<8x8xbf16>, vector<8x32xbf16>, vector<8x32xf32> -> vector<8x32xf32>
    %77 = arith.addf %55, %76 : vector<8x32xf32>
    %78 = vector.extract_strided_slice %10 {offsets = [0, 16], sizes = [8, 8], strides = [1, 1]} : vector<8x32xbf16> to vector<8x8xbf16>
    %79 = vector.extract_strided_slice %21 {offsets = [0, 16], sizes = [8, 8], strides = [1, 1]} : vector<8x32xbf16> to vector<8x8xbf16>
    %80 = vector.extract_strided_slice %32 {offsets = [0, 16], sizes = [8, 8], strides = [1, 1]} : vector<8x32xbf16> to vector<8x8xbf16>
    "tpu.trace_start"() <{level = 10 : i32, message = "qd,kd->qk"}> : () -> ()
    %cst_45 = arith.constant dense<0.000000e+00> : vector<8x8xf32>
    %81 = tpu.matmul %78, %79, %cst_45 {dimension_numbers = #tpu.dot_dimension_numbers<[1], [1], [0], [0], [0, 0, 1, 0], [], []>} : vector<8x8xbf16>, vector<8x8xbf16>, vector<8x8xf32> -> vector<8x8xf32>
    "tpu.trace_stop"() : () -> ()
    %cst_46 = arith.constant dense<0xFF800000> : vector<8xf32>
    %82 = vector.multi_reduction <maximumf>, %81, %cst_46 [1] : vector<8x8xf32> to vector<8xf32>
    %83 = vector.shape_cast %82 : vector<8xf32> to vector<8x1xf32>
    %84 = vector.broadcast %83 : vector<8x1xf32> to vector<8x8xf32>
    %85 = arith.subf %81, %84 : vector<8x8xf32>
    %86 = math.exp %85 : vector<8x8xf32>
    %cst_47 = arith.constant dense<0.000000e+00> : vector<8xf32>
    %87 = vector.multi_reduction <add>, %86, %cst_47 [1] : vector<8x8xf32> to vector<8xf32>
    %88 = vector.shape_cast %87 : vector<8xf32> to vector<8x1xf32>
    %89 = arith.truncf %86 : vector<8x8xf32> to vector<8x8xbf16>
    "tpu.trace_start"() <{level = 10 : i32, message = "qk,kd->qd"}> : () -> ()
    %cst_48 = arith.constant dense<0.000000e+00> : vector<8x8xf32>
    %90 = tpu.matmul %89, %80, %cst_48 {dimension_numbers = #tpu.dot_dimension_numbers<[1], [0], [0], [1], [0, 0, 1, 1], [], []>} : vector<8x8xbf16>, vector<8x8xbf16>, vector<8x8xf32> -> vector<8x8xf32>
    "tpu.trace_stop"() : () -> ()
    %cst_49 = arith.constant 1.000000e+00 : f32
    %91 = vector.broadcast %cst_49 : f32 to vector<8x1xf32>
    %92 = arith.divf %91, %88 : vector<8x1xf32>
    %93 = vector.broadcast %92 : vector<8x1xf32> to vector<8x8xf32>
    %94 = arith.mulf %90, %93 : vector<8x8xf32>
    %95 = arith.truncf %94 : vector<8x8xf32> to vector<8x8xbf16>
    %c2_50 = arith.constant 2 : index
    %c0_51 = arith.constant 0 : index
    %c0_52 = arith.constant 0 : index
    %96 = vector.load %arg7[%c2_50, %c0_51, %c0_52] : memref<4x8x32xbf16, #tpu.memory_space<vmem>>, vector<1x8x32xbf16>
    %97 = vector.shape_cast %96 : vector<1x8x32xbf16> to vector<8x32xbf16>
    %cst_53 = arith.constant dense<0.000000e+00> : vector<8x32xf32>
    %98 = tpu.matmul %95, %97, %cst_53 {dimension_numbers = #tpu.dot_dimension_numbers<[1], [0], [0], [1], [0, 0, 1, 1], [], []>} : vector<8x8xbf16>, vector<8x32xbf16>, vector<8x32xf32> -> vector<8x32xf32>
    %99 = arith.addf %77, %98 : vector<8x32xf32>
    %100 = vector.extract_strided_slice %10 {offsets = [0, 24], sizes = [8, 8], strides = [1, 1]} : vector<8x32xbf16> to vector<8x8xbf16>
    %101 = vector.extract_strided_slice %21 {offsets = [0, 24], sizes = [8, 8], strides = [1, 1]} : vector<8x32xbf16> to vector<8x8xbf16>
    %102 = vector.extract_strided_slice %32 {offsets = [0, 24], sizes = [8, 8], strides = [1, 1]} : vector<8x32xbf16> to vector<8x8xbf16>
    "tpu.trace_start"() <{level = 10 : i32, message = "qd,kd->qk"}> : () -> ()
    %cst_54 = arith.constant dense<0.000000e+00> : vector<8x8xf32>
    %103 = tpu.matmul %100, %101, %cst_54 {dimension_numbers = #tpu.dot_dimension_numbers<[1], [1], [0], [0], [0, 0, 1, 0], [], []>} : vector<8x8xbf16>, vector<8x8xbf16>, vector<8x8xf32> -> vector<8x8xf32>
    "tpu.trace_stop"() : () -> ()
    %cst_55 = arith.constant dense<0xFF800000> : vector<8xf32>
    %104 = vector.multi_reduction <maximumf>, %103, %cst_55 [1] : vector<8x8xf32> to vector<8xf32>
    %105 = vector.shape_cast %104 : vector<8xf32> to vector<8x1xf32>
    %106 = vector.broadcast %105 : vector<8x1xf32> to vector<8x8xf32>
    %107 = arith.subf %103, %106 : vector<8x8xf32>
    %108 = math.exp %107 : vector<8x8xf32>
    %cst_56 = arith.constant dense<0.000000e+00> : vector<8xf32>
    %109 = vector.multi_reduction <add>, %108, %cst_56 [1] : vector<8x8xf32> to vector<8xf32>
    %110 = vector.shape_cast %109 : vector<8xf32> to vector<8x1xf32>
    %111 = arith.truncf %108 : vector<8x8xf32> to vector<8x8xbf16>
    "tpu.trace_start"() <{level = 10 : i32, message = "qk,kd->qd"}> : () -> ()
    %cst_57 = arith.constant dense<0.000000e+00> : vector<8x8xf32>
    %112 = tpu.matmul %111, %102, %cst_57 {dimension_numbers = #tpu.dot_dimension_numbers<[1], [0], [0], [1], [0, 0, 1, 1], [], []>} : vector<8x8xbf16>, vector<8x8xbf16>, vector<8x8xf32> -> vector<8x8xf32>
    "tpu.trace_stop"() : () -> ()
    %cst_58 = arith.constant 1.000000e+00 : f32
    %113 = vector.broadcast %cst_58 : f32 to vector<8x1xf32>
    %114 = arith.divf %113, %110 : vector<8x1xf32>
    %115 = vector.broadcast %114 : vector<8x1xf32> to vector<8x8xf32>
    %116 = arith.mulf %112, %115 : vector<8x8xf32>
    %117 = arith.truncf %116 : vector<8x8xf32> to vector<8x8xbf16>
    %c3 = arith.constant 3 : index
    %c0_59 = arith.constant 0 : index
    %c0_60 = arith.constant 0 : index
    %118 = vector.load %arg7[%c3, %c0_59, %c0_60] : memref<4x8x32xbf16, #tpu.memory_space<vmem>>, vector<1x8x32xbf16>
    %119 = vector.shape_cast %118 : vector<1x8x32xbf16> to vector<8x32xbf16>
    %cst_61 = arith.constant dense<0.000000e+00> : vector<8x32xf32>
    %120 = tpu.matmul %117, %119, %cst_61 {dimension_numbers = #tpu.dot_dimension_numbers<[1], [0], [0], [1], [0, 0, 1, 1], [], []>} : vector<8x8xbf16>, vector<8x32xbf16>, vector<8x32xf32> -> vector<8x32xf32>
    %121 = arith.addf %99, %120 : vector<8x32xf32>
    %c0_62 = arith.constant 0 : index
    %c0_63 = arith.constant 0 : index
    %122 = vector.load %arg8[%c0_62, %c0_63] : memref<1x32xf32, #tpu.memory_space<vmem>>, vector<1x32xf32>
    %123 = vector.broadcast %122 : vector<1x32xf32> to vector<8x32xf32>
    %124 = arith.addf %121, %123 : vector<8x32xf32>
    %c0_64 = arith.constant 0 : index
    %c0_65 = arith.constant 0 : index
    %c0_66 = arith.constant 0 : index
    %125 = vector.load %arg9[%c0_64, %c0_65, %c0_66] : memref<1x8x32xf32, #tpu.memory_space<vmem>>, vector<1x8x32xf32>
    %126 = vector.shape_cast %125 : vector<1x8x32xf32> to vector<8x32xf32>
    %127 = vector.shape_cast %124 : vector<8x32xf32> to vector<1x8x32xf32>
    tpu.vector_store %arg9[%c0_64, %c0_65, %c0_66], %127 {strides = array<i32>} : memref<1x8x32xf32, #tpu.memory_space<vmem>>, vector<1x8x32xf32>,
    return
  }
  func.func @transform_0(%arg0: i32, %arg1: i32) -> (i32, i32, i32) {
    %c0_i32 = arith.constant 0 : i32
    %c0_i32_0 = arith.constant 0 : i32
    return %arg0, %arg1, %c0_i32 : i32, i32, i32
  }
  func.func @transform_1(%arg0: i32, %arg1: i32) -> (i32, i32, i32) {
    %c0_i32 = arith.constant 0 : i32
    %c0_i32_0 = arith.constant 0 : i32
    %c0_i32_1 = arith.constant 0 : i32
    return %arg0, %c0_i32, %c0_i32_0 : i32, i32, i32
  }
  func.func @transform_2(%arg0: i32, %arg1: i32) -> (i32, i32, i32) {
    %c0_i32 = arith.constant 0 : i32
    %c0_i32_0 = arith.constant 0 : i32
    %c0_i32_1 = arith.constant 0 : i32
    return %arg0, %c0_i32, %c0_i32_0 : i32, i32, i32
  }
  func.func @transform_3(%arg0: i32, %arg1: i32) -> (i32, i32, i32) {
    %c0_i32 = arith.constant 0 : i32
    %c0_i32_0 = arith.constant 0 : i32
    %c0_i32_1 = arith.constant 0 : i32
    %c0_i32_2 = arith.constant 0 : i32
    return %c0_i32, %c0_i32_0, %c0_i32_1 : i32, i32, i32
  }
  func.func @transform_4(%arg0: i32, %arg1: i32) -> (i32, i32, i32) {
    %c0_i32 = arith.constant 0 : i32
    %c0_i32_0 = arith.constant 0 : i32
    %c0_i32_1 = arith.constant 0 : i32
    %c0_i32_2 = arith.constant 0 : i32
    return %c0_i32, %c0_i32_0, %c0_i32_1 : i32, i32, i32
  }
  func.func @transform_5(%arg0: i32, %arg1: i32) -> (i32, i32, i32) {
    %c0_i32 = arith.constant 0 : i32
    %c0_i32_0 = arith.constant 0 : i32
    %c0_i32_1 = arith.constant 0 : i32
    %c0_i32_2 = arith.constant 0 : i32
    return %c0_i32, %c0_i32_0, %c0_i32_1 : i32, i32, i32
  }
  func.func @transform_6(%arg0: i32, %arg1: i32) -> (i32, i32) {
    %c0_i32 = arith.constant 0 : i32
    %c0_i32_0 = arith.constant 0 : i32
    %c0_i32_1 = arith.constant 0 : i32
    return %c0_i32, %c0_i32_0 : i32, i32
  }
  func.func @transform_7(%arg0: i32, %arg1: i32) -> (i32, i32, i32) {
    %c0_i32 = arith.constant 0 : i32
    %c0_i32_0 = arith.constant 0 : i32
    return %arg0, %arg1, %c0_i32 : i32, i32, i32
  }
}

module attributes {stable_mosaic.version = 11 : i64} {
  func.func @mha_kernel(%arg0: i32, %arg1: i32, %arg2: memref<1x8x32xf32, #tpu.memory_space<vmem>>, %arg3: memref<1x8x32xf32, #tpu.memory_space<vmem>>, %arg4: memref<1x8x32xf32, #tpu.memory_space<vmem>>, %arg5: memref<3x32x32xbf16, #tpu.memory_space<vmem>>, %arg6: memref<3x1x32xf32, #tpu.memory_space<vmem>>, %arg7: memref<4x8x32xbf16, #tpu.memory_space<vmem>>, %arg8: memref<1x32xf32, #tpu.memory_space<vmem>>, %arg9: memref<1x8x32xf32, #tpu.memory_space<vmem>>) attributes {dimension_semantics = [#tpu.dimension_semantics<parallel>, #tpu.dimension_semantics<parallel>], iteration_bounds = array<i64: 2, 1>, scalar_prefetch = 0 : i64, scratch_operands = 0 : i64, tpu.core_type = #tpu.core_type<tc>, window_params = [{transform_indices = @transform_0, window_bounds = array<i64: 1, 8, 32>}, {transform_indices = @transform_1, window_bounds = array<i64: 1, 8, 32>}, {transform_indices = @transform_2, window_bounds = array<i64: 1, 8, 32>}, {pipeline_mode = #tpu.pipeline_mode<synchronous>, transform_indices = @transform_3, window_bounds = array<i64: 3, 32, 32>}, {pipeline_mode = #tpu.pipeline_mode<synchronous>, transform_indices = @transform_4, window_bounds = array<i64: 3, 1, 32>}, {pipeline_mode = #tpu.pipeline_mode<synchronous>, transform_indices = @transform_5, window_bounds = array<i64: 4, 8, 32>}, {pipeline_mode = #tpu.pipeline_mode<synchronous>, transform_indices = @transform_6, window_bounds = array<i64: 1, 32>}, {transform_indices = @transform_7, window_bounds = array<i64: 1, 8, 32>}]} {
    %c0 = arith.constant 0 : index
    %c0_0 = arith.constant 0 : index
    %c0_1 = arith.constant 0 : index
    %0 = vector.load %arg2[%c0, %c0_0, %c0_1] : memref<1x8x32xf32, #tpu.memory_space<vmem>>, vector<1x8x32xf32>
    %1 = vector.shape_cast %0 : vector<1x8x32xf32> to vector<8x32xf32>
    %2 = arith.truncf %1 : vector<8x32xf32> to vector<8x32xbf16>
    %c0_2 = arith.constant 0 : index
    %c0_3 = arith.constant 0 : index
    %c0_4 = arith.constant 0 : index
    %3 = vector.load %arg5[%c0_2, %c0_3, %c0_4] : memref<3x32x32xbf16, #tpu.memory_space<vmem>>, vector<1x32x32xbf16>
    %4 = vector.shape_cast %3 : vector<1x32x32xbf16> to vector<32x32xbf16>
    %cst = arith.constant dense<0.000000e+00> : vector<8x32xf32>
    %5 = tpu.matmul %2, %4, %cst {dimension_numbers = #tpu.dot_dimension_numbers<[1], [0], [0], [1], [0, 0, 1, 1], [], []>} : vector<8x32xbf16>, vector<32x32xbf16>, vector<8x32xf32> -> vector<8x32xf32>
    %c0_5 = arith.constant 0 : index
    %c0_6 = arith.constant 0 : index
    %c0_7 = arith.constant 0 : index
    %6 = vector.load %arg6[%c0_5, %c0_6, %c0_7] : memref<3x1x32xf32, #tpu.memory_space<vmem>>, vector<1x1x32xf32>
    %7 = vector.shape_cast %6 : vector<1x1x32xf32> to vector<1x32xf32>
    %8 = vector.broadcast %7 : vector<1x32xf32> to vector<8x32xf32>
    %9 = arith.addf %5, %8 : vector<8x32xf32>
    %10 = arith.truncf %9 : vector<8x32xf32> to vector<8x32xbf16>
    %c0_8 = arith.constant 0 : index
    %c0_9 = arith.constant 0 : index
    %c0_10 = arith.constant 0 : index
    %11 = vector.load %arg3[%c0_8, %c0_9, %c0_10] : memref<1x8x32xf32, #tpu.memory_space<vmem>>, vector<1x8x32xf32>
    %12 = vector.shape_cast %11 : vector<1x8x32xf32> to vector<8x32xf32>
    %13 = arith.truncf %12 : vector<8x32xf32> to vector<8x32xbf16>
    %c1 = arith.constant 1 : index
    %c0_11 = arith.constant 0 : index
    %c0_12 = arith.constant 0 : index
    %14 = vector.load %arg5[%c1, %c0_11, %c0_12] : memref<3x32x32xbf16, #tpu.memory_space<vmem>>, vector<1x32x32xbf16>
    %15 = vector.shape_cast %14 : vector<1x32x32xbf16> to vector<32x32xbf16>
    %cst_13 = arith.constant dense<0.000000e+00> : vector<8x32xf32>
    %16 = tpu.matmul %13, %15, %cst_13 {dimension_numbers = #tpu.dot_dimension_numbers<[1], [0], [0], [1], [0, 0, 1, 1], [], []>} : vector<8x32xbf16>, vector<32x32xbf16>, vector<8x32xf32> -> vector<8x32xf32>
    %c1_14 = arith.constant 1 : index
    %c0_15 = arith.constant 0 : index
    %c0_16 = arith.constant 0 : index
    %17 = vector.load %arg6[%c1_14, %c0_15, %c0_16] : memref<3x1x32xf32, #tpu.memory_space<vmem>>, vector<1x1x32xf32>
    %18 = vector.shape_cast %17 : vector<1x1x32xf32> to vector<1x32xf32>
    %19 = vector.broadcast %18 : vector<1x32xf32> to vector<8x32xf32>
    %20 = arith.addf %16, %19 : vector<8x32xf32>
    %21 = arith.truncf %20 : vector<8x32xf32> to vector<8x32xbf16>
    %c0_17 = arith.constant 0 : index
    %c0_18 = arith.constant 0 : index
    %c0_19 = arith.constant 0 : index
    %22 = vector.load %arg4[%c0_17, %c0_18, %c0_19] : memref<1x8x32xf32, #tpu.memory_space<vmem>>, vector<1x8x32xf32>
    %23 = vector.shape_cast %22 : vector<1x8x32xf32> to vector<8x32xf32>
    %24 = arith.truncf %23 : vector<8x32xf32> to vector<8x32xbf16>
    %c2 = arith.constant 2 : index
    %c0_20 = arith.constant 0 : index
    %c0_21 = arith.constant 0 : index
    %25 = vector.load %arg5[%c2, %c0_20, %c0_21] : memref<3x32x32xbf16, #tpu.memory_space<vmem>>, vector<1x32x32xbf16>
    %26 = vector.shape_cast %25 : vector<1x32x32xbf16> to vector<32x32xbf16>
    %cst_22 = arith.constant dense<0.000000e+00> : vector<8x32xf32>
    %27 = tpu.matmul %24, %26, %cst_22 {dimension_numbers = #tpu.dot_dimension_numbers<[1], [0], [0], [1], [0, 0, 1, 1], [], []>} : vector<8x32xbf16>, vector<32x32xbf16>, vector<8x32xf32> -> vector<8x32xf32>
    %c2_23 = arith.constant 2 : index
    %c0_24 = arith.constant 0 : index
    %c0_25 = arith.constant 0 : index
    %28 = vector.load %arg6[%c2_23, %c0_24, %c0_25] : memref<3x1x32xf32, #tpu.memory_space<vmem>>, vector<1x1x32xf32>
    %29 = vector.shape_cast %28 : vector<1x1x32xf32> to vector<1x32xf32>
    %30 = vector.broadcast %29 : vector<1x32xf32> to vector<8x32xf32>
    %31 = arith.addf %27, %30 : vector<8x32xf32>
    %32 = arith.truncf %31 : vector<8x32xf32> to vector<8x32xbf16>
    %cst_26 = arith.constant 0.000000e+00 : f32
    %33 = vector.broadcast %cst_26 : f32 to vector<8x32xf32>
    %34 = vector.extract_strided_slice %10 {offsets = [0, 0], sizes = [8, 8], strides = [1, 1]} : vector<8x32xbf16> to vector<8x8xbf16>
    %35 = vector.extract_strided_slice %21 {offsets = [0, 0], sizes = [8, 8], strides = [1, 1]} : vector<8x32xbf16> to vector<8x8xbf16>
    %36 = vector.extract_strided_slice %32 {offsets = [0, 0], sizes = [8, 8], strides = [1, 1]} : vector<8x32xbf16> to vector<8x8xbf16>
    "tpu.trace_start"() <{level = 10 : i32, message = "qd,kd->qk"}> : () -> ()
    %cst_27 = arith.constant dense<0.000000e+00> : vector<8x8xf32>
    %37 = tpu.matmul %34, %35, %cst_27 {dimension_numbers = #tpu.dot_dimension_numbers<[1], [1], [0], [0], [0, 0, 1, 0], [], []>} : vector<8x8xbf16>, vector<8x8xbf16>, vector<8x8xf32> -> vector<8x8xf32>
    "tpu.trace_stop"() : () -> ()
    %cst_28 = arith.constant dense<0xFF800000> : vector<8xf32>
    %38 = vector.multi_reduction <maximumf>, %37, %cst_28 [1] : vector<8x8xf32> to vector<8xf32>
    %39 = vector.shape_cast %38 : vector<8xf32> to vector<8x1xf32>
    %40 = vector.broadcast %39 : vector<8x1xf32> to vector<8x8xf32>
    %41 = arith.subf %37, %40 : vector<8x8xf32>
    %42 = math.exp %41 : vector<8x8xf32>
    %cst_29 = arith.constant dense<0.000000e+00> : vector<8xf32>
    %43 = vector.multi_reduction <add>, %42, %cst_29 [1] : vector<8x8xf32> to vector<8xf32>
    %44 = vector.shape_cast %43 : vector<8xf32> to vector<8x1xf32>
    %45 = arith.truncf %42 : vector<8x8xf32> to vector<8x8xbf16>
    "tpu.trace_start"() <{level = 10 : i32, message = "qk,kd->qd"}> : () -> ()
    %cst_30 = arith.constant dense<0.000000e+00> : vector<8x8xf32>
    %46 = tpu.matmul %45, %36, %cst_30 {dimension_numbers = #tpu.dot_dimension_numbers<[1], [0], [0], [1], [0, 0, 1, 1], [], []>} : vector<8x8xbf16>, vector<8x8xbf16>, vector<8x8xf32> -> vector<8x8xf32>
    "tpu.trace_stop"() : () -> ()
    %cst_31 = arith.constant 1.000000e+00 : f32
    %47 = vector.broadcast %cst_31 : f32 to vector<8x1xf32>
    %48 = arith.divf %47, %44 : vector<8x1xf32>
    %49 = vector.broadcast %48 : vector<8x1xf32> to vector<8x8xf32>
    %50 = arith.mulf %46, %49 : vector<8x8xf32>
    %51 = arith.truncf %50 : vector<8x8xf32> to vector<8x8xbf16>
    %c0_32 = arith.constant 0 : index
    %c0_33 = arith.constant 0 : index
    %c0_34 = arith.constant 0 : index
    %52 = vector.load %arg7[%c0_32, %c0_33, %c0_34] : memref<4x8x32xbf16, #tpu.memory_space<vmem>>, vector<1x8x32xbf16>
    %53 = vector.shape_cast %52 : vector<1x8x32xbf16> to vector<8x32xbf16>
    %cst_35 = arith.constant dense<0.000000e+00> : vector<8x32xf32>
    %54 = tpu.matmul %51, %53, %cst_35 {dimension_numbers = #tpu.dot_dimension_numbers<[1], [0], [0], [1], [0, 0, 1, 1], [], []>} : vector<8x8xbf16>, vector<8x32xbf16>, vector<8x32xf32> -> vector<8x32xf32>
    %55 = arith.addf %33, %54 : vector<8x32xf32>
    %56 = vector.extract_strided_slice %10 {offsets = [0, 8], sizes = [8, 8], strides = [1, 1]} : vector<8x32xbf16> to vector<8x8xbf16>
    %57 = vector.extract_strided_slice %21 {offsets = [0, 8], sizes = [8, 8], strides = [1, 1]} : vector<8x32xbf16> to vector<8x8xbf16>
    %58 = vector.extract_strided_slice %32 {offsets = [0, 8], sizes = [8, 8], strides = [1, 1]} : vector<8x32xbf16> to vector<8x8xbf16>
    "tpu.trace_start"() <{level = 10 : i32, message = "qd,kd->qk"}> : () -> ()
    %cst_36 = arith.constant dense<0.000000e+00> : vector<8x8xf32>
    %59 = tpu.matmul %56, %57, %cst_36 {dimension_numbers = #tpu.dot_dimension_numbers<[1], [1], [0], [0], [0, 0, 1, 0], [], []>} : vector<8x8xbf16>, vector<8x8xbf16>, vector<8x8xf32> -> vector<8x8xf32>
    "tpu.trace_stop"() : () -> ()
    %cst_37 = arith.constant dense<0xFF800000> : vector<8xf32>
    %60 = vector.multi_reduction <maximumf>, %59, %cst_37 [1] : vector<8x8xf32> to vector<8xf32>
    %61 = vector.shape_cast %60 : vector<8xf32> to vector<8x1xf32>
    %62 = vector.broadcast %61 : vector<8x1xf32> to vector<8x8xf32>
    %63 = arith.subf %59, %62 : vector<8x8xf32>
    %64 = math.exp %63 : vector<8x8xf32>
    %cst_38 = arith.constant dense<0.000000e+00> : vector<8xf32>
    %65 = vector.multi_reduction <add>, %64, %cst_38 [1] : vector<8x8xf32> to vector<8xf32>
    %66 = vector.shape_cast %65 : vector<8xf32> to vector<8x1xf32>
    %67 = arith.truncf %64 : vector<8x8xf32> to vector<8x8xbf16>
    "tpu.trace_start"() <{level = 10 : i32, message = "qk,kd->qd"}> : () -> ()
    %cst_39 = arith.constant dense<0.000000e+00> : vector<8x8xf32>
    %68 = tpu.matmul %67, %58, %cst_39 {dimension_numbers = #tpu.dot_dimension_numbers<[1], [0], [0], [1], [0, 0, 1, 1], [], []>} : vector<8x8xbf16>, vector<8x8xbf16>, vector<8x8xf32> -> vector<8x8xf32>
    "tpu.trace_stop"() : () -> ()
    %cst_40 = arith.constant 1.000000e+00 : f32
    %69 = vector.broadcast %cst_40 : f32 to vector<8x1xf32>
    %70 = arith.divf %69, %66 : vector<8x1xf32>
    %71 = vector.broadcast %70 : vector<8x1xf32> to vector<8x8xf32>
    %72 = arith.mulf %68, %71 : vector<8x8xf32>
    %73 = arith.truncf %72 : vector<8x8xf32> to vector<8x8xbf16>
    %c1_41 = arith.constant 1 : index
    %c0_42 = arith.constant 0 : index
    %c0_43 = arith.constant 0 : index
    %74 = vector.load %arg7[%c1_41, %c0_42, %c0_43] : memref<4x8x32xbf16, #tpu.memory_space<vmem>>, vector<1x8x32xbf16>
    %75 = vector.shape_cast %74 : vector<1x8x32xbf16> to vector<8x32xbf16>
    %cst_44 = arith.constant dense<0.000000e+00> : vector<8x32xf32>
    %76 = tpu.matmul %73, %75, %cst_44 {dimension_numbers = #tpu.dot_dimension_numbers<[1], [0], [0], [1], [0, 0, 1, 1], [], []>} : vector<8x8xbf16>, vector<8x32xbf16>, vector<8x32xf32> -> vector<8x32xf32>
    %77 = arith.addf %55, %76 : vector<8x32xf32>
    %78 = vector.extract_strided_slice %10 {offsets = [0, 16], sizes = [8, 8], strides = [1, 1]} : vector<8x32xbf16> to vector<8x8xbf16>
    %79 = vector.extract_strided_slice %21 {offsets = [0, 16], sizes = [8, 8], strides = [1, 1]} : vector<8x32xbf16> to vector<8x8xbf16>
    %80 = vector.extract_strided_slice %32 {offsets = [0, 16], sizes = [8, 8], strides = [1, 1]} : vector<8x32xbf16> to vector<8x8xbf16>
    "tpu.trace_start"() <{level = 10 : i32, message = "qd,kd->qk"}> : () -> ()
    %cst_45 = arith.constant dense<0.000000e+00> : vector<8x8xf32>
    %81 = tpu.matmul %78, %79, %cst_45 {dimension_numbers = #tpu.dot_dimension_numbers<[1], [1], [0], [0], [0, 0, 1, 0], [], []>} : vector<8x8xbf16>, vector<8x8xbf16>, vector<8x8xf32> -> vector<8x8xf32>
    "tpu.trace_stop"() : () -> ()
    %cst_46 = arith.constant dense<0xFF800000> : vector<8xf32>
    %82 = vector.multi_reduction <maximumf>, %81, %cst_46 [1] : vector<8x8xf32> to vector<8xf32>
    %83 = vector.shape_cast %82 : vector<8xf32> to vector<8x1xf32>
    %84 = vector.broadcast %83 : vector<8x1xf32> to vector<8x8xf32>
    %85 = arith.subf %81, %84 : vector<8x8xf32>
    %86 = math.exp %85 : vector<8x8xf32>
    %cst_47 = arith.constant dense<0.000000e+00> : vector<8xf32>
    %87 = vector.multi_reduction <add>, %86, %cst_47 [1] : vector<8x8xf32> to vector<8xf32>
    %88 = vector.shape_cast %87 : vector<8xf32> to vector<8x1xf32>
    %89 = arith.truncf %86 : vector<8x8xf32> to vector<8x8xbf16>
    "tpu.trace_start"() <{level = 10 : i32, message = "qk,kd->qd"}> : () -> ()
    %cst_48 = arith.constant dense<0.000000e+00> : vector<8x8xf32>
    %90 = tpu.matmul %89, %80, %cst_48 {dimension_numbers = #tpu.dot_dimension_numbers<[1], [0], [0], [1], [0, 0, 1, 1], [], []>} : vector<8x8xbf16>, vector<8x8xbf16>, vector<8x8xf32> -> vector<8x8xf32>
    "tpu.trace_stop"() : () -> ()
    %cst_49 = arith.constant 1.000000e+00 : f32
    %91 = vector.broadcast %cst_49 : f32 to vector<8x1xf32>
    %92 = arith.divf %91, %88 : vector<8x1xf32>
    %93 = vector.broadcast %92 : vector<8x1xf32> to vector<8x8xf32>
    %94 = arith.mulf %90, %93 : vector<8x8xf32>
    %95 = arith.truncf %94 : vector<8x8xf32> to vector<8x8xbf16>
    %c2_50 = arith.constant 2 : index
    %c0_51 = arith.constant 0 : index
    %c0_52 = arith.constant 0 : index
    %96 = vector.load %arg7[%c2_50, %c0_51, %c0_52] : memref<4x8x32xbf16, #tpu.memory_space<vmem>>, vector<1x8x32xbf16>
    %97 = vector.shape_cast %96 : vector<1x8x32xbf16> to vector<8x32xbf16>
    %cst_53 = arith.constant dense<0.000000e+00> : vector<8x32xf32>
    %98 = tpu.matmul %95, %97, %cst_53 {dimension_numbers = #tpu.dot_dimension_numbers<[1], [0], [0], [1], [0, 0, 1, 1], [], []>} : vector<8x8xbf16>, vector<8x32xbf16>, vector<8x32xf32> -> vector<8x32xf32>
    %99 = arith.addf %77, %98 : vector<8x32xf32>
    %100 = vector.extract_strided_slice %10 {offsets = [0, 24], sizes = [8, 8], strides = [1, 1]} : vector<8x32xbf16> to vector<8x8xbf16>
    %101 = vector.extract_strided_slice %21 {offsets = [0, 24], sizes = [8, 8], strides = [1, 1]} : vector<8x32xbf16> to vector<8x8xbf16>
    %102 = vector.extract_strided_slice %32 {offsets = [0, 24], sizes = [8, 8], strides = [1, 1]} : vector<8x32xbf16> to vector<8x8xbf16>
    "tpu.trace_start"() <{level = 10 : i32, message = "qd,kd->qk"}> : () -> ()
    %cst_54 = arith.constant dense<0.000000e+00> : vector<8x8xf32>
    %103 = tpu.matmul %100, %101, %cst_54 {dimension_numbers = #tpu.dot_dimension_numbers<[1], [1], [0], [0], [0, 0, 1, 0], [], []>} : vector<8x8xbf16>, vector<8x8xbf16>, vector<8x8xf32> -> vector<8x8xf32>
    "tpu.trace_stop"() : () -> ()
    %cst_55 = arith.constant dense<0xFF800000> : vector<8xf32>
    %104 = vector.multi_reduction <maximumf>, %103, %cst_55 [1] : vector<8x8xf32> to vector<8xf32>
    %105 = vector.shape_cast %104 : vector<8xf32> to vector<8x1xf32>
    %106 = vector.broadcast %105 : vector<8x1xf32> to vector<8x8xf32>
    %107 = arith.subf %103, %106 : vector<8x8xf32>
    %108 = math.exp %107 : vector<8x8xf32>
    %cst_56 = arith.constant dense<0.000000e+00> : vector<8xf32>
    %109 = vector.multi_reduction <add>, %108, %cst_56 [1] : vector<8x8xf32> to vector<8xf32>
    %110 = vector.shape_cast %109 : vector<8xf32> to vector<8x1xf32>
    %111 = arith.truncf %108 : vector<8x8xf32> to vector<8x8xbf16>
    "tpu.trace_start"() <{level = 10 : i32, message = "qk,kd->qd"}> : () -> ()
    %cst_57 = arith.constant dense<0.000000e+00> : vector<8x8xf32>
    %112 = tpu.matmul %111, %102, %cst_57 {dimension_numbers = #tpu.dot_dimension_numbers<[1], [0], [0], [1], [0, 0, 1, 1], [], []>} : vector<8x8xbf16>, vector<8x8xbf16>, vector<8x8xf32> -> vector<8x8xf32>
    "tpu.trace_stop"() : () -> ()
    %cst_58 = arith.constant 1.000000e+00 : f32
    %113 = vector.broadcast %cst_58 : f32 to vector<8x1xf32>
    %114 = arith.divf %113, %110 : vector<8x1xf32>
    %115 = vector.broadcast %114 : vector<8x1xf32> to vector<8x8xf32>
    %116 = arith.mulf %112, %115 : vector<8x8xf32>
    %117 = arith.truncf %116 : vector<8x8xf32> to vector<8x8xbf16>
    %c3 = arith.constant 3 : index
    %c0_59 = arith.constant 0 : index
    %c0_60 = arith.constant 0 : index
    %118 = vector.load %arg7[%c3, %c0_59, %c0_60] : memref<4x8x32xbf16, #tpu.memory_space<vmem>>, vector<1x8x32xbf16>
    %119 = vector.shape_cast %118 : vector<1x8x32xbf16> to vector<8x32xbf16>
    %cst_61 = arith.constant dense<0.000000e+00> : vector<8x32xf32>
    %120 = tpu.matmul %117, %119, %cst_61 {dimension_numbers = #tpu.dot_dimension_numbers<[1], [0], [0], [1], [0, 0, 1, 1], [], []>} : vector<8x8xbf16>, vector<8x32xbf16>, vector<8x32xf32> -> vector<8x32xf32>
    %121 = arith.addf %99, %120 : vector<8x32xf32>
    %c0_62 = arith.constant 0 : index
    %c0_63 = arith.constant 0 : index
    %122 = vector.load %arg8[%c0_62, %c0_63] : memref<1x32xf32, #tpu.memory_space<vmem>>, vector<1x32xf32>
    %123 = vector.broadcast %122 : vector<1x32xf32> to vector<8x32xf32>
    %124 = arith.addf %121, %123 : vector<8x32xf32>
    %c0_64 = arith.constant 0 : index
    %c0_65 = arith.constant 0 : index
    %c0_66 = arith.constant 0 : index
    %125 = vector.load %arg9[%c0_64, %c0_65, %c0_66] : memref<1x8x32xf32, #tpu.memory_space<vmem>>, vector<1x8x32xf32>
    %126 = vector.shape_cast %125 : vector<1x8x32xf32> to vector<8x32xf32>
    %127 = vector.shape_cast %124 : vector<8x32xf32> to vector<1x8x32xf32>
    tpu.vector_store %arg9[%c0_64, %c0_65, %c0_66], %127 {strides = array<i32>} : memref<1x8x32xf32, #tpu.memory_space<vmem>>, vector<1x8x32xf32>,
    return
  }
  func.func @transform_0(%arg0: i32, %arg1: i32) -> (i32, i32, i32) {
    %c0_i32 = arith.constant 0 : i32
    %c0_i32_0 = arith.constant 0 : i32
    return %arg0, %arg1, %c0_i32 : i32, i32, i32
  }
  func.func @transform_1(%arg0: i32, %arg1: i32) -> (i32, i32, i32) {
    %c0_i32 = arith.constant 0 : i32
    %c0_i32_0 = arith.constant 0 : i32
    %c0_i32_1 = arith.constant 0 : i32
    return %arg0, %c0_i32, %c0_i32_0 : i32, i32, i32
  }
  func.func @transform_2(%arg0: i32, %arg1: i32) -> (i32, i32, i32) {
    %c0_i32 = arith.constant 0 : i32
    %c0_i32_0 = arith.constant 0 : i32
    %c0_i32_1 = arith.constant 0 : i32
    return %arg0, %c0_i32, %c0_i32_0 : i32, i32, i32
  }
  func.func @transform_3(%arg0: i32, %arg1: i32) -> (i32, i32, i32) {
    %c0_i32 = arith.constant 0 : i32
    %c0_i32_0 = arith.constant 0 : i32
    %c0_i32_1 = arith.constant 0 : i32
    %c0_i32_2 = arith.constant 0 : i32
    return %c0_i32, %c0_i32_0, %c0_i32_1 : i32, i32, i32
  }
  func.func @transform_4(%arg0: i32, %arg1: i32) -> (i32, i32, i32) {
    %c0_i32 = arith.constant 0 : i32
    %c0_i32_0 = arith.constant 0 : i32
    %c0_i32_1 = arith.constant 0 : i32
    %c0_i32_2 = arith.constant 0 : i32
    return %c0_i32, %c0_i32_0, %c0_i32_1 : i32, i32, i32
  }
  func.func @transform_5(%arg0: i32, %arg1: i32) -> (i32, i32, i32) {
    %c0_i32 = arith.constant 0 : i32
    %c0_i32_0 = arith.constant 0 : i32
    %c0_i32_1 = arith.constant 0 : i32
    %c0_i32_2 = arith.constant 0 : i32
    return %c0_i32, %c0_i32_0, %c0_i32_1 : i32, i32, i32
  }
  func.func @transform_6(%arg0: i32, %arg1: i32) -> (i32, i32) {
    %c0_i32 = arith.constant 0 : i32
    %c0_i32_0 = arith.constant 0 : i32
    %c0_i32_1 = arith.constant 0 : i32
    return %c0_i32, %c0_i32_0 : i32, i32
  }
  func.func @transform_7(%arg0: i32, %arg1: i32) -> (i32, i32, i32) {
    %c0_i32 = arith.constant 0 : i32
    %c0_i32_0 = arith.constant 0 : i32
    return %arg0, %arg1, %c0_i32 : i32, i32, i32
  }
}

</mosaic_0001>

<llo_original>
// kernel: tpu_custom_call.1
$region0: #{tpu_custom_call.1}
  #allocation0 [shape = 'u32[]', space=smem, size = 0x4, offset = 0x4, fixed_abs, tag = 'smem constant byte address 0x4 - core index']
  #allocation1 [shape = 'u32[144,128]{1,0:T(1,128)}', space=vmem, size = 0x12000, scoped, tag = 'internal scratch']
  %s0 = inlined_call_operand.hbm [shape: f32[2,8,32], index: 0, kind: input, shape index: {}]
  %s1 = inlined_call_operand.hbm [shape: f32[2,8,32], index: 1, kind: input, shape index: {}]
  %s2 = inlined_call_operand.hbm [shape: f32[2,8,32], index: 2, kind: input, shape index: {}]
  %s3 = inlined_call_operand.hbm [shape: bf16[3,32,32], index: 3, kind: input, shape index: {}]
  %s4 = inlined_call_operand.vmem [shape: f32[3,1,32], index: 4, kind: input, shape index: {}]
  %s5 = inlined_call_operand.hbm [shape: bf16[4,8,32], index: 5, kind: input, shape index: {}]
  %s6 = inlined_call_operand.vmem [shape: f32[1,32], index: 6, kind: input, shape index: {}]
  %s7 = inlined_call_operand.hbm [shape: f32[2,8,32], index: 7, kind: output, shape index: {}]
  %s8 = sld [smem:[#allocation0]]
  $region81: #{tpu_custom_call.1} parent=0
    _
  %s10 = ssub.s32 1, %s8
  %s11 = scalar_select 0, %s10, %s8
  $region1: #{tpu_custom_call.1} parent=0
    #allocation2 [shape = 'u8[8192]{0}', space=vmem, size = 0x2000, scoped, tag = 'input window, operand 0']
    #allocation3 [shape = 's32[2]{0}', space=sflag, size = 0x8, scoped, tag = 'scoped memory for tpu_custom_call.1']
    #allocation4 [shape = 's32[2]{0}', space=sflag, size = 0x8, scoped, tag = 'scoped memory for tpu_custom_call.1']
    #allocation5 [shape = 'u8[8192]{0}', space=vmem, size = 0x2000, scoped, tag = 'input window, operand 1']
    #allocation6 [shape = 's32[2]{0}', space=sflag, size = 0x8, scoped, tag = 'scoped memory for tpu_custom_call.1']
    #allocation7 [shape = 'u8[8192]{0}', space=vmem, size = 0x2000, scoped, tag = 'input window, operand 2']
    #allocation8 [shape = 'u8[24576]{0}', space=vmem, size = 0x6000, scoped, tag = 'input window, operand 3, single buffered']
    #allocation9 [shape = 's32[1]{0}', space=sflag, size = 0x4, scoped, tag = 'scoped memory for tpu_custom_call.1']
    #allocation10 [shape = 'u8[8192]{0}', space=vmem, size = 0x2000, scoped, tag = 'input window, operand 5, single buffered']
    #allocation11 [shape = 'u8[8192]{0}', space=vmem, size = 0x2000, scoped, tag = 'output window, operand 0']
    %12 = vsyncpa [#allocation3], 0
    %s13 = scalar_lea.sflag [#allocation3], 1
    %14 = vsyncpa %s13, 0
    %15 = vsyncpa [#allocation6], 0
    %s16 = scalar_lea.sflag [#allocation6], 1
    %17 = vsyncpa %s16, 0
    %18 = vsyncpa [#allocation9], 0
    %19 = vsyncpa [#allocation4], 0
    %s20 = scalar_lea.sflag [#allocation4], 1
    %21 = vsyncpa %s20, 0
    loop: start=0, step=1, limit=4
    $region2: #{tpu_custom_call.1} parent=1 // loop_pre_header
      _
    $region3: #{tpu_custom_call.1} parent=1 // loop_header
      %s23 = sphi 0, %s27
      %p24 = scmp.ge.s32.totalorder %s23, 4
      %s30 = sphi 0, %s42
      %s31 = sphi 0, %s38
      %s32 = sphi 0, %s30
      %s33 = sphi 0, %s31
      %s34 = sphi 0, %s32
      %s35 = sphi 0, %s33
      %s47 = sphi 0, %s49
      %s50 = sphi 0, %s47
      %s51 = sphi 0, %s50
      %s67 = sphi 0, %s51
      %s73 = sphi 0, %s75
      %s76 = sphi 0, %s73
      %s77 = sphi 0, %s76
      %s93 = sphi 0, %s77
      %s99 = sphi 0, %s101
      %s102 = sphi 0, %s99
      %s103 = sphi 0, %s102
      %s119 = sphi 0, %s103
      %s123 = sphi 0, %s123
      %s125 = sphi 0, %s123
      %s126 = sphi 0, %s125
      %s140 = sphi 0, %s126
      %s144 = sphi 0, %s144
      %s146 = sphi 0, %s144
      %s147 = sphi 0, %s146
      %s161 = sphi 0, %s147
      %s165 = sphi 0, %s165
      %s167 = sphi 0, %s165
      %s168 = sphi 0, %s167
      %s182 = sphi 0, %s168
      %s186 = sphi 0, %s186
      %s188 = sphi 0, %s186
      %s189 = sphi 0, %s188
      %s203 = sphi 0, %s189
      %s211 = sphi 0, %s213
      %s214 = sphi 0, %s211
      %s215 = sphi 0, %s214
      %s231 = sphi 0, %s215
    $region4: #{tpu_custom_call.1} parent=1 // loop_header_branch
      %26 = sbr.rel (%p24) target = $region8
    $region5: #{tpu_custom_call.1} parent=1 // loop_body
      %s28 = ssub.s32 %s23, 1
      %s29 = ssub.s32 %s23, 2
      %s36 = sadd.s32 1, %s31
      %p37 = scmp.ge.s32.totalorder %s36, 1
      %s38 = scalar_select %p37, 0, %s36
      %s39 = sadd.s32 1, %s30
      %s40 = scalar_select %p37, %s39, %s30
      %p41 = scmp.ge.s32.totalorder %s40, 2
      %s42 = scalar_select %p41, 0, %s40
      %s43 = ssub.s32 %s30, %s42
      %s44 = ssub.s32 %s31, %s38
      %s45 = sor.u32 %s43, %s44
      %p46 = scmp.eq.s32.totalorder %s45, 0
      %s48 = sadd.s32 %s47, 1
      %s49 = scalar_select %p46, %s47, %s48
      %p52 = pneg %p46
      %p53 = scmp.eq.s32.totalorder %s23, 1
      %p54 = por %p52, %p53
      %p55 = scmp.ne.s32.totalorder %s47, %s50
      %p56 = scmp.eq.s32.totalorder %s23, 0
      %p57 = por %p55, %p56
      %p58 = scmp.ne.s32.totalorder %s47, %s50
      %p59 = scmp.eq.s32.totalorder %s28, 1
      %p60 = por %p58, %p59
      %p61 = scmp.ne.s32.totalorder %s50, %s51
      %p62 = scmp.eq.s32.totalorder %s28, 0
      %p63 = por %p61, %p62
      %p64 = scmp.ne.s32.totalorder %s50, %s51
      %p65 = scmp.eq.s32.totalorder %s29, 1
      %p66 = por %p64, %p65
      %p68 = scmp.ne.s32.totalorder %s51, %s67
      %p69 = scmp.eq.s32.totalorder %s29, 0
      %p70 = por %p68, %p69
      %s71 = ssub.s32 %s30, %s42
      %p72 = scmp.eq.s32.totalorder %s71, 0
      %s74 = sadd.s32 %s73, 1
      %s75 = scalar_select %p72, %s73, %s74
      %p78 = pneg %p72
      %p79 = scmp.eq.s32.totalorder %s23, 1
      %p80 = por %p78, %p79
      %p81 = scmp.ne.s32.totalorder %s73, %s76
      %p82 = scmp.eq.s32.totalorder %s23, 0
      %p83 = por %p81, %p82
      %p84 = scmp.ne.s32.totalorder %s73, %s76
      %p85 = scmp.eq.s32.totalorder %s28, 1
      %p86 = por %p84, %p85
      %p87 = scmp.ne.s32.totalorder %s76, %s77
      %p88 = scmp.eq.s32.totalorder %s28, 0
      %p89 = por %p87, %p88
      %p90 = scmp.ne.s32.totalorder %s76, %s77
      %p91 = scmp.eq.s32.totalorder %s29, 1
      %p92 = por %p90, %p91
      %p94 = scmp.ne.s32.totalorder %s77, %s93
      %p95 = scmp.eq.s32.totalorder %s29, 0
      %p96 = por %p94, %p95
      %s97 = ssub.s32 %s30, %s42
      %p98 = scmp.eq.s32.totalorder %s97, 0
      %s100 = sadd.s32 %s99, 1
      %s101 = scalar_select %p98, %s99, %s100
      %p104 = pneg %p98
      %p105 = scmp.eq.s32.totalorder %s23, 1
      %p106 = por %p104, %p105
      %p107 = scmp.ne.s32.totalorder %s99, %s102
      %p108 = scmp.eq.s32.totalorder %s23, 0
      %p109 = por %p107, %p108
      %p110 = scmp.ne.s32.totalorder %s99, %s102
      %p111 = scmp.eq.s32.totalorder %s28, 1
      %p112 = por %p110, %p111
      %p113 = scmp.ne.s32.totalorder %s102, %s103
      %p114 = scmp.eq.s32.totalorder %s28, 0
      %p115 = por %p113, %p114
      %p116 = scmp.ne.s32.totalorder %s102, %s103
      %p117 = scmp.eq.s32.totalorder %s29, 1
      %p118 = por %p116, %p117
      %p120 = scmp.ne.s32.totalorder %s103, %s119
      %p121 = scmp.eq.s32.totalorder %s29, 0
      %p122 = por %p120, %p121
      %s124 = sadd.s32 %s123, 1
      %p127 = scmp.eq.s32.totalorder %s23, 1
      %p128 = scmp.ne.s32.totalorder %s123, %s125
      %p129 = scmp.eq.s32.totalorder %s23, 0
      %p130 = por %p128, %p129
      %p131 = scmp.ne.s32.totalorder %s123, %s125
      %p132 = scmp.eq.s32.totalorder %s28, 1
      %p133 = por %p131, %p132
      %p134 = scmp.ne.s32.totalorder %s125, %s126
      %p135 = scmp.eq.s32.totalorder %s28, 0
      %p136 = por %p134, %p135
      %p137 = scmp.ne.s32.totalorder %s125, %s126
      %p138 = scmp.eq.s32.totalorder %s29, 1
      %p139 = por %p137, %p138
      %p141 = scmp.ne.s32.totalorder %s126, %s140
      %p142 = scmp.eq.s32.totalorder %s29, 0
      %p143 = por %p141, %p142
      %s145 = sadd.s32 %s144, 1
      %p148 = scmp.eq.s32.totalorder %s23, 1
      %p149 = scmp.ne.s32.totalorder %s144, %s146
      %p150 = scmp.eq.s32.totalorder %s23, 0
      %p151 = por %p149, %p150
      %p152 = scmp.ne.s32.totalorder %s144, %s146
      %p153 = scmp.eq.s32.totalorder %s28, 1
      %p154 = por %p152, %p153
      %p155 = scmp.ne.s32.totalorder %s146, %s147
      %p156 = scmp.eq.s32.totalorder %s28, 0
      %p157 = por %p155, %p156
      %p158 = scmp.ne.s32.totalorder %s146, %s147
      %p159 = scmp.eq.s32.totalorder %s29, 1
      %p160 = por %p158, %p159
      %p162 = scmp.ne.s32.totalorder %s147, %s161
      %p163 = scmp.eq.s32.totalorder %s29, 0
      %p164 = por %p162, %p163
      %s166 = sadd.s32 %s165, 1
      %p169 = scmp.eq.s32.totalorder %s23, 1
      %p170 = scmp.ne.s32.totalorder %s165, %s167
      %p171 = scmp.eq.s32.totalorder %s23, 0
      %p172 = por %p170, %p171
      %p173 = scmp.ne.s32.totalorder %s165, %s167
      %p174 = scmp.eq.s32.totalorder %s28, 1
      %p175 = por %p173, %p174
      %p176 = scmp.ne.s32.totalorder %s167, %s168
      %p177 = scmp.eq.s32.totalorder %s28, 0
      %p178 = por %p176, %p177
      %p179 = scmp.ne.s32.totalorder %s167, %s168
      %p180 = scmp.eq.s32.totalorder %s29, 1
      %p181 = por %p179, %p180
      %p183 = scmp.ne.s32.totalorder %s168, %s182
      %p184 = scmp.eq.s32.totalorder %s29, 0
      %p185 = por %p183, %p184
      %s187 = sadd.s32 %s186, 1
      %p190 = scmp.eq.s32.totalorder %s23, 1
      %p191 = scmp.ne.s32.totalorder %s186, %s188
      %p192 = scmp.eq.s32.totalorder %s23, 0
      %p193 = por %p191, %p192
      %p194 = scmp.ne.s32.totalorder %s186, %s188
      %p195 = scmp.eq.s32.totalorder %s28, 1
      %p196 = por %p194, %p195
      %p197 = scmp.ne.s32.totalorder %s188, %s189
      %p198 = scmp.eq.s32.totalorder %s28, 0
      %p199 = por %p197, %p198
      %p200 = scmp.ne.s32.totalorder %s188, %s189
      %p201 = scmp.eq.s32.totalorder %s29, 1
      %p202 = por %p200, %p201
      %p204 = scmp.ne.s32.totalorder %s189, %s203
      %p205 = scmp.eq.s32.totalorder %s29, 0
      %p206 = por %p204, %p205
      %s207 = ssub.s32 %s30, %s42
      %s208 = ssub.s32 %s31, %s38
      %s209 = sor.u32 %s207, %s208
      %p210 = scmp.eq.s32.totalorder %s209, 0
      %s212 = sadd.s32 %s211, 1
      %s213 = scalar_select %p210, %s211, %s212
      %p216 = pneg %p210
      %p217 = scmp.eq.s32.totalorder %s23, 1
      %p218 = por %p216, %p217
      %p219 = scmp.ne.s32.totalorder %s211, %s214
      %p220 = scmp.eq.s32.totalorder %s23, 0
      %p221 = por %p219, %p220
      %p222 = scmp.ne.s32.totalorder %s211, %s214
      %p223 = scmp.eq.s32.totalorder %s28, 1
      %p224 = por %p222, %p223
      %p225 = scmp.ne.s32.totalorder %s214, %s215
      %p226 = scmp.eq.s32.totalorder %s28, 0
      %p227 = por %p225, %p226
      %p228 = scmp.ne.s32.totalorder %s214, %s215
      %p229 = scmp.eq.s32.totalorder %s29, 1
      %p230 = por %p228, %p229
      %p232 = scmp.ne.s32.totalorder %s215, %s231
      %p233 = scmp.eq.s32.totalorder %s29, 0
      %p234 = por %p232, %p233
      %p235 = scmp.le.s32.totalorder 1, %s23
      %p236 = scmp.lt.s32.totalorder %s23, 3
      %p237 = pnand %p235, %p236
      %p238 = pneg %p237
      // Predicated region
      $region9: #{tpu_custom_call.1} parent=5 // pred_check
        _
      $region10: #{tpu_custom_call.1} parent=5 // pred_check_branch
        %240 = sbr.rel (%p237) target = $region12
      $region11: #{tpu_custom_call.1} parent=5 // pred_region
        %s241 = ssub.s32 %s23, 1
        // Predicated region
        $region13: #{tpu_custom_call.1} parent=11 // pred_check
          %p242 = pneg %p136
        $region14: #{tpu_custom_call.1} parent=11 // pred_check_branch
          %244 = sbr.rel (%p242) target = $region16
        $region15: #{tpu_custom_call.1} parent=11 // pred_region
          %s246 = ssub.s32 768, 768
          %247 = vsyncadd [#allocation9], %s246
          %s248 = sshll.u32 [#allocation8], 4
          %s249 = int_to_ptr.vmem [resolvable:$true] %s248
          %254 = dma.hbm_to_vmem [thread:$0]  %s3, 768, %s249, [#allocation9], 64, 64, 4
        $region16: #{tpu_custom_call.1} parent=11 // pred_fallthru
          _
        // Predicated region
        $region17: #{tpu_custom_call.1} parent=11 // pred_check
          %p255 = pneg %p157
        $region18: #{tpu_custom_call.1} parent=11 // pred_check_branch
          %257 = sbr.rel (%p255) target = $region20
        $region19: #{tpu_custom_call.1} parent=11 // pred_region
          _
        $region20: #{tpu_custom_call.1} parent=11 // pred_fallthru
          _
        // Predicated region
        $region21: #{tpu_custom_call.1} parent=11 // pred_check
          %p258 = pneg %p178
        $region22: #{tpu_custom_call.1} parent=11 // pred_check_branch
          %260 = sbr.rel (%p258) target = $region24
        $region23: #{tpu_custom_call.1} parent=11 // pred_region
          %s262 = ssub.s32 256, 256
          %263 = vsyncadd [#allocation9], %s262
          %s264 = sshll.u32 [#allocation10], 4
          %s265 = int_to_ptr.vmem [resolvable:$true] %s264
          %270 = dma.hbm_to_vmem [thread:$0]  %s5, 256, %s265, [#allocation9], 64, 64, 4
        $region24: #{tpu_custom_call.1} parent=11 // pred_fallthru
          _
        // Predicated region
        $region25: #{tpu_custom_call.1} parent=11 // pred_check
          %p271 = pneg %p199
        $region26: #{tpu_custom_call.1} parent=11 // pred_check_branch
          %273 = sbr.rel (%p271) target = $region28
        $region27: #{tpu_custom_call.1} parent=11 // pred_region
          _
        $region28: #{tpu_custom_call.1} parent=11 // pred_fallthru
          _
      $region12: #{tpu_custom_call.1} parent=5 // pred_fallthru
        _
      %p274 = scmp.lt.s32.totalorder %s23, 2
      // Predicated region
      $region29: #{tpu_custom_call.1} parent=5 // pred_check
        %p275 = pneg %p274
      $region30: #{tpu_custom_call.1} parent=5 // pred_check_branch
        %277 = sbr.rel (%p275) target = $region32
      $region31: #{tpu_custom_call.1} parent=5 // pred_region
        // Predicated region
        $region33: #{tpu_custom_call.1} parent=31 // pred_check
          %p278 = pneg %p57
        $region34: #{tpu_custom_call.1} parent=31 // pred_check_branch
          %280 = sbr.rel (%p278) target = $region36
        $region35: #{tpu_custom_call.1} parent=31 // pred_region
          %s281 = sand.u32 %s47, 1
          %s282 = scalar_lea.sflag [#allocation3], %s281
          %s283 = sand.u32 %s47, 1
          %s284 = smul.addr %s283, 8
          %s285 = scalar_lea.vmem [#allocation2], %s284
          %s287 = ssub.s32 128, 128
          %288 = vsyncadd %s282, %s287
          %s289 = sadd.s32 %s31, %s30
          %s290 = smul.addr %s289, 128
          %s291 = scalar_lea.hbm %s0, %s290
          %s293 = sshll.u32 %s285, 4
          %s294 = int_to_ptr.vmem [resolvable:$true] %s293
          %296 = dma.hbm_to_vmem [thread:$0]  %s291, 128, %s294, %s282
        $region36: #{tpu_custom_call.1} parent=31 // pred_fallthru
          _
        // Predicated region
        $region37: #{tpu_custom_call.1} parent=31 // pred_check
          %p297 = pneg %p83
        $region38: #{tpu_custom_call.1} parent=31 // pred_check_branch
          %299 = sbr.rel (%p297) target = $region40
        $region39: #{tpu_custom_call.1} parent=31 // pred_region
          %s300 = sand.u32 %s23, 1
          %s301 = scalar_lea.sflag [#allocation6], %s300
          %s302 = sand.u32 %s73, 1
          %s303 = smul.addr %s302, 8
          %s304 = scalar_lea.vmem [#allocation5], %s303
          %s306 = ssub.s32 128, 128
          %307 = vsyncadd %s301, %s306
          %s308 = smul.addr %s30, 128
          %s309 = scalar_lea.hbm %s1, %s308
          %s311 = sshll.u32 %s304, 4
          %s312 = int_to_ptr.vmem [resolvable:$true] %s311
          %314 = dma.hbm_to_vmem [thread:$0]  %s309, 128, %s312, %s301
        $region40: #{tpu_custom_call.1} parent=31 // pred_fallthru
          _
        // Predicated region
        $region41: #{tpu_custom_call.1} parent=31 // pred_check
          %p315 = pneg %p109
        $region42: #{tpu_custom_call.1} parent=31 // pred_check_branch
          %317 = sbr.rel (%p315) target = $region44
        $region43: #{tpu_custom_call.1} parent=31 // pred_region
          %s318 = sand.u32 %s23, 1
          %s319 = scalar_lea.sflag [#allocation6], %s318
          %s320 = sand.u32 %s99, 1
          %s321 = smul.addr %s320, 8
          %s322 = scalar_lea.vmem [#allocation7], %s321
          %s324 = ssub.s32 128, 128
          %325 = vsyncadd %s319, %s324
          %s326 = smul.addr %s30, 128
          %s327 = scalar_lea.hbm %s2, %s326
          %s329 = sshll.u32 %s322, 4
          %s330 = int_to_ptr.vmem [resolvable:$true] %s329
          %332 = dma.hbm_to_vmem [thread:$0]  %s327, 128, %s330, %s319
        $region44: #{tpu_custom_call.1} parent=31 // pred_fallthru
          _
      $region32: #{tpu_custom_call.1} parent=5 // pred_fallthru
        _
      %p333 = scmp.le.s32.totalorder 1, %s23
      %p334 = scmp.lt.s32.totalorder %s23, 3
      %p335 = pnand %p333, %p334
      %p336 = pneg %p335
      // Predicated region
      $region45: #{tpu_custom_call.1} parent=5 // pred_check
        _
      $region46: #{tpu_custom_call.1} parent=5 // pred_check_branch
        %338 = sbr.rel (%p335) target = $region48
      $region47: #{tpu_custom_call.1} parent=5 // pred_region
        %s339 = ssub.s32 %s23, 1
        %s340 = sand.u32 %s50, 1
        %s341 = scalar_lea.sflag [#allocation3], %s340
        %s342 = sand.u32 %s50, 1
        %s343 = smul.addr %s342, 8
        %s344 = scalar_lea.vmem [#allocation2], %s343
        // Predicated region
        $region49: #{tpu_custom_call.1} parent=47 // pred_check
          %p345 = pneg %p63
        $region50: #{tpu_custom_call.1} parent=47 // pred_check_branch
          %347 = sbr.rel (%p345) target = $region52
        $region51: #{tpu_custom_call.1} parent=47 // pred_region
          %348 = dma.done %s341, 128
        $region52: #{tpu_custom_call.1} parent=47 // pred_fallthru
          _
        %s349 = sand.u32 %s28, 1
        %s350 = scalar_lea.sflag [#allocation6], %s349
        %s351 = sand.u32 %s76, 1
        %s352 = smul.addr %s351, 8
        %s353 = scalar_lea.vmem [#allocation5], %s352
        // Predicated region
        $region53: #{tpu_custom_call.1} parent=47 // pred_check
          %p354 = pneg %p89
        $region54: #{tpu_custom_call.1} parent=47 // pred_check_branch
          %356 = sbr.rel (%p354) target = $region56
        $region55: #{tpu_custom_call.1} parent=47 // pred_region
          %357 = dma.done %s350, 128
        $region56: #{tpu_custom_call.1} parent=47 // pred_fallthru
          _
        %s358 = sand.u32 %s28, 1
        %s359 = scalar_lea.sflag [#allocation6], %s358
        %s360 = sand.u32 %s102, 1
        %s361 = smul.addr %s360, 8
        %s362 = scalar_lea.vmem [#allocation7], %s361
        // Predicated region
        $region57: #{tpu_custom_call.1} parent=47 // pred_check
          %p363 = pneg %p115
        $region58: #{tpu_custom_call.1} parent=47 // pred_check_branch
          %365 = sbr.rel (%p363) target = $region60
        $region59: #{tpu_custom_call.1} parent=47 // pred_region
          %366 = dma.done %s359, 128
        $region60: #{tpu_custom_call.1} parent=47 // pred_fallthru
          _
        // Predicated region
        $region61: #{tpu_custom_call.1} parent=47 // pred_check
          %p367 = pneg %p136
        $region62: #{tpu_custom_call.1} parent=47 // pred_check_branch
          %369 = sbr.rel (%p367) target = $region64
        $region63: #{tpu_custom_call.1} parent=47 // pred_region
          %370 = dma.done [#allocation9], 768
        $region64: #{tpu_custom_call.1} parent=47 // pred_fallthru
          _
        // Predicated region
        $region65: #{tpu_custom_call.1} parent=47 // pred_check
          %p371 = pneg %p178
        $region66: #{tpu_custom_call.1} parent=47 // pred_check_branch
          %373 = sbr.rel (%p371) target = $region68
        $region67: #{tpu_custom_call.1} parent=47 // pred_region
          %374 = dma.done [#allocation9], 256
        $region68: #{tpu_custom_call.1} parent=47 // pred_fallthru
          _
        %s375 = sand.u32 %s50, 1
        %s376 = scalar_lea.sflag [#allocation3], %s375
        %s377 = sand.u32 %s50, 1
        %s378 = smul.addr %s377, 8
        %s379 = scalar_lea.vmem [#allocation2], %s378
        %p380 = pneg %p63
        %p381 = pneg %p60
        %s382 = sand.u32 %s28, 1
        %s383 = scalar_lea.sflag [#allocation6], %s382
        %s384 = sand.u32 %s76, 1
        %s385 = smul.addr %s384, 8
        %s386 = scalar_lea.vmem [#allocation5], %s385
        %p387 = pneg %p89
        %p388 = pneg %p86
        %s389 = sand.u32 %s28, 1
        %s390 = scalar_lea.sflag [#allocation6], %s389
        %s391 = sand.u32 %s102, 1
        %s392 = smul.addr %s391, 8
        %s393 = scalar_lea.vmem [#allocation7], %s392
        %p394 = pneg %p115
        %p395 = pneg %p112
        %p396 = pneg %p136
        %p397 = pneg %p133
        %p398 = pneg %p157
        %p399 = pneg %p154
        %p400 = pneg %p178
        %p401 = pneg %p175
        %p402 = pneg %p199
        %p403 = pneg %p196
        %p404 = pneg %p227
        %p405 = pneg %p224
        %s406 = sand.u32 %s214, 1
        %s407 = scalar_lea.sflag [#allocation4], %s406
        %s408 = sand.u32 %s214, 1
        %s409 = smul.addr %s408, 8
        %s410 = scalar_lea.vmem [#allocation11], %s409
        %v412 = vld [vmem:[%s344] sm:$0xff]
        %v413 = vpack.c.bf16 %v412, %v412
        %v414 = vld [vmem:[#allocation8] sm:$0xf]
        %v415 = vld [vmem:[#allocation8 + $0x4] sm:$0xf]
        %v416 = vld [vmem:[#allocation8 + $0x8] sm:$0xf]
        %v417 = vld [vmem:[#allocation8 + $0xc] sm:$0xf]
        %v418 = vld [vmem:[%s4] sm:$0x1]
        %v420 = vlaneseq
        %v421 = vshrl.u32 %v420, 7
        %v422 = vsub.s32 0, %v421
        %v423 = vrot.slane %v418, %v422
        %v429 = vunpack.c.l.b16 %v414
        %v430 = vunpack.c.l.b16 %v415
        %v431 = vunpack.c.l.b16 %v416
        %v432 = vunpack.c.l.b16 %v417
        %v433 = vpack.c.b16 %v430, %v429
        %v434 = vpack.c.b16 %v432, %v431
        %vm437 = vcmask 261120
        %v439 = vsel %vm437, %v413, 0
        %441 = vmatprep.subr.bf16.mxu0 0
        %442 = vmatpush1.bf16.msra.mxu0 0
        %443 = vmatprep.subr.bf16.mxu0 0
        %444 = vmatpush1.bf16.msra.mxu0 0
        %445 = vmatprep.subr.bf16.mxu0 0
        %446 = vmatpush1.bf16.msra.mxu0 0
        %447 = vmatprep.subr.bf16.mxu0 0
        %448 = vmatpush1.bf16.msra.mxu0 0
        %449 = vmatprep.subr.bf16.mxu0 0
        %450 = vmatpush1.bf16.msra.mxu0 0
        %451 = vmatprep.subr.bf16.mxu0 0
        %452 = vmatpush1.bf16.msra.mxu0 0
        %453 = vmatprep.subr.bf16.mxu0 0
        %454 = vmatpush1.bf16.msra.mxu0 %v434
        %455 = vmatprep.subr.bf16.mxu0 0
        %456 = vmatpush1.bf16.msra.mxu0 %v433
        %457 = vmatprep.subr.bf16.mxu0 0
        %458 = vmatpush2.bf16.msra.mxu0 0
        %459 = vmatprep.subr.bf16.mxu0 0
        %460 = vmatpush2.bf16.msra.mxu0 0
        %461 = vmatprep.subr.bf16.mxu0 0
        %462 = vmatpush2.bf16.msra.mxu0 0
        %463 = vmatprep.subr.bf16.mxu0 0
        %464 = vmatpush2.bf16.msra.mxu0 0
        %465 = vmatprep.subr.bf16.mxu0 0
        %466 = vmatpush2.bf16.msra.mxu0 0
        %467 = vmatprep.subr.bf16.mxu0 0
        %468 = vmatpush2.bf16.msra.mxu0 0
        %469 = vmatprep.subr.bf16.mxu0 0
        %470 = vmatpush2.bf16.msra.mxu0 0
        %471 = vmatprep.subr.bf16.mxu0 0
        %472 = vmatpush2.bf16.msra.mxu0 0
        %473 = vmatprep.mubr.bf16.mxu0 0
        %474 = vmatmul.mubr.bf16.gmra.mxu0 %v439
        %v475 = vpop.f32.mrf.mxu0
        %v476 = vadd.f32 %v423, %v475
        %v477 = vpop.f32.mrf.mxu0
        %v478 = vpop.f32.mrf.mxu0
        %v479 = vpop.f32.mrf.mxu0
        %480 = vdwg.mxu0
        %v481 = vpack.c.bf16 %v476, %v476
        %v482 = vld [vmem:[%s353] sm:$0xff]
        %v483 = vpack.c.bf16 %v482, %v482
        %s484 = scalar_lea.vmem [#allocation8], 16
        %v485 = vld [vmem:[%s484] sm:$0xf]
        %v486 = vld [vmem:[%s484 + $0x4] sm:$0xf]
        %v487 = vld [vmem:[%s484 + $0x8] sm:$0xf]
        %v488 = vld [vmem:[%s484 + $0xc] sm:$0xf]
        %s489 = scalar_lea.vmem %s4, 1
        %v490 = vld [vmem:[%s489] sm:$0x1]
        %v492 = vlaneseq
        %v493 = vshrl.u32 %v492, 7
        %v494 = vsub.s32 0, %v493
        %v495 = vrot.slane %v490, %v494
        %v501 = vunpack.c.l.b16 %v485
        %v502 = vunpack.c.l.b16 %v486
        %v503 = vunpack.c.l.b16 %v487
        %v504 = vunpack.c.l.b16 %v488
        %v505 = vpack.c.b16 %v502, %v501
        %v506 = vpack.c.b16 %v504, %v503
        %v510 = vsel %vm437, %v483, 0
        %512 = vmatprep.subr.bf16.mxu0 0
        %513 = vmatpush1.bf16.msra.mxu0 0
        %514 = vmatprep.subr.bf16.mxu0 0
        %515 = vmatpush1.bf16.msra.mxu0 0
        %516 = vmatprep.subr.bf16.mxu0 0
        %517 = vmatpush1.bf16.msra.mxu0 0
        %518 = vmatprep.subr.bf16.mxu0 0
        %519 = vmatpush1.bf16.msra.mxu0 0
        %520 = vmatprep.subr.bf16.mxu0 0
        %521 = vmatpush1.bf16.msra.mxu0 0
        %522 = vmatprep.subr.bf16.mxu0 0
        %523 = vmatpush1.bf16.msra.mxu0 0
        %524 = vmatprep.subr.bf16.mxu0 0
        %525 = vmatpush1.bf16.msra.mxu0 %v506
        %526 = vmatprep.subr.bf16.mxu0 0
        %527 = vmatpush1.bf16.msra.mxu0 %v505
        %528 = vmatprep.subr.bf16.mxu0 0
        %529 = vmatpush2.bf16.msra.mxu0 0
        %530 = vmatprep.subr.bf16.mxu0 0
        %531 = vmatpush2.bf16.msra.mxu0 0
        %532 = vmatprep.subr.bf16.mxu0 0
        %533 = vmatpush2.bf16.msra.mxu0 0
        %534 = vmatprep.subr.bf16.mxu0 0
        %535 = vmatpush2.bf16.msra.mxu0 0
        %536 = vmatprep.subr.bf16.mxu0 0
        %537 = vmatpush2.bf16.msra.mxu0 0
        %538 = vmatprep.subr.bf16.mxu0 0
        %539 = vmatpush2.bf16.msra.mxu0 0
        %540 = vmatprep.subr.bf16.mxu0 0
        %541 = vmatpush2.bf16.msra.mxu0 0
        %542 = vmatprep.subr.bf16.mxu0 0
        %543 = vmatpush2.bf16.msra.mxu0 0
        %544 = vmatprep.mubr.bf16.mxu0 0
        %545 = vmatmul.mubr.bf16.gmra.mxu0 %v510
        %v546 = vpop.f32.mrf.mxu0
        %v547 = vadd.f32 %v495, %v546
        %v548 = vpop.f32.mrf.mxu0
        %v549 = vpop.f32.mrf.mxu0
        %v550 = vpop.f32.mrf.mxu0
        %551 = vdwg.mxu0
        %v552 = vpack.c.bf16 %v547, %v547
        %v553 = vld [vmem:[%s362] sm:$0xff]
        %v554 = vpack.c.bf16 %v553, %v553
        %s555 = scalar_lea.vmem [#allocation8], 32
        %v556 = vld [vmem:[%s555] sm:$0xf]
        %v557 = vld [vmem:[%s555 + $0x4] sm:$0xf]
        %v558 = vld [vmem:[%s555 + $0x8] sm:$0xf]
        %v559 = vld [vmem:[%s555 + $0xc] sm:$0xf]
        %s560 = scalar_lea.vmem %s4, 2
        %v561 = vld [vmem:[%s560] sm:$0x1]
        %v563 = vlaneseq
        %v564 = vshrl.u32 %v563, 7
        %v565 = vsub.s32 0, %v564
        %v566 = vrot.slane %v561, %v565
        %v572 = vunpack.c.l.b16 %v556
        %v573 = vunpack.c.l.b16 %v557
        %v574 = vunpack.c.l.b16 %v558
        %v575 = vunpack.c.l.b16 %v559
        %v576 = vpack.c.b16 %v573, %v572
        %v577 = vpack.c.b16 %v575, %v574
        %v581 = vsel %vm437, %v554, 0
        %583 = vmatprep.subr.bf16.mxu0 0
        %584 = vmatpush1.bf16.msra.mxu0 0
        %585 = vmatprep.subr.bf16.mxu0 0
        %586 = vmatpush1.bf16.msra.mxu0 0
        %587 = vmatprep.subr.bf16.mxu0 0
        %588 = vmatpush1.bf16.msra.mxu0 0
        %589 = vmatprep.subr.bf16.mxu0 0
        %590 = vmatpush1.bf16.msra.mxu0 0
        %591 = vmatprep.subr.bf16.mxu0 0
        %592 = vmatpush1.bf16.msra.mxu0 0
        %593 = vmatprep.subr.bf16.mxu0 0
        %594 = vmatpush1.bf16.msra.mxu0 0
        %595 = vmatprep.subr.bf16.mxu0 0
        %596 = vmatpush1.bf16.msra.mxu0 %v577
        %597 = vmatprep.subr.bf16.mxu0 0
        %598 = vmatpush1.bf16.msra.mxu0 %v576
        %599 = vmatprep.subr.bf16.mxu0 0
        %600 = vmatpush2.bf16.msra.mxu0 0
        %601 = vmatprep.subr.bf16.mxu0 0
        %602 = vmatpush2.bf16.msra.mxu0 0
        %603 = vmatprep.subr.bf16.mxu0 0
        %604 = vmatpush2.bf16.msra.mxu0 0
        %605 = vmatprep.subr.bf16.mxu0 0
        %606 = vmatpush2.bf16.msra.mxu0 0
        %607 = vmatprep.subr.bf16.mxu0 0
        %608 = vmatpush2.bf16.msra.mxu0 0
        %609 = vmatprep.subr.bf16.mxu0 0
        %610 = vmatpush2.bf16.msra.mxu0 0
        %611 = vmatprep.subr.bf16.mxu0 0
        %612 = vmatpush2.bf16.msra.mxu0 0
        %613 = vmatprep.subr.bf16.mxu0 0
        %614 = vmatpush2.bf16.msra.mxu0 0
        %615 = vmatprep.mubr.bf16.mxu0 0
        %616 = vmatmul.mubr.bf16.gmra.mxu0 %v581
        %v617 = vpop.f32.mrf.mxu0
        %v618 = vadd.f32 %v566, %v617
        %v619 = vpop.f32.mrf.mxu0
        %v620 = vpop.f32.mrf.mxu0
        %v621 = vpop.f32.mrf.mxu0
        %622 = vdwg.mxu0
        %v623 = vpack.c.bf16 %v618, %v618
        %vm624 = vcmask 64512
        %v626 = vsel %vm624, %v481, 0
        %v629 = vsel %vm624, %v552, 0
        %631 = vmatprep.subr.bf16.mxu0 0
        %632 = vmatpush1.bf16.xpose.msra.mxu0 0
        %633 = vmatprep.subr.bf16.mxu0 0
        %634 = vmatpush1.bf16.xpose.msra.mxu0 0
        %635 = vmatprep.subr.bf16.mxu0 0
        %636 = vmatpush1.bf16.xpose.msra.mxu0 0
        %637 = vmatprep.subr.bf16.mxu0 0
        %638 = vmatpush1.bf16.xpose.msra.mxu0 0
        %639 = vmatprep.subr.bf16.mxu0 0
        %640 = vmatpush1.bf16.xpose.msra.mxu0 0
        %641 = vmatprep.subr.bf16.mxu0 0
        %642 = vmatpush1.bf16.xpose.msra.mxu0 0
        %643 = vmatprep.subr.bf16.mxu0 0
        %644 = vmatpush1.bf16.xpose.msra.mxu0 0
        %645 = vmatprep.subr.bf16.mxu0 0
        %646 = vmatpush1.bf16.xpose.msra.mxu0 %v629
        %647 = vmatprep.subr.bf16.mxu0 0
        %648 = vmatpush2.bf16.xpose.msra.mxu0 0
        %649 = vmatprep.subr.bf16.mxu0 0
        %650 = vmatpush2.bf16.xpose.msra.mxu0 0
        %651 = vmatprep.subr.bf16.mxu0 0
        %652 = vmatpush2.bf16.xpose.msra.mxu0 0
        %653 = vmatprep.subr.bf16.mxu0 0
        %654 = vmatpush2.bf16.xpose.msra.mxu0 0
        %655 = vmatprep.subr.bf16.mxu0 0
        %656 = vmatpush2.bf16.xpose.msra.mxu0 0
        %657 = vmatprep.subr.bf16.mxu0 0
        %658 = vmatpush2.bf16.xpose.msra.mxu0 0
        %659 = vmatprep.subr.bf16.mxu0 0
        %660 = vmatpush2.bf16.xpose.msra.mxu0 0
        %661 = vmatprep.subr.bf16.mxu0 0
        %662 = vmatpush2.bf16.xpose.msra.mxu0 0
        %663 = vmatprep.mubr.bf16.mxu0 0
        %664 = vmatmul.mubr.bf16.gmra.mxu0 %v626
        %v665 = vpop.f32.mrf.mxu0
        %v666 = vadd.f32 0.0, %v665
        %v667 = vpop.f32.mrf.mxu0
        %v668 = vpop.f32.mrf.mxu0
        %v669 = vpop.f32.mrf.mxu0
        %670 = vdwg.mxu0
        %v671 = vsel %vm624, %v666, -inf
        %672 = vmax.xlane.f32.xlu0 %v671
        %v673 = vpop.xlane.xlu0 %672
        %v674 = vsub.f32 %v666, %v673
        %v675 = vmul.f32 %v674, 1.442695
        %v676 = vpow.pop %v675
        %v677 = vsel %vm624, %v676, 0.0
        %678 = vadd.xlane.f32.xlu0 %v677
        %v679 = vpop.xlane.xlu0 %678
        %v680 = vpack.c.bf16 %v676, %v676
        %v682 = vsel %vm624, %v680, 0
        %vm684 = vcmask 1043456
        %v686 = vsel %vm684, %v623, 0
        %688 = vmatprep.subr.bf16.mxu0 0
        %689 = vmatpush1.bf16.msra.mxu0 0
        %690 = vmatprep.subr.bf16.mxu0 0
        %691 = vmatpush1.bf16.msra.mxu0 0
        %692 = vmatprep.subr.bf16.mxu0 0
        %693 = vmatpush1.bf16.msra.mxu0 0
        %694 = vmatprep.subr.bf16.mxu0 0
        %695 = vmatpush1.bf16.msra.mxu0 0
        %696 = vmatprep.subr.bf16.mxu0 0
        %697 = vmatpush1.bf16.msra.mxu0 0
        %698 = vmatprep.subr.bf16.mxu0 0
        %699 = vmatpush1.bf16.msra.mxu0 0
        %700 = vmatprep.subr.bf16.mxu0 0
        %701 = vmatpush1.bf16.msra.mxu0 0
        %702 = vmatprep.subr.bf16.mxu0 0
        %703 = vmatpush1.bf16.msra.mxu0 %v686
        %704 = vmatprep.subr.bf16.mxu0 0
        %705 = vmatpush2.bf16.msra.mxu0 0
        %706 = vmatprep.subr.bf16.mxu0 0
        %707 = vmatpush2.bf16.msra.mxu0 0
        %708 = vmatprep.subr.bf16.mxu0 0
        %709 = vmatpush2.bf16.msra.mxu0 0
        %710 = vmatprep.subr.bf16.mxu0 0
        %711 = vmatpush2.bf16.msra.mxu0 0
        %712 = vmatprep.subr.bf16.mxu0 0
        %713 = vmatpush2.bf16.msra.mxu0 0
        %714 = vmatprep.subr.bf16.mxu0 0
        %715 = vmatpush2.bf16.msra.mxu0 0
        %716 = vmatprep.subr.bf16.mxu0 0
        %717 = vmatpush2.bf16.msra.mxu0 0
        %718 = vmatprep.subr.bf16.mxu0 0
        %719 = vmatpush2.bf16.msra.mxu0 0
        %720 = vmatprep.mubr.bf16.mxu0 0
        %721 = vmatmul.mubr.bf16.gmra.mxu0 %v682
        %v722 = vpop.f32.mrf.mxu0
        %v723 = vadd.f32 0.0, %v722
        %v724 = vpop.f32.mrf.mxu0
        %v725 = vpop.f32.mrf.mxu0
        %v726 = vpop.f32.mrf.mxu0
        %727 = vdwg.mxu0
        %v728 = vrcp.pop %v679
        %v729 = vmul.f32 1.0, %v728
        %v730 = vmul.f32 %v723, %v729
        %v731 = vpack.c.bf16 %v730, %v730
        %v732 = vld [vmem:[#allocation10] sm:$0xf]
        %734 = vrot.lane.b32.xlu0 %v481, 120
        %v735 = vpop.permute.xlu0 %734
        %737 = vrot.lane.b32.xlu0 %v552, 120
        %v738 = vpop.permute.xlu0 %737
        %v740 = vsel %vm624, %v735, 0
        %v743 = vsel %vm624, %v738, 0
        %745 = vmatprep.subr.bf16.mxu0 0
        %746 = vmatpush1.bf16.xpose.msra.mxu0 0
        %747 = vmatprep.subr.bf16.mxu0 0
        %748 = vmatpush1.bf16.xpose.msra.mxu0 0
        %749 = vmatprep.subr.bf16.mxu0 0
        %750 = vmatpush1.bf16.xpose.msra.mxu0 0
        %751 = vmatprep.subr.bf16.mxu0 0
        %752 = vmatpush1.bf16.xpose.msra.mxu0 0
        %753 = vmatprep.subr.bf16.mxu0 0
        %754 = vmatpush1.bf16.xpose.msra.mxu0 0
        %755 = vmatprep.subr.bf16.mxu0 0
        %756 = vmatpush1.bf16.xpose.msra.mxu0 0
        %757 = vmatprep.subr.bf16.mxu0 0
        %758 = vmatpush1.bf16.xpose.msra.mxu0 0
        %759 = vmatprep.subr.bf16.mxu0 0
        %760 = vmatpush1.bf16.xpose.msra.mxu0 %v743
        %761 = vmatprep.subr.bf16.mxu0 0
        %762 = vmatpush2.bf16.xpose.msra.mxu0 0
        %763 = vmatprep.subr.bf16.mxu0 0
        %764 = vmatpush2.bf16.xpose.msra.mxu0 0
        %765 = vmatprep.subr.bf16.mxu0 0
        %766 = vmatpush2.bf16.xpose.msra.mxu0 0
        %767 = vmatprep.subr.bf16.mxu0 0
        %768 = vmatpush2.bf16.xpose.msra.mxu0 0
        %769 = vmatprep.subr.bf16.mxu0 0
        %770 = vmatpush2.bf16.xpose.msra.mxu0 0
        %771 = vmatprep.subr.bf16.mxu0 0
        %772 = vmatpush2.bf16.xpose.msra.mxu0 0
        %773 = vmatprep.subr.bf16.mxu0 0
        %774 = vmatpush2.bf16.xpose.msra.mxu0 0
        %775 = vmatprep.subr.bf16.mxu0 0
        %776 = vmatpush2.bf16.xpose.msra.mxu0 0
        %777 = vmatprep.mubr.bf16.mxu0 0
        %778 = vmatmul.mubr.bf16.gmra.mxu0 %v740
        %v779 = vpop.f32.mrf.mxu0
        %v780 = vadd.f32 0.0, %v779
        %v781 = vpop.f32.mrf.mxu0
        %v782 = vpop.f32.mrf.mxu0
        %v783 = vpop.f32.mrf.mxu0
        %784 = vdwg.mxu0
        %v785 = vsel %vm624, %v780, -inf
        %786 = vmax.xlane.f32.xlu0 %v785
        %v787 = vpop.xlane.xlu0 %786
        %v788 = vsub.f32 %v780, %v787
        %v789 = vmul.f32 %v788, 1.442695
        %v790 = vpow.pop %v789
        %v791 = vsel %vm624, %v790, 0.0
        %792 = vadd.xlane.f32.xlu0 %v791
        %v793 = vpop.xlane.xlu0 %792
        %v794 = vpack.c.bf16 %v790, %v790
        %796 = vrot.lane.b32.xlu0 %v623, 120
        %v797 = vpop.permute.xlu0 %796
        %v799 = vsel %vm624, %v794, 0
        %v802 = vsel %vm684, %v797, 0
        %804 = vmatprep.subr.bf16.mxu0 0
        %805 = vmatpush1.bf16.msra.mxu0 0
        %806 = vmatprep.subr.bf16.mxu0 0
        %807 = vmatpush1.bf16.msra.mxu0 0
        %808 = vmatprep.subr.bf16.mxu0 0
        %809 = vmatpush1.bf16.msra.mxu0 0
        %810 = vmatprep.subr.bf16.mxu0 0
        %811 = vmatpush1.bf16.msra.mxu0 0
        %812 = vmatprep.subr.bf16.mxu0 0
        %813 = vmatpush1.bf16.msra.mxu0 0
        %814 = vmatprep.subr.bf16.mxu0 0
        %815 = vmatpush1.bf16.msra.mxu0 0
        %816 = vmatprep.subr.bf16.mxu0 0
        %817 = vmatpush1.bf16.msra.mxu0 0
        %818 = vmatprep.subr.bf16.mxu0 0
        %819 = vmatpush1.bf16.msra.mxu0 %v802
        %820 = vmatprep.subr.bf16.mxu0 0
        %821 = vmatpush2.bf16.msra.mxu0 0
        %822 = vmatprep.subr.bf16.mxu0 0
        %823 = vmatpush2.bf16.msra.mxu0 0
        %824 = vmatprep.subr.bf16.mxu0 0
        %825 = vmatpush2.bf16.msra.mxu0 0
        %826 = vmatprep.subr.bf16.mxu0 0
        %827 = vmatpush2.bf16.msra.mxu0 0
        %828 = vmatprep.subr.bf16.mxu0 0
        %829 = vmatpush2.bf16.msra.mxu0 0
        %830 = vmatprep.subr.bf16.mxu0 0
        %831 = vmatpush2.bf16.msra.mxu0 0
        %832 = vmatprep.subr.bf16.mxu0 0
        %833 = vmatpush2.bf16.msra.mxu0 0
        %834 = vmatprep.subr.bf16.mxu0 0
        %835 = vmatpush2.bf16.msra.mxu0 0
        %836 = vmatprep.mubr.bf16.mxu0 0
        %837 = vmatmul.mubr.bf16.gmra.mxu0 %v799
        %v838 = vpop.f32.mrf.mxu0
        %v839 = vadd.f32 0.0, %v838
        %v840 = vpop.f32.mrf.mxu0
        %v841 = vpop.f32.mrf.mxu0
        %v842 = vpop.f32.mrf.mxu0
        %843 = vdwg.mxu0
        %v844 = vrcp.pop %v793
        %v845 = vmul.f32 1.0, %v844
        %v846 = vmul.f32 %v839, %v845
        %v847 = vpack.c.bf16 %v846, %v846
        %s848 = scalar_lea.vmem [#allocation10], 4
        %v849 = vld [vmem:[%s848] sm:$0xf]
        %v851 = vsel %vm624, %v847, 0
        %v854 = vsel %vm684, %v849, 0
        %856 = vmatprep.subr.bf16.mxu0 0
        %857 = vmatpush1.bf16.msra.mxu0 0
        %858 = vmatprep.subr.bf16.mxu0 0
        %859 = vmatpush1.bf16.msra.mxu0 0
        %860 = vmatprep.subr.bf16.mxu0 0
        %861 = vmatpush1.bf16.msra.mxu0 0
        %862 = vmatprep.subr.bf16.mxu0 0
        %863 = vmatpush1.bf16.msra.mxu0 0
        %864 = vmatprep.subr.bf16.mxu0 0
        %865 = vmatpush1.bf16.msra.mxu0 0
        %866 = vmatprep.subr.bf16.mxu0 0
        %867 = vmatpush1.bf16.msra.mxu0 0
        %868 = vmatprep.subr.bf16.mxu0 0
        %869 = vmatpush1.bf16.msra.mxu0 0
        %870 = vmatprep.subr.bf16.mxu0 0
        %871 = vmatpush1.bf16.msra.mxu0 %v854
        %872 = vmatprep.subr.bf16.mxu0 0
        %873 = vmatpush2.bf16.msra.mxu0 0
        %874 = vmatprep.subr.bf16.mxu0 0
        %875 = vmatpush2.bf16.msra.mxu0 0
        %876 = vmatprep.subr.bf16.mxu0 0
        %877 = vmatpush2.bf16.msra.mxu0 0
        %878 = vmatprep.subr.bf16.mxu0 0
        %879 = vmatpush2.bf16.msra.mxu0 0
        %880 = vmatprep.subr.bf16.mxu0 0
        %881 = vmatpush2.bf16.msra.mxu0 0
        %882 = vmatprep.subr.bf16.mxu0 0
        %883 = vmatpush2.bf16.msra.mxu0 0
        %884 = vmatprep.subr.bf16.mxu0 0
        %885 = vmatpush2.bf16.msra.mxu0 0
        %886 = vmatprep.subr.bf16.mxu0 0
        %887 = vmatpush2.bf16.msra.mxu0 0
        %888 = vmatprep.mubr.bf16.mxu0 0
        %889 = vmatmul.mubr.bf16.gmra.mxu0 %v851
        %v890 = vpop.f32.mrf.mxu0
        %v891 = vadd.f32 0.0, %v890
        %v892 = vpop.f32.mrf.mxu0
        %v893 = vpop.f32.mrf.mxu0
        %v894 = vpop.f32.mrf.mxu0
        %895 = vdwg.mxu0
        %v897 = vsel %vm624, %v731, 0
        %v900 = vsel %vm684, %v732, 0
        %902 = vmatprep.subr.bf16.mxu0 0
        %903 = vmatpush1.bf16.msra.mxu0 0
        %904 = vmatprep.subr.bf16.mxu0 0
        %905 = vmatpush1.bf16.msra.mxu0 0
        %906 = vmatprep.subr.bf16.mxu0 0
        %907 = vmatpush1.bf16.msra.mxu0 0
        %908 = vmatprep.subr.bf16.mxu0 0
        %909 = vmatpush1.bf16.msra.mxu0 0
        %910 = vmatprep.subr.bf16.mxu0 0
        %911 = vmatpush1.bf16.msra.mxu0 0
        %912 = vmatprep.subr.bf16.mxu0 0
        %913 = vmatpush1.bf16.msra.mxu0 0
        %914 = vmatprep.subr.bf16.mxu0 0
        %915 = vmatpush1.bf16.msra.mxu0 0
        %916 = vmatprep.subr.bf16.mxu0 0
        %917 = vmatpush1.bf16.msra.mxu0 %v900
        %918 = vmatprep.subr.bf16.mxu0 0
        %919 = vmatpush2.bf16.msra.mxu0 0
        %920 = vmatprep.subr.bf16.mxu0 0
        %921 = vmatpush2.bf16.msra.mxu0 0
        %922 = vmatprep.subr.bf16.mxu0 0
        %923 = vmatpush2.bf16.msra.mxu0 0
        %924 = vmatprep.subr.bf16.mxu0 0
        %925 = vmatpush2.bf16.msra.mxu0 0
        %926 = vmatprep.subr.bf16.mxu0 0
        %927 = vmatpush2.bf16.msra.mxu0 0
        %928 = vmatprep.subr.bf16.mxu0 0
        %929 = vmatpush2.bf16.msra.mxu0 0
        %930 = vmatprep.subr.bf16.mxu0 0
        %931 = vmatpush2.bf16.msra.mxu0 0
        %932 = vmatprep.subr.bf16.mxu0 0
        %933 = vmatpush2.bf16.msra.mxu0 0
        %934 = vmatprep.mubr.bf16.mxu0 0
        %935 = vmatmul.mubr.bf16.gmra.mxu0 %v897
        %v936 = vpop.f32.mrf.mxu0
        %v937 = vadd.f32 %v891, %v936
        %v938 = vpop.f32.mrf.mxu0
        %v939 = vpop.f32.mrf.mxu0
        %v940 = vpop.f32.mrf.mxu0
        %941 = vdwg.mxu0
        %942 = vrot.lane.b32.xlu0 %v481, 112
        %v943 = vpop.permute.xlu0 %942
        %944 = vrot.lane.b32.xlu0 %v552, 112
        %v945 = vpop.permute.xlu0 %944
        %v947 = vsel %vm624, %v943, 0
        %v950 = vsel %vm624, %v945, 0
        %952 = vmatprep.subr.bf16.mxu0 0
        %953 = vmatpush1.bf16.xpose.msra.mxu0 0
        %954 = vmatprep.subr.bf16.mxu0 0
        %955 = vmatpush1.bf16.xpose.msra.mxu0 0
        %956 = vmatprep.subr.bf16.mxu0 0
        %957 = vmatpush1.bf16.xpose.msra.mxu0 0
        %958 = vmatprep.subr.bf16.mxu0 0
        %959 = vmatpush1.bf16.xpose.msra.mxu0 0
        %960 = vmatprep.subr.bf16.mxu0 0
        %961 = vmatpush1.bf16.xpose.msra.mxu0 0
        %962 = vmatprep.subr.bf16.mxu0 0
        %963 = vmatpush1.bf16.xpose.msra.mxu0 0
        %964 = vmatprep.subr.bf16.mxu0 0
        %965 = vmatpush1.bf16.xpose.msra.mxu0 0
        %966 = vmatprep.subr.bf16.mxu0 0
        %967 = vmatpush1.bf16.xpose.msra.mxu0 %v950
        %968 = vmatprep.subr.bf16.mxu0 0
        %969 = vmatpush2.bf16.xpose.msra.mxu0 0
        %970 = vmatprep.subr.bf16.mxu0 0
        %971 = vmatpush2.bf16.xpose.msra.mxu0 0
        %972 = vmatprep.subr.bf16.mxu0 0
        %973 = vmatpush2.bf16.xpose.msra.mxu0 0
        %974 = vmatprep.subr.bf16.mxu0 0
        %975 = vmatpush2.bf16.xpose.msra.mxu0 0
        %976 = vmatprep.subr.bf16.mxu0 0
        %977 = vmatpush2.bf16.xpose.msra.mxu0 0
        %978 = vmatprep.subr.bf16.mxu0 0
        %979 = vmatpush2.bf16.xpose.msra.mxu0 0
        %980 = vmatprep.subr.bf16.mxu0 0
        %981 = vmatpush2.bf16.xpose.msra.mxu0 0
        %982 = vmatprep.subr.bf16.mxu0 0
        %983 = vmatpush2.bf16.xpose.msra.mxu0 0
        %984 = vmatprep.mubr.bf16.mxu0 0
        %985 = vmatmul.mubr.bf16.gmra.mxu0 %v947
        %v986 = vpop.f32.mrf.mxu0
        %v987 = vadd.f32 0.0, %v986
        %v988 = vpop.f32.mrf.mxu0
        %v989 = vpop.f32.mrf.mxu0
        %v990 = vpop.f32.mrf.mxu0
        %991 = vdwg.mxu0
        %v992 = vsel %vm624, %v987, -inf
        %993 = vmax.xlane.f32.xlu0 %v992
        %v994 = vpop.xlane.xlu0 %993
        %v995 = vsub.f32 %v987, %v994
        %v996 = vmul.f32 %v995, 1.442695
        %v997 = vpow.pop %v996
        %v998 = vsel %vm624, %v997, 0.0
        %999 = vadd.xlane.f32.xlu0 %v998
        %v1000 = vpop.xlane.xlu0 %999
        %v1001 = vpack.c.bf16 %v997, %v997
        %1002 = vrot.lane.b32.xlu0 %v623, 112
        %v1003 = vpop.permute.xlu0 %1002
        %v1005 = vsel %vm624, %v1001, 0
        %v1008 = vsel %vm684, %v1003, 0
        %1010 = vmatprep.subr.bf16.mxu0 0
        %1011 = vmatpush1.bf16.msra.mxu0 0
        %1012 = vmatprep.subr.bf16.mxu0 0
        %1013 = vmatpush1.bf16.msra.mxu0 0
        %1014 = vmatprep.subr.bf16.mxu0 0
        %1015 = vmatpush1.bf16.msra.mxu0 0
        %1016 = vmatprep.subr.bf16.mxu0 0
        %1017 = vmatpush1.bf16.msra.mxu0 0
        %1018 = vmatprep.subr.bf16.mxu0 0
        %1019 = vmatpush1.bf16.msra.mxu0 0
        %1020 = vmatprep.subr.bf16.mxu0 0
        %1021 = vmatpush1.bf16.msra.mxu0 0
        %1022 = vmatprep.subr.bf16.mxu0 0
        %1023 = vmatpush1.bf16.msra.mxu0 0
        %1024 = vmatprep.subr.bf16.mxu0 0
        %1025 = vmatpush1.bf16.msra.mxu0 %v1008
        %1026 = vmatprep.subr.bf16.mxu0 0
        %1027 = vmatpush2.bf16.msra.mxu0 0
        %1028 = vmatprep.subr.bf16.mxu0 0
        %1029 = vmatpush2.bf16.msra.mxu0 0
        %1030 = vmatprep.subr.bf16.mxu0 0
        %1031 = vmatpush2.bf16.msra.mxu0 0
        %1032 = vmatprep.subr.bf16.mxu0 0
        %1033 = vmatpush2.bf16.msra.mxu0 0
        %1034 = vmatprep.subr.bf16.mxu0 0
        %1035 = vmatpush2.bf16.msra.mxu0 0
        %1036 = vmatprep.subr.bf16.mxu0 0
        %1037 = vmatpush2.bf16.msra.mxu0 0
        %1038 = vmatprep.subr.bf16.mxu0 0
        %1039 = vmatpush2.bf16.msra.mxu0 0
        %1040 = vmatprep.subr.bf16.mxu0 0
        %1041 = vmatpush2.bf16.msra.mxu0 0
        %1042 = vmatprep.mubr.bf16.mxu0 0
        %1043 = vmatmul.mubr.bf16.gmra.mxu0 %v1005
        %v1044 = vpop.f32.mrf.mxu0
        %v1045 = vadd.f32 0.0, %v1044
        %v1046 = vpop.f32.mrf.mxu0
        %v1047 = vpop.f32.mrf.mxu0
        %v1048 = vpop.f32.mrf.mxu0
        %1049 = vdwg.mxu0
        %v1050 = vrcp.pop %v1000
        %v1051 = vmul.f32 1.0, %v1050
        %v1052 = vmul.f32 %v1045, %v1051
        %v1053 = vpack.c.bf16 %v1052, %v1052
        %s1054 = scalar_lea.vmem [#allocation10], 8
        %v1055 = vld [vmem:[%s1054] sm:$0xf]
        %v1057 = vsel %vm624, %v1053, 0
        %v1060 = vsel %vm684, %v1055, 0
        %1062 = vmatprep.subr.bf16.mxu0 0
        %1063 = vmatpush1.bf16.msra.mxu0 0
        %1064 = vmatprep.subr.bf16.mxu0 0
        %1065 = vmatpush1.bf16.msra.mxu0 0
        %1066 = vmatprep.subr.bf16.mxu0 0
        %1067 = vmatpush1.bf16.msra.mxu0 0
        %1068 = vmatprep.subr.bf16.mxu0 0
        %1069 = vmatpush1.bf16.msra.mxu0 0
        %1070 = vmatprep.subr.bf16.mxu0 0
        %1071 = vmatpush1.bf16.msra.mxu0 0
        %1072 = vmatprep.subr.bf16.mxu0 0
        %1073 = vmatpush1.bf16.msra.mxu0 0
        %1074 = vmatprep.subr.bf16.mxu0 0
        %1075 = vmatpush1.bf16.msra.mxu0 0
        %1076 = vmatprep.subr.bf16.mxu0 0
        %1077 = vmatpush1.bf16.msra.mxu0 %v1060
        %1078 = vmatprep.subr.bf16.mxu0 0
        %1079 = vmatpush2.bf16.msra.mxu0 0
        %1080 = vmatprep.subr.bf16.mxu0 0
        %1081 = vmatpush2.bf16.msra.mxu0 0
        %1082 = vmatprep.subr.bf16.mxu0 0
        %1083 = vmatpush2.bf16.msra.mxu0 0
        %1084 = vmatprep.subr.bf16.mxu0 0
        %1085 = vmatpush2.bf16.msra.mxu0 0
        %1086 = vmatprep.subr.bf16.mxu0 0
        %1087 = vmatpush2.bf16.msra.mxu0 0
        %1088 = vmatprep.subr.bf16.mxu0 0
        %1089 = vmatpush2.bf16.msra.mxu0 0
        %1090 = vmatprep.subr.bf16.mxu0 0
        %1091 = vmatpush2.bf16.msra.mxu0 0
        %1092 = vmatprep.subr.bf16.mxu0 0
        %1093 = vmatpush2.bf16.msra.mxu0 0
        %1094 = vmatprep.mubr.bf16.mxu0 0
        %1095 = vmatmul.mubr.bf16.gmra.mxu0 %v1057
        %v1096 = vpop.f32.mrf.mxu0
        %v1097 = vadd.f32 0.0, %v1096
        %v1098 = vpop.f32.mrf.mxu0
        %v1099 = vpop.f32.mrf.mxu0
        %v1100 = vpop.f32.mrf.mxu0
        %1101 = vdwg.mxu0
        %v1102 = vadd.f32 %v937, %v1097
        %1103 = vrot.lane.b32.xlu0 %v481, 104
        %v1104 = vpop.permute.xlu0 %1103
        %1105 = vrot.lane.b32.xlu0 %v552, 104
        %v1106 = vpop.permute.xlu0 %1105
        %v1108 = vsel %vm624, %v1104, 0
        %v1111 = vsel %vm624, %v1106, 0
        %1113 = vmatprep.subr.bf16.mxu0 0
        %1114 = vmatpush1.bf16.xpose.msra.mxu0 0
        %1115 = vmatprep.subr.bf16.mxu0 0
        %1116 = vmatpush1.bf16.xpose.msra.mxu0 0
        %1117 = vmatprep.subr.bf16.mxu0 0
        %1118 = vmatpush1.bf16.xpose.msra.mxu0 0
        %1119 = vmatprep.subr.bf16.mxu0 0
        %1120 = vmatpush1.bf16.xpose.msra.mxu0 0
        %1121 = vmatprep.subr.bf16.mxu0 0
        %1122 = vmatpush1.bf16.xpose.msra.mxu0 0
        %1123 = vmatprep.subr.bf16.mxu0 0
        %1124 = vmatpush1.bf16.xpose.msra.mxu0 0
        %1125 = vmatprep.subr.bf16.mxu0 0
        %1126 = vmatpush1.bf16.xpose.msra.mxu0 0
        %1127 = vmatprep.subr.bf16.mxu0 0
        %1128 = vmatpush1.bf16.xpose.msra.mxu0 %v1111
        %1129 = vmatprep.subr.bf16.mxu0 0
        %1130 = vmatpush2.bf16.xpose.msra.mxu0 0
        %1131 = vmatprep.subr.bf16.mxu0 0
        %1132 = vmatpush2.bf16.xpose.msra.mxu0 0
        %1133 = vmatprep.subr.bf16.mxu0 0
        %1134 = vmatpush2.bf16.xpose.msra.mxu0 0
        %1135 = vmatprep.subr.bf16.mxu0 0
        %1136 = vmatpush2.bf16.xpose.msra.mxu0 0
        %1137 = vmatprep.subr.bf16.mxu0 0
        %1138 = vmatpush2.bf16.xpose.msra.mxu0 0
        %1139 = vmatprep.subr.bf16.mxu0 0
        %1140 = vmatpush2.bf16.xpose.msra.mxu0 0
        %1141 = vmatprep.subr.bf16.mxu0 0
        %1142 = vmatpush2.bf16.xpose.msra.mxu0 0
        %1143 = vmatprep.subr.bf16.mxu0 0
        %1144 = vmatpush2.bf16.xpose.msra.mxu0 0
        %1145 = vmatprep.mubr.bf16.mxu0 0
        %1146 = vmatmul.mubr.bf16.gmra.mxu0 %v1108
        %v1147 = vpop.f32.mrf.mxu0
        %v1148 = vadd.f32 0.0, %v1147
        %v1149 = vpop.f32.mrf.mxu0
        %v1150 = vpop.f32.mrf.mxu0
        %v1151 = vpop.f32.mrf.mxu0
        %1152 = vdwg.mxu0
        %v1153 = vsel %vm624, %v1148, -inf
        %1154 = vmax.xlane.f32.xlu0 %v1153
        %v1155 = vpop.xlane.xlu0 %1154
        %v1156 = vsub.f32 %v1148, %v1155
        %v1157 = vmul.f32 %v1156, 1.442695
        %v1158 = vpow.pop %v1157
        %v1159 = vsel %vm624, %v1158, 0.0
        %1160 = vadd.xlane.f32.xlu0 %v1159
        %v1161 = vpop.xlane.xlu0 %1160
        %v1162 = vpack.c.bf16 %v1158, %v1158
        %1163 = vrot.lane.b32.xlu0 %v623, 104
        %v1164 = vpop.permute.xlu0 %1163
        %v1166 = vsel %vm624, %v1162, 0
        %v1169 = vsel %vm684, %v1164, 0
        %1171 = vmatprep.subr.bf16.mxu0 0
        %1172 = vmatpush1.bf16.msra.mxu0 0
        %1173 = vmatprep.subr.bf16.mxu0 0
        %1174 = vmatpush1.bf16.msra.mxu0 0
        %1175 = vmatprep.subr.bf16.mxu0 0
        %1176 = vmatpush1.bf16.msra.mxu0 0
        %1177 = vmatprep.subr.bf16.mxu0 0
        %1178 = vmatpush1.bf16.msra.mxu0 0
        %1179 = vmatprep.subr.bf16.mxu0 0
        %1180 = vmatpush1.bf16.msra.mxu0 0
        %1181 = vmatprep.subr.bf16.mxu0 0
        %1182 = vmatpush1.bf16.msra.mxu0 0
        %1183 = vmatprep.subr.bf16.mxu0 0
        %1184 = vmatpush1.bf16.msra.mxu0 0
        %1185 = vmatprep.subr.bf16.mxu0 0
        %1186 = vmatpush1.bf16.msra.mxu0 %v1169
        %1187 = vmatprep.subr.bf16.mxu0 0
        %1188 = vmatpush2.bf16.msra.mxu0 0
        %1189 = vmatprep.subr.bf16.mxu0 0
        %1190 = vmatpush2.bf16.msra.mxu0 0
        %1191 = vmatprep.subr.bf16.mxu0 0
        %1192 = vmatpush2.bf16.msra.mxu0 0
        %1193 = vmatprep.subr.bf16.mxu0 0
        %1194 = vmatpush2.bf16.msra.mxu0 0
        %1195 = vmatprep.subr.bf16.mxu0 0
        %1196 = vmatpush2.bf16.msra.mxu0 0
        %1197 = vmatprep.subr.bf16.mxu0 0
        %1198 = vmatpush2.bf16.msra.mxu0 0
        %1199 = vmatprep.subr.bf16.mxu0 0
        %1200 = vmatpush2.bf16.msra.mxu0 0
        %1201 = vmatprep.subr.bf16.mxu0 0
        %1202 = vmatpush2.bf16.msra.mxu0 0
        %1203 = vmatprep.mubr.bf16.mxu0 0
        %1204 = vmatmul.mubr.bf16.gmra.mxu0 %v1166
        %v1205 = vpop.f32.mrf.mxu0
        %v1206 = vadd.f32 0.0, %v1205
        %v1207 = vpop.f32.mrf.mxu0
        %v1208 = vpop.f32.mrf.mxu0
        %v1209 = vpop.f32.mrf.mxu0
        %1210 = vdwg.mxu0
        %v1211 = vrcp.pop %v1161
        %v1212 = vmul.f32 1.0, %v1211
        %v1213 = vmul.f32 %v1206, %v1212
        %v1214 = vpack.c.bf16 %v1213, %v1213
        %s1215 = scalar_lea.vmem [#allocation10], 12
        %v1216 = vld [vmem:[%s1215] sm:$0xf]
        %v1218 = vsel %vm624, %v1214, 0
        %v1221 = vsel %vm684, %v1216, 0
        %1223 = vmatprep.subr.bf16.mxu0 0
        %1224 = vmatpush1.bf16.msra.mxu0 0
        %1225 = vmatprep.subr.bf16.mxu0 0
        %1226 = vmatpush1.bf16.msra.mxu0 0
        %1227 = vmatprep.subr.bf16.mxu0 0
        %1228 = vmatpush1.bf16.msra.mxu0 0
        %1229 = vmatprep.subr.bf16.mxu0 0
        %1230 = vmatpush1.bf16.msra.mxu0 0
        %1231 = vmatprep.subr.bf16.mxu0 0
        %1232 = vmatpush1.bf16.msra.mxu0 0
        %1233 = vmatprep.subr.bf16.mxu0 0
        %1234 = vmatpush1.bf16.msra.mxu0 0
        %1235 = vmatprep.subr.bf16.mxu0 0
        %1236 = vmatpush1.bf16.msra.mxu0 0
        %1237 = vmatprep.subr.bf16.mxu0 0
        %1238 = vmatpush1.bf16.msra.mxu0 %v1221
        %1239 = vmatprep.subr.bf16.mxu0 0
        %1240 = vmatpush2.bf16.msra.mxu0 0
        %1241 = vmatprep.subr.bf16.mxu0 0
        %1242 = vmatpush2.bf16.msra.mxu0 0
        %1243 = vmatprep.subr.bf16.mxu0 0
        %1244 = vmatpush2.bf16.msra.mxu0 0
        %1245 = vmatprep.subr.bf16.mxu0 0
        %1246 = vmatpush2.bf16.msra.mxu0 0
        %1247 = vmatprep.subr.bf16.mxu0 0
        %1248 = vmatpush2.bf16.msra.mxu0 0
        %1249 = vmatprep.subr.bf16.mxu0 0
        %1250 = vmatpush2.bf16.msra.mxu0 0
        %1251 = vmatprep.subr.bf16.mxu0 0
        %1252 = vmatpush2.bf16.msra.mxu0 0
        %1253 = vmatprep.subr.bf16.mxu0 0
        %1254 = vmatpush2.bf16.msra.mxu0 0
        %1255 = vmatprep.mubr.bf16.mxu0 0
        %1256 = vmatmul.mubr.bf16.gmra.mxu0 %v1218
        %v1257 = vpop.f32.mrf.mxu0
        %v1258 = vadd.f32 0.0, %v1257
        %v1259 = vpop.f32.mrf.mxu0
        %v1260 = vpop.f32.mrf.mxu0
        %v1261 = vpop.f32.mrf.mxu0
        %1262 = vdwg.mxu0
        %v1263 = vadd.f32 %v1102, %v1258
        %v1264 = vld [vmem:[%s6] sm:$0x1]
        %v1266 = vlaneseq
        %v1267 = vshrl.u32 %v1266, 7
        %v1268 = vsub.s32 0, %v1267
        %v1269 = vrot.slane %v1264, %v1268
        %v1271 = vadd.f32 %v1263, %v1269
        %1272 = vst.msk [vmem:[%s410] sm:$0xff] %vm437, %v1271
        %s1273 = sand.u32 %s214, 1
        %s1274 = scalar_lea.sflag [#allocation4], %s1273
        %s1275 = sand.u32 %s214, 1
        %s1276 = smul.addr %s1275, 8
        %s1277 = scalar_lea.vmem [#allocation11], %s1276
        // Predicated region
        $region69: #{tpu_custom_call.1} parent=47 // pred_check
          %p1278 = pneg %p224
        $region70: #{tpu_custom_call.1} parent=47 // pred_check_branch
          %1280 = sbr.rel (%p1278) target = $region72
        $region71: #{tpu_custom_call.1} parent=47 // pred_region
          %s1282 = ssub.s32 128, 128
          %1283 = vsyncadd %s1274, %s1282
          %s1284 = sadd.s32 %s33, %s32
          %s1285 = smul.addr %s1284, 128
          %s1286 = scalar_lea.hbm %s7, %s1285
          %s1288 = sshll.u32 %s1277, 4
          %s1289 = int_to_ptr.vmem [resolvable:$true] %s1288
          %1291 = dma.vmem_to_hbm [thread:$0]  %s1289, 128, %s1286, %s1274
        $region72: #{tpu_custom_call.1} parent=47 // pred_fallthru
          _
      $region48: #{tpu_custom_call.1} parent=5 // pred_fallthru
        _
      %p1292 = scmp.le.s32.totalorder 2, %s23
      // Predicated region
      $region73: #{tpu_custom_call.1} parent=5 // pred_check
        %p1293 = pneg %p1292
      $region74: #{tpu_custom_call.1} parent=5 // pred_check_branch
        %1295 = sbr.rel (%p1293) target = $region76
      $region75: #{tpu_custom_call.1} parent=5 // pred_region
        %s1296 = ssub.s32 %s23, 2
        // Predicated region
        $region77: #{tpu_custom_call.1} parent=75 // pred_check
          %p1297 = pneg %p230
        $region78: #{tpu_custom_call.1} parent=75 // pred_check_branch
          %1299 = sbr.rel (%p1297) target = $region80
        $region79: #{tpu_custom_call.1} parent=75 // pred_region
          %s1300 = sand.u32 %s215, 1
          %s1301 = scalar_lea.sflag [#allocation4], %s1300
          %s1302 = sand.u32 %s215, 1
          %s1303 = smul.addr %s1302, 8
          %s1304 = scalar_lea.vmem [#allocation11], %s1303
          %1305 = dma.done %s1301, 128
        $region80: #{tpu_custom_call.1} parent=75 // pred_fallthru
          _
      $region76: #{tpu_custom_call.1} parent=5 // pred_fallthru
        _
    $region6: #{tpu_custom_call.1} parent=1 // loop_footer
      %s27 = sadd.s32 1, %s23
    $region7: #{tpu_custom_call.1} parent=1 // loop_footer_branch
      %22 = sbr.rel target = $region3
    $region8: #{tpu_custom_call.1} parent=1 // loop_exit
      _
    %1306 = vsyncpa [#allocation3], 1
    %s1307 = scalar_lea.sflag [#allocation3], 1
    %1308 = vsyncpa %s1307, 1
    %1309 = vsyncpa [#allocation6], 1
    %s1310 = scalar_lea.sflag [#allocation6], 1
    %1311 = vsyncpa %s1310, 1
    %1312 = vsyncpa [#allocation9], 1
    %1313 = vsyncpa [#allocation4], 1
    %s1314 = scalar_lea.sflag [#allocation4], 1
    %1315 = vsyncpa %s1314, 1

// kernel: tpu_custom_call.1
$region0: #{tpu_custom_call.1}
  #allocation0 [shape = 'u32[]', space=smem, size = 0x4, offset = 0x4, fixed_abs, tag = 'smem constant byte address 0x4 - core index']
  #allocation1 [shape = 'u32[144,128]{1,0:T(1,128)}', space=vmem, size = 0x12000, scoped, tag = 'internal scratch']
  %s0 = inlined_call_operand.hbm [shape: f32[2,8,32], index: 0, kind: input, shape index: {}]
  %s1 = inlined_call_operand.hbm [shape: f32[2,8,32], index: 1, kind: input, shape index: {}]
  %s2 = inlined_call_operand.hbm [shape: f32[2,8,32], index: 2, kind: input, shape index: {}]
  %s3 = inlined_call_operand.hbm [shape: bf16[3,32,32], index: 3, kind: input, shape index: {}]
  %s4 = inlined_call_operand.vmem [shape: f32[3,1,32], index: 4, kind: input, shape index: {}]
  %s5 = inlined_call_operand.hbm [shape: bf16[4,8,32], index: 5, kind: input, shape index: {}]
  %s6 = inlined_call_operand.vmem [shape: f32[1,32], index: 6, kind: input, shape index: {}]
  %s7 = inlined_call_operand.hbm [shape: f32[2,8,32], index: 7, kind: output, shape index: {}]
  %s8 = sld [smem:[#allocation0]]
  $region81: #{tpu_custom_call.1} parent=0
    _
  %s10 = ssub.s32 1, %s8
  %s11 = scalar_select 0, %s10, %s8
  $region1: #{tpu_custom_call.1} parent=0
    #allocation2 [shape = 'u8[8192]{0}', space=vmem, size = 0x2000, scoped, tag = 'input window, operand 0']
    #allocation3 [shape = 's32[2]{0}', space=sflag, size = 0x8, scoped, tag = 'scoped memory for tpu_custom_call.1']
    #allocation4 [shape = 's32[2]{0}', space=sflag, size = 0x8, scoped, tag = 'scoped memory for tpu_custom_call.1']
    #allocation5 [shape = 'u8[8192]{0}', space=vmem, size = 0x2000, scoped, tag = 'input window, operand 1']
    #allocation6 [shape = 's32[2]{0}', space=sflag, size = 0x8, scoped, tag = 'scoped memory for tpu_custom_call.1']
    #allocation7 [shape = 'u8[8192]{0}', space=vmem, size = 0x2000, scoped, tag = 'input window, operand 2']
    #allocation8 [shape = 'u8[24576]{0}', space=vmem, size = 0x6000, scoped, tag = 'input window, operand 3, single buffered']
    #allocation9 [shape = 's32[1]{0}', space=sflag, size = 0x4, scoped, tag = 'scoped memory for tpu_custom_call.1']
    #allocation10 [shape = 'u8[8192]{0}', space=vmem, size = 0x2000, scoped, tag = 'input window, operand 5, single buffered']
    #allocation11 [shape = 'u8[8192]{0}', space=vmem, size = 0x2000, scoped, tag = 'output window, operand 0']
    %12 = vsyncpa [#allocation3], 0
    %s13 = scalar_lea.sflag [#allocation3], 1
    %14 = vsyncpa %s13, 0
    %15 = vsyncpa [#allocation6], 0
    %s16 = scalar_lea.sflag [#allocation6], 1
    %17 = vsyncpa %s16, 0
    %18 = vsyncpa [#allocation9], 0
    %19 = vsyncpa [#allocation4], 0
    %s20 = scalar_lea.sflag [#allocation4], 1
    %21 = vsyncpa %s20, 0
    loop: start=0, step=1, limit=4
    $region2: #{tpu_custom_call.1} parent=1 // loop_pre_header
      _
    $region3: #{tpu_custom_call.1} parent=1 // loop_header
      %s23 = sphi 0, %s27
      %p24 = scmp.ge.s32.totalorder %s23, 4
      %s30 = sphi 0, %s42
      %s31 = sphi 0, %s38
      %s32 = sphi 0, %s30
      %s33 = sphi 0, %s31
      %s34 = sphi 0, %s32
      %s35 = sphi 0, %s33
      %s47 = sphi 0, %s49
      %s50 = sphi 0, %s47
      %s51 = sphi 0, %s50
      %s67 = sphi 0, %s51
      %s73 = sphi 0, %s75
      %s76 = sphi 0, %s73
      %s77 = sphi 0, %s76
      %s93 = sphi 0, %s77
      %s99 = sphi 0, %s101
      %s102 = sphi 0, %s99
      %s103 = sphi 0, %s102
      %s119 = sphi 0, %s103
      %s123 = sphi 0, %s123
      %s125 = sphi 0, %s123
      %s126 = sphi 0, %s125
      %s140 = sphi 0, %s126
      %s144 = sphi 0, %s144
      %s146 = sphi 0, %s144
      %s147 = sphi 0, %s146
      %s161 = sphi 0, %s147
      %s165 = sphi 0, %s165
      %s167 = sphi 0, %s165
      %s168 = sphi 0, %s167
      %s182 = sphi 0, %s168
      %s186 = sphi 0, %s186
      %s188 = sphi 0, %s186
      %s189 = sphi 0, %s188
      %s203 = sphi 0, %s189
      %s211 = sphi 0, %s213
      %s214 = sphi 0, %s211
      %s215 = sphi 0, %s214
      %s231 = sphi 0, %s215
    $region4: #{tpu_custom_call.1} parent=1 // loop_header_branch
      %26 = sbr.rel (%p24) target = $region8
    $region5: #{tpu_custom_call.1} parent=1 // loop_body
      %s28 = ssub.s32 %s23, 1
      %s29 = ssub.s32 %s23, 2
      %s36 = sadd.s32 1, %s31
      %p37 = scmp.ge.s32.totalorder %s36, 1
      %s38 = scalar_select %p37, 0, %s36
      %s39 = sadd.s32 1, %s30
      %s40 = scalar_select %p37, %s39, %s30
      %p41 = scmp.ge.s32.totalorder %s40, 2
      %s42 = scalar_select %p41, 0, %s40
      %s43 = ssub.s32 %s30, %s42
      %s44 = ssub.s32 %s31, %s38
      %s45 = sor.u32 %s43, %s44
      %p46 = scmp.eq.s32.totalorder %s45, 0
      %s48 = sadd.s32 %s47, 1
      %s49 = scalar_select %p46, %s47, %s48
      %p52 = pneg %p46
      %p53 = scmp.eq.s32.totalorder %s23, 1
      %p54 = por %p52, %p53
      %p55 = scmp.ne.s32.totalorder %s47, %s50
      %p56 = scmp.eq.s32.totalorder %s23, 0
      %p57 = por %p55, %p56
      %p58 = scmp.ne.s32.totalorder %s47, %s50
      %p59 = scmp.eq.s32.totalorder %s28, 1
      %p60 = por %p58, %p59
      %p61 = scmp.ne.s32.totalorder %s50, %s51
      %p62 = scmp.eq.s32.totalorder %s28, 0
      %p63 = por %p61, %p62
      %p64 = scmp.ne.s32.totalorder %s50, %s51
      %p65 = scmp.eq.s32.totalorder %s29, 1
      %p66 = por %p64, %p65
      %p68 = scmp.ne.s32.totalorder %s51, %s67
      %p69 = scmp.eq.s32.totalorder %s29, 0
      %p70 = por %p68, %p69
      %s71 = ssub.s32 %s30, %s42
      %p72 = scmp.eq.s32.totalorder %s71, 0
      %s74 = sadd.s32 %s73, 1
      %s75 = scalar_select %p72, %s73, %s74
      %p78 = pneg %p72
      %p79 = scmp.eq.s32.totalorder %s23, 1
      %p80 = por %p78, %p79
      %p81 = scmp.ne.s32.totalorder %s73, %s76
      %p82 = scmp.eq.s32.totalorder %s23, 0
      %p83 = por %p81, %p82
      %p84 = scmp.ne.s32.totalorder %s73, %s76
      %p85 = scmp.eq.s32.totalorder %s28, 1
      %p86 = por %p84, %p85
      %p87 = scmp.ne.s32.totalorder %s76, %s77
      %p88 = scmp.eq.s32.totalorder %s28, 0
      %p89 = por %p87, %p88
      %p90 = scmp.ne.s32.totalorder %s76, %s77
      %p91 = scmp.eq.s32.totalorder %s29, 1
      %p92 = por %p90, %p91
      %p94 = scmp.ne.s32.totalorder %s77, %s93
      %p95 = scmp.eq.s32.totalorder %s29, 0
      %p96 = por %p94, %p95
      %s97 = ssub.s32 %s30, %s42
      %p98 = scmp.eq.s32.totalorder %s97, 0
      %s100 = sadd.s32 %s99, 1
      %s101 = scalar_select %p98, %s99, %s100
      %p104 = pneg %p98
      %p105 = scmp.eq.s32.totalorder %s23, 1
      %p106 = por %p104, %p105
      %p107 = scmp.ne.s32.totalorder %s99, %s102
      %p108 = scmp.eq.s32.totalorder %s23, 0
      %p109 = por %p107, %p108
      %p110 = scmp.ne.s32.totalorder %s99, %s102
      %p111 = scmp.eq.s32.totalorder %s28, 1
      %p112 = por %p110, %p111
      %p113 = scmp.ne.s32.totalorder %s102, %s103
      %p114 = scmp.eq.s32.totalorder %s28, 0
      %p115 = por %p113, %p114
      %p116 = scmp.ne.s32.totalorder %s102, %s103
      %p117 = scmp.eq.s32.totalorder %s29, 1
      %p118 = por %p116, %p117
      %p120 = scmp.ne.s32.totalorder %s103, %s119
      %p121 = scmp.eq.s32.totalorder %s29, 0
      %p122 = por %p120, %p121
      %s124 = sadd.s32 %s123, 1
      %p127 = scmp.eq.s32.totalorder %s23, 1
      %p128 = scmp.ne.s32.totalorder %s123, %s125
      %p129 = scmp.eq.s32.totalorder %s23, 0
      %p130 = por %p128, %p129
      %p131 = scmp.ne.s32.totalorder %s123, %s125
      %p132 = scmp.eq.s32.totalorder %s28, 1
      %p133 = por %p131, %p132
      %p134 = scmp.ne.s32.totalorder %s125, %s126
      %p135 = scmp.eq.s32.totalorder %s28, 0
      %p136 = por %p134, %p135
      %p137 = scmp.ne.s32.totalorder %s125, %s126
      %p138 = scmp.eq.s32.totalorder %s29, 1
      %p139 = por %p137, %p138
      %p141 = scmp.ne.s32.totalorder %s126, %s140
      %p142 = scmp.eq.s32.totalorder %s29, 0
      %p143 = por %p141, %p142
      %s145 = sadd.s32 %s144, 1
      %p148 = scmp.eq.s32.totalorder %s23, 1
      %p149 = scmp.ne.s32.totalorder %s144, %s146
      %p150 = scmp.eq.s32.totalorder %s23, 0
      %p151 = por %p149, %p150
      %p152 = scmp.ne.s32.totalorder %s144, %s146
      %p153 = scmp.eq.s32.totalorder %s28, 1
      %p154 = por %p152, %p153
      %p155 = scmp.ne.s32.totalorder %s146, %s147
      %p156 = scmp.eq.s32.totalorder %s28, 0
      %p157 = por %p155, %p156
      %p158 = scmp.ne.s32.totalorder %s146, %s147
      %p159 = scmp.eq.s32.totalorder %s29, 1
      %p160 = por %p158, %p159
      %p162 = scmp.ne.s32.totalorder %s147, %s161
      %p163 = scmp.eq.s32.totalorder %s29, 0
      %p164 = por %p162, %p163
      %s166 = sadd.s32 %s165, 1
      %p169 = scmp.eq.s32.totalorder %s23, 1
      %p170 = scmp.ne.s32.totalorder %s165, %s167
      %p171 = scmp.eq.s32.totalorder %s23, 0
      %p172 = por %p170, %p171
      %p173 = scmp.ne.s32.totalorder %s165, %s167
      %p174 = scmp.eq.s32.totalorder %s28, 1
      %p175 = por %p173, %p174
      %p176 = scmp.ne.s32.totalorder %s167, %s168
      %p177 = scmp.eq.s32.totalorder %s28, 0
      %p178 = por %p176, %p177
      %p179 = scmp.ne.s32.totalorder %s167, %s168
      %p180 = scmp.eq.s32.totalorder %s29, 1
      %p181 = por %p179, %p180
      %p183 = scmp.ne.s32.totalorder %s168, %s182
      %p184 = scmp.eq.s32.totalorder %s29, 0
      %p185 = por %p183, %p184
      %s187 = sadd.s32 %s186, 1
      %p190 = scmp.eq.s32.totalorder %s23, 1
      %p191 = scmp.ne.s32.totalorder %s186, %s188
      %p192 = scmp.eq.s32.totalorder %s23, 0
      %p193 = por %p191, %p192
      %p194 = scmp.ne.s32.totalorder %s186, %s188
      %p195 = scmp.eq.s32.totalorder %s28, 1
      %p196 = por %p194, %p195
      %p197 = scmp.ne.s32.totalorder %s188, %s189
      %p198 = scmp.eq.s32.totalorder %s28, 0
      %p199 = por %p197, %p198
      %p200 = scmp.ne.s32.totalorder %s188, %s189
      %p201 = scmp.eq.s32.totalorder %s29, 1
      %p202 = por %p200, %p201
      %p204 = scmp.ne.s32.totalorder %s189, %s203
      %p205 = scmp.eq.s32.totalorder %s29, 0
      %p206 = por %p204, %p205
      %s207 = ssub.s32 %s30, %s42
      %s208 = ssub.s32 %s31, %s38
      %s209 = sor.u32 %s207, %s208
      %p210 = scmp.eq.s32.totalorder %s209, 0
      %s212 = sadd.s32 %s211, 1
      %s213 = scalar_select %p210, %s211, %s212
      %p216 = pneg %p210
      %p217 = scmp.eq.s32.totalorder %s23, 1
      %p218 = por %p216, %p217
      %p219 = scmp.ne.s32.totalorder %s211, %s214
      %p220 = scmp.eq.s32.totalorder %s23, 0
      %p221 = por %p219, %p220
      %p222 = scmp.ne.s32.totalorder %s211, %s214
      %p223 = scmp.eq.s32.totalorder %s28, 1
      %p224 = por %p222, %p223
      %p225 = scmp.ne.s32.totalorder %s214, %s215
      %p226 = scmp.eq.s32.totalorder %s28, 0
      %p227 = por %p225, %p226
      %p228 = scmp.ne.s32.totalorder %s214, %s215
      %p229 = scmp.eq.s32.totalorder %s29, 1
      %p230 = por %p228, %p229
      %p232 = scmp.ne.s32.totalorder %s215, %s231
      %p233 = scmp.eq.s32.totalorder %s29, 0
      %p234 = por %p232, %p233
      %p235 = scmp.le.s32.totalorder 1, %s23
      %p236 = scmp.lt.s32.totalorder %s23, 3
      %p237 = pnand %p235, %p236
      %p238 = pneg %p237
      // Predicated region
      $region9: #{tpu_custom_call.1} parent=5 // pred_check
        _
      $region10: #{tpu_custom_call.1} parent=5 // pred_check_branch
        %240 = sbr.rel (%p237) target = $region12
      $region11: #{tpu_custom_call.1} parent=5 // pred_region
        %s241 = ssub.s32 %s23, 1
        // Predicated region
        $region13: #{tpu_custom_call.1} parent=11 // pred_check
          %p242 = pneg %p136
        $region14: #{tpu_custom_call.1} parent=11 // pred_check_branch
          %244 = sbr.rel (%p242) target = $region16
        $region15: #{tpu_custom_call.1} parent=11 // pred_region
          %s246 = ssub.s32 768, 768
          %247 = vsyncadd [#allocation9], %s246
          %s248 = sshll.u32 [#allocation8], 4
          %s249 = int_to_ptr.vmem [resolvable:$true] %s248
          %254 = dma.hbm_to_vmem [thread:$0]  %s3, 768, %s249, [#allocation9], 64, 64, 4
        $region16: #{tpu_custom_call.1} parent=11 // pred_fallthru
          _
        // Predicated region
        $region17: #{tpu_custom_call.1} parent=11 // pred_check
          %p255 = pneg %p157
        $region18: #{tpu_custom_call.1} parent=11 // pred_check_branch
          %257 = sbr.rel (%p255) target = $region20
        $region19: #{tpu_custom_call.1} parent=11 // pred_region
          _
        $region20: #{tpu_custom_call.1} parent=11 // pred_fallthru
          _
        // Predicated region
        $region21: #{tpu_custom_call.1} parent=11 // pred_check
          %p258 = pneg %p178
        $region22: #{tpu_custom_call.1} parent=11 // pred_check_branch
          %260 = sbr.rel (%p258) target = $region24
        $region23: #{tpu_custom_call.1} parent=11 // pred_region
          %s262 = ssub.s32 256, 256
          %263 = vsyncadd [#allocation9], %s262
          %s264 = sshll.u32 [#allocation10], 4
          %s265 = int_to_ptr.vmem [resolvable:$true] %s264
          %270 = dma.hbm_to_vmem [thread:$0]  %s5, 256, %s265, [#allocation9], 64, 64, 4
        $region24: #{tpu_custom_call.1} parent=11 // pred_fallthru
          _
        // Predicated region
        $region25: #{tpu_custom_call.1} parent=11 // pred_check
          %p271 = pneg %p199
        $region26: #{tpu_custom_call.1} parent=11 // pred_check_branch
          %273 = sbr.rel (%p271) target = $region28
        $region27: #{tpu_custom_call.1} parent=11 // pred_region
          _
        $region28: #{tpu_custom_call.1} parent=11 // pred_fallthru
          _
      $region12: #{tpu_custom_call.1} parent=5 // pred_fallthru
        _
      %p274 = scmp.lt.s32.totalorder %s23, 2
      // Predicated region
      $region29: #{tpu_custom_call.1} parent=5 // pred_check
        %p275 = pneg %p274
      $region30: #{tpu_custom_call.1} parent=5 // pred_check_branch
        %277 = sbr.rel (%p275) target = $region32
      $region31: #{tpu_custom_call.1} parent=5 // pred_region
        // Predicated region
        $region33: #{tpu_custom_call.1} parent=31 // pred_check
          %p278 = pneg %p57
        $region34: #{tpu_custom_call.1} parent=31 // pred_check_branch
          %280 = sbr.rel (%p278) target = $region36
        $region35: #{tpu_custom_call.1} parent=31 // pred_region
          %s281 = sand.u32 %s47, 1
          %s282 = scalar_lea.sflag [#allocation3], %s281
          %s283 = sand.u32 %s47, 1
          %s284 = smul.addr %s283, 8
          %s285 = scalar_lea.vmem [#allocation2], %s284
          %s287 = ssub.s32 128, 128
          %288 = vsyncadd %s282, %s287
          %s289 = sadd.s32 %s31, %s30
          %s290 = smul.addr %s289, 128
          %s291 = scalar_lea.hbm %s0, %s290
          %s293 = sshll.u32 %s285, 4
          %s294 = int_to_ptr.vmem [resolvable:$true] %s293
          %296 = dma.hbm_to_vmem [thread:$0]  %s291, 128, %s294, %s282
        $region36: #{tpu_custom_call.1} parent=31 // pred_fallthru
          _
        // Predicated region
        $region37: #{tpu_custom_call.1} parent=31 // pred_check
          %p297 = pneg %p83
        $region38: #{tpu_custom_call.1} parent=31 // pred_check_branch
          %299 = sbr.rel (%p297) target = $region40
        $region39: #{tpu_custom_call.1} parent=31 // pred_region
          %s300 = sand.u32 %s23, 1
          %s301 = scalar_lea.sflag [#allocation6], %s300
          %s302 = sand.u32 %s73, 1
          %s303 = smul.addr %s302, 8
          %s304 = scalar_lea.vmem [#allocation5], %s303
          %s306 = ssub.s32 128, 128
          %307 = vsyncadd %s301, %s306
          %s308 = smul.addr %s30, 128
          %s309 = scalar_lea.hbm %s1, %s308
          %s311 = sshll.u32 %s304, 4
          %s312 = int_to_ptr.vmem [resolvable:$true] %s311
          %314 = dma.hbm_to_vmem [thread:$0]  %s309, 128, %s312, %s301
        $region40: #{tpu_custom_call.1} parent=31 // pred_fallthru
          _
        // Predicated region
        $region41: #{tpu_custom_call.1} parent=31 // pred_check
          %p315 = pneg %p109
        $region42: #{tpu_custom_call.1} parent=31 // pred_check_branch
          %317 = sbr.rel (%p315) target = $region44
        $region43: #{tpu_custom_call.1} parent=31 // pred_region
          %s318 = sand.u32 %s23, 1
          %s319 = scalar_lea.sflag [#allocation6], %s318
          %s320 = sand.u32 %s99, 1
          %s321 = smul.addr %s320, 8
          %s322 = scalar_lea.vmem [#allocation7], %s321
          %s324 = ssub.s32 128, 128
          %325 = vsyncadd %s319, %s324
          %s326 = smul.addr %s30, 128
          %s327 = scalar_lea.hbm %s2, %s326
          %s329 = sshll.u32 %s322, 4
          %s330 = int_to_ptr.vmem [resolvable:$true] %s329
          %332 = dma.hbm_to_vmem [thread:$0]  %s327, 128, %s330, %s319
        $region44: #{tpu_custom_call.1} parent=31 // pred_fallthru
          _
      $region32: #{tpu_custom_call.1} parent=5 // pred_fallthru
        _
      %p333 = scmp.le.s32.totalorder 1, %s23
      %p334 = scmp.lt.s32.totalorder %s23, 3
      %p335 = pnand %p333, %p334
      %p336 = pneg %p335
      // Predicated region
      $region45: #{tpu_custom_call.1} parent=5 // pred_check
        _
      $region46: #{tpu_custom_call.1} parent=5 // pred_check_branch
        %338 = sbr.rel (%p335) target = $region48
      $region47: #{tpu_custom_call.1} parent=5 // pred_region
        %s339 = ssub.s32 %s23, 1
        %s340 = sand.u32 %s50, 1
        %s341 = scalar_lea.sflag [#allocation3], %s340
        %s342 = sand.u32 %s50, 1
        %s343 = smul.addr %s342, 8
        %s344 = scalar_lea.vmem [#allocation2], %s343
        // Predicated region
        $region49: #{tpu_custom_call.1} parent=47 // pred_check
          %p345 = pneg %p63
        $region50: #{tpu_custom_call.1} parent=47 // pred_check_branch
          %347 = sbr.rel (%p345) target = $region52
        $region51: #{tpu_custom_call.1} parent=47 // pred_region
          %348 = dma.done %s341, 128
        $region52: #{tpu_custom_call.1} parent=47 // pred_fallthru
          _
        %s349 = sand.u32 %s28, 1
        %s350 = scalar_lea.sflag [#allocation6], %s349
        %s351 = sand.u32 %s76, 1
        %s352 = smul.addr %s351, 8
        %s353 = scalar_lea.vmem [#allocation5], %s352
        // Predicated region
        $region53: #{tpu_custom_call.1} parent=47 // pred_check
          %p354 = pneg %p89
        $region54: #{tpu_custom_call.1} parent=47 // pred_check_branch
          %356 = sbr.rel (%p354) target = $region56
        $region55: #{tpu_custom_call.1} parent=47 // pred_region
          %357 = dma.done %s350, 128
        $region56: #{tpu_custom_call.1} parent=47 // pred_fallthru
          _
        %s358 = sand.u32 %s28, 1
        %s359 = scalar_lea.sflag [#allocation6], %s358
        %s360 = sand.u32 %s102, 1
        %s361 = smul.addr %s360, 8
        %s362 = scalar_lea.vmem [#allocation7], %s361
        // Predicated region
        $region57: #{tpu_custom_call.1} parent=47 // pred_check
          %p363 = pneg %p115
        $region58: #{tpu_custom_call.1} parent=47 // pred_check_branch
          %365 = sbr.rel (%p363) target = $region60
        $region59: #{tpu_custom_call.1} parent=47 // pred_region
          %366 = dma.done %s359, 128
        $region60: #{tpu_custom_call.1} parent=47 // pred_fallthru
          _
        // Predicated region
        $region61: #{tpu_custom_call.1} parent=47 // pred_check
          %p367 = pneg %p136
        $region62: #{tpu_custom_call.1} parent=47 // pred_check_branch
          %369 = sbr.rel (%p367) target = $region64
        $region63: #{tpu_custom_call.1} parent=47 // pred_region
          %370 = dma.done [#allocation9], 768
        $region64: #{tpu_custom_call.1} parent=47 // pred_fallthru
          _
        // Predicated region
        $region65: #{tpu_custom_call.1} parent=47 // pred_check
          %p371 = pneg %p178
        $region66: #{tpu_custom_call.1} parent=47 // pred_check_branch
          %373 = sbr.rel (%p371) target = $region68
        $region67: #{tpu_custom_call.1} parent=47 // pred_region
          %374 = dma.done [#allocation9], 256
        $region68: #{tpu_custom_call.1} parent=47 // pred_fallthru
          _
        %s375 = sand.u32 %s50, 1
        %s376 = scalar_lea.sflag [#allocation3], %s375
        %s377 = sand.u32 %s50, 1
        %s378 = smul.addr %s377, 8
        %s379 = scalar_lea.vmem [#allocation2], %s378
        %p380 = pneg %p63
        %p381 = pneg %p60
        %s382 = sand.u32 %s28, 1
        %s383 = scalar_lea.sflag [#allocation6], %s382
        %s384 = sand.u32 %s76, 1
        %s385 = smul.addr %s384, 8
        %s386 = scalar_lea.vmem [#allocation5], %s385
        %p387 = pneg %p89
        %p388 = pneg %p86
        %s389 = sand.u32 %s28, 1
        %s390 = scalar_lea.sflag [#allocation6], %s389
        %s391 = sand.u32 %s102, 1
        %s392 = smul.addr %s391, 8
        %s393 = scalar_lea.vmem [#allocation7], %s392
        %p394 = pneg %p115
        %p395 = pneg %p112
        %p396 = pneg %p136
        %p397 = pneg %p133
        %p398 = pneg %p157
        %p399 = pneg %p154
        %p400 = pneg %p178
        %p401 = pneg %p175
        %p402 = pneg %p199
        %p403 = pneg %p196
        %p404 = pneg %p227
        %p405 = pneg %p224
        %s406 = sand.u32 %s214, 1
        %s407 = scalar_lea.sflag [#allocation4], %s406
        %s408 = sand.u32 %s214, 1
        %s409 = smul.addr %s408, 8
        %s410 = scalar_lea.vmem [#allocation11], %s409
        %v412 = vld [vmem:[%s344] sm:$0xff]
        %v413 = vpack.c.bf16 %v412, %v412
        %v414 = vld [vmem:[#allocation8] sm:$0xf]
        %v415 = vld [vmem:[#allocation8 + $0x4] sm:$0xf]
        %v416 = vld [vmem:[#allocation8 + $0x8] sm:$0xf]
        %v417 = vld [vmem:[#allocation8 + $0xc] sm:$0xf]
        %v418 = vld [vmem:[%s4] sm:$0x1]
        %v420 = vlaneseq
        %v421 = vshrl.u32 %v420, 7
        %v422 = vsub.s32 0, %v421
        %v423 = vrot.slane %v418, %v422
        %v429 = vunpack.c.l.b16 %v414
        %v430 = vunpack.c.l.b16 %v415
        %v431 = vunpack.c.l.b16 %v416
        %v432 = vunpack.c.l.b16 %v417
        %v433 = vpack.c.b16 %v430, %v429
        %v434 = vpack.c.b16 %v432, %v431
        %vm437 = vcmask 261120
        %v439 = vsel %vm437, %v413, 0
        %441 = vmatprep.subr.bf16.mxu0 0
        %442 = vmatpush1.bf16.msra.mxu0 0
        %443 = vmatprep.subr.bf16.mxu0 0
        %444 = vmatpush1.bf16.msra.mxu0 0
        %445 = vmatprep.subr.bf16.mxu0 0
        %446 = vmatpush1.bf16.msra.mxu0 0
        %447 = vmatprep.subr.bf16.mxu0 0
        %448 = vmatpush1.bf16.msra.mxu0 0
        %449 = vmatprep.subr.bf16.mxu0 0
        %450 = vmatpush1.bf16.msra.mxu0 0
        %451 = vmatprep.subr.bf16.mxu0 0
        %452 = vmatpush1.bf16.msra.mxu0 0
        %453 = vmatprep.subr.bf16.mxu0 0
        %454 = vmatpush1.bf16.msra.mxu0 %v434
        %455 = vmatprep.subr.bf16.mxu0 0
        %456 = vmatpush1.bf16.msra.mxu0 %v433
        %457 = vmatprep.subr.bf16.mxu0 0
        %458 = vmatpush2.bf16.msra.mxu0 0
        %459 = vmatprep.subr.bf16.mxu0 0
        %460 = vmatpush2.bf16.msra.mxu0 0
        %461 = vmatprep.subr.bf16.mxu0 0
        %462 = vmatpush2.bf16.msra.mxu0 0
        %463 = vmatprep.subr.bf16.mxu0 0
        %464 = vmatpush2.bf16.msra.mxu0 0
        %465 = vmatprep.subr.bf16.mxu0 0
        %466 = vmatpush2.bf16.msra.mxu0 0
        %467 = vmatprep.subr.bf16.mxu0 0
        %468 = vmatpush2.bf16.msra.mxu0 0
        %469 = vmatprep.subr.bf16.mxu0 0
        %470 = vmatpush2.bf16.msra.mxu0 0
        %471 = vmatprep.subr.bf16.mxu0 0
        %472 = vmatpush2.bf16.msra.mxu0 0
        %473 = vmatprep.mubr.bf16.mxu0 0
        %474 = vmatmul.mubr.bf16.gmra.mxu0 %v439
        %v475 = vpop.f32.mrf.mxu0
        %v476 = vadd.f32 %v423, %v475
        %v477 = vpop.f32.mrf.mxu0
        %v478 = vpop.f32.mrf.mxu0
        %v479 = vpop.f32.mrf.mxu0
        %480 = vdwg.mxu0
        %v481 = vpack.c.bf16 %v476, %v476
        %v482 = vld [vmem:[%s353] sm:$0xff]
        %v483 = vpack.c.bf16 %v482, %v482
        %s484 = scalar_lea.vmem [#allocation8], 16
        %v485 = vld [vmem:[%s484] sm:$0xf]
        %v486 = vld [vmem:[%s484 + $0x4] sm:$0xf]
        %v487 = vld [vmem:[%s484 + $0x8] sm:$0xf]
        %v488 = vld [vmem:[%s484 + $0xc] sm:$0xf]
        %s489 = scalar_lea.vmem %s4, 1
        %v490 = vld [vmem:[%s489] sm:$0x1]
        %v492 = vlaneseq
        %v493 = vshrl.u32 %v492, 7
        %v494 = vsub.s32 0, %v493
        %v495 = vrot.slane %v490, %v494
        %v501 = vunpack.c.l.b16 %v485
        %v502 = vunpack.c.l.b16 %v486
        %v503 = vunpack.c.l.b16 %v487
        %v504 = vunpack.c.l.b16 %v488
        %v505 = vpack.c.b16 %v502, %v501
        %v506 = vpack.c.b16 %v504, %v503
        %v510 = vsel %vm437, %v483, 0
        %512 = vmatprep.subr.bf16.mxu0 0
        %513 = vmatpush1.bf16.msra.mxu0 0
        %514 = vmatprep.subr.bf16.mxu0 0
        %515 = vmatpush1.bf16.msra.mxu0 0
        %516 = vmatprep.subr.bf16.mxu0 0
        %517 = vmatpush1.bf16.msra.mxu0 0
        %518 = vmatprep.subr.bf16.mxu0 0
        %519 = vmatpush1.bf16.msra.mxu0 0
        %520 = vmatprep.subr.bf16.mxu0 0
        %521 = vmatpush1.bf16.msra.mxu0 0
        %522 = vmatprep.subr.bf16.mxu0 0
        %523 = vmatpush1.bf16.msra.mxu0 0
        %524 = vmatprep.subr.bf16.mxu0 0
        %525 = vmatpush1.bf16.msra.mxu0 %v506
        %526 = vmatprep.subr.bf16.mxu0 0
        %527 = vmatpush1.bf16.msra.mxu0 %v505
        %528 = vmatprep.subr.bf16.mxu0 0
        %529 = vmatpush2.bf16.msra.mxu0 0
        %530 = vmatprep.subr.bf16.mxu0 0
        %531 = vmatpush2.bf16.msra.mxu0 0
        %532 = vmatprep.subr.bf16.mxu0 0
        %533 = vmatpush2.bf16.msra.mxu0 0
        %534 = vmatprep.subr.bf16.mxu0 0
        %535 = vmatpush2.bf16.msra.mxu0 0
        %536 = vmatprep.subr.bf16.mxu0 0
        %537 = vmatpush2.bf16.msra.mxu0 0
        %538 = vmatprep.subr.bf16.mxu0 0
        %539 = vmatpush2.bf16.msra.mxu0 0
        %540 = vmatprep.subr.bf16.mxu0 0
        %541 = vmatpush2.bf16.msra.mxu0 0
        %542 = vmatprep.subr.bf16.mxu0 0
        %543 = vmatpush2.bf16.msra.mxu0 0
        %544 = vmatprep.mubr.bf16.mxu0 0
        %545 = vmatmul.mubr.bf16.gmra.mxu0 %v510
        %v546 = vpop.f32.mrf.mxu0
        %v547 = vadd.f32 %v495, %v546
        %v548 = vpop.f32.mrf.mxu0
        %v549 = vpop.f32.mrf.mxu0
        %v550 = vpop.f32.mrf.mxu0
        %551 = vdwg.mxu0
        %v552 = vpack.c.bf16 %v547, %v547
        %v553 = vld [vmem:[%s362] sm:$0xff]
        %v554 = vpack.c.bf16 %v553, %v553
        %s555 = scalar_lea.vmem [#allocation8], 32
        %v556 = vld [vmem:[%s555] sm:$0xf]
        %v557 = vld [vmem:[%s555 + $0x4] sm:$0xf]
        %v558 = vld [vmem:[%s555 + $0x8] sm:$0xf]
        %v559 = vld [vmem:[%s555 + $0xc] sm:$0xf]
        %s560 = scalar_lea.vmem %s4, 2
        %v561 = vld [vmem:[%s560] sm:$0x1]
        %v563 = vlaneseq
        %v564 = vshrl.u32 %v563, 7
        %v565 = vsub.s32 0, %v564
        %v566 = vrot.slane %v561, %v565
        %v572 = vunpack.c.l.b16 %v556
        %v573 = vunpack.c.l.b16 %v557
        %v574 = vunpack.c.l.b16 %v558
        %v575 = vunpack.c.l.b16 %v559
        %v576 = vpack.c.b16 %v573, %v572
        %v577 = vpack.c.b16 %v575, %v574
        %v581 = vsel %vm437, %v554, 0
        %583 = vmatprep.subr.bf16.mxu0 0
        %584 = vmatpush1.bf16.msra.mxu0 0
        %585 = vmatprep.subr.bf16.mxu0 0
        %586 = vmatpush1.bf16.msra.mxu0 0
        %587 = vmatprep.subr.bf16.mxu0 0
        %588 = vmatpush1.bf16.msra.mxu0 0
        %589 = vmatprep.subr.bf16.mxu0 0
        %590 = vmatpush1.bf16.msra.mxu0 0
        %591 = vmatprep.subr.bf16.mxu0 0
        %592 = vmatpush1.bf16.msra.mxu0 0
        %593 = vmatprep.subr.bf16.mxu0 0
        %594 = vmatpush1.bf16.msra.mxu0 0
        %595 = vmatprep.subr.bf16.mxu0 0
        %596 = vmatpush1.bf16.msra.mxu0 %v577
        %597 = vmatprep.subr.bf16.mxu0 0
        %598 = vmatpush1.bf16.msra.mxu0 %v576
        %599 = vmatprep.subr.bf16.mxu0 0
        %600 = vmatpush2.bf16.msra.mxu0 0
        %601 = vmatprep.subr.bf16.mxu0 0
        %602 = vmatpush2.bf16.msra.mxu0 0
        %603 = vmatprep.subr.bf16.mxu0 0
        %604 = vmatpush2.bf16.msra.mxu0 0
        %605 = vmatprep.subr.bf16.mxu0 0
        %606 = vmatpush2.bf16.msra.mxu0 0
        %607 = vmatprep.subr.bf16.mxu0 0
        %608 = vmatpush2.bf16.msra.mxu0 0
        %609 = vmatprep.subr.bf16.mxu0 0
        %610 = vmatpush2.bf16.msra.mxu0 0
        %611 = vmatprep.subr.bf16.mxu0 0
        %612 = vmatpush2.bf16.msra.mxu0 0
        %613 = vmatprep.subr.bf16.mxu0 0
        %614 = vmatpush2.bf16.msra.mxu0 0
        %615 = vmatprep.mubr.bf16.mxu0 0
        %616 = vmatmul.mubr.bf16.gmra.mxu0 %v581
        %v617 = vpop.f32.mrf.mxu0
        %v618 = vadd.f32 %v566, %v617
        %v619 = vpop.f32.mrf.mxu0
        %v620 = vpop.f32.mrf.mxu0
        %v621 = vpop.f32.mrf.mxu0
        %622 = vdwg.mxu0
        %v623 = vpack.c.bf16 %v618, %v618
        %vm624 = vcmask 64512
        %v626 = vsel %vm624, %v481, 0
        %v629 = vsel %vm624, %v552, 0
        %631 = vmatprep.subr.bf16.mxu0 0
        %632 = vmatpush1.bf16.xpose.msra.mxu0 0
        %633 = vmatprep.subr.bf16.mxu0 0
        %634 = vmatpush1.bf16.xpose.msra.mxu0 0
        %635 = vmatprep.subr.bf16.mxu0 0
        %636 = vmatpush1.bf16.xpose.msra.mxu0 0
        %637 = vmatprep.subr.bf16.mxu0 0
        %638 = vmatpush1.bf16.xpose.msra.mxu0 0
        %639 = vmatprep.subr.bf16.mxu0 0
        %640 = vmatpush1.bf16.xpose.msra.mxu0 0
        %641 = vmatprep.subr.bf16.mxu0 0
        %642 = vmatpush1.bf16.xpose.msra.mxu0 0
        %643 = vmatprep.subr.bf16.mxu0 0
        %644 = vmatpush1.bf16.xpose.msra.mxu0 0
        %645 = vmatprep.subr.bf16.mxu0 0
        %646 = vmatpush1.bf16.xpose.msra.mxu0 %v629
        %647 = vmatprep.subr.bf16.mxu0 0
        %648 = vmatpush2.bf16.xpose.msra.mxu0 0
        %649 = vmatprep.subr.bf16.mxu0 0
        %650 = vmatpush2.bf16.xpose.msra.mxu0 0
        %651 = vmatprep.subr.bf16.mxu0 0
        %652 = vmatpush2.bf16.xpose.msra.mxu0 0
        %653 = vmatprep.subr.bf16.mxu0 0
        %654 = vmatpush2.bf16.xpose.msra.mxu0 0
        %655 = vmatprep.subr.bf16.mxu0 0
        %656 = vmatpush2.bf16.xpose.msra.mxu0 0
        %657 = vmatprep.subr.bf16.mxu0 0
        %658 = vmatpush2.bf16.xpose.msra.mxu0 0
        %659 = vmatprep.subr.bf16.mxu0 0
        %660 = vmatpush2.bf16.xpose.msra.mxu0 0
        %661 = vmatprep.subr.bf16.mxu0 0
        %662 = vmatpush2.bf16.xpose.msra.mxu0 0
        %663 = vmatprep.mubr.bf16.mxu0 0
        %664 = vmatmul.mubr.bf16.gmra.mxu0 %v626
        %v665 = vpop.f32.mrf.mxu0
        %v666 = vadd.f32 0.0, %v665
        %v667 = vpop.f32.mrf.mxu0
        %v668 = vpop.f32.mrf.mxu0
        %v669 = vpop.f32.mrf.mxu0
        %670 = vdwg.mxu0
        %v671 = vsel %vm624, %v666, -inf
        %672 = vmax.xlane.f32.xlu0 %v671
        %v673 = vpop.xlane.xlu0 %672
        %v674 = vsub.f32 %v666, %v673
        %v675 = vmul.f32 %v674, 1.442695
        %v676 = vpow.pop %v675
        %v677 = vsel %vm624, %v676, 0.0
        %678 = vadd.xlane.f32.xlu0 %v677
        %v679 = vpop.xlane.xlu0 %678
        %v680 = vpack.c.bf16 %v676, %v676
        %v682 = vsel %vm624, %v680, 0
        %vm684 = vcmask 1043456
        %v686 = vsel %vm684, %v623, 0
        %688 = vmatprep.subr.bf16.mxu0 0
        %689 = vmatpush1.bf16.msra.mxu0 0
        %690 = vmatprep.subr.bf16.mxu0 0
        %691 = vmatpush1.bf16.msra.mxu0 0
        %692 = vmatprep.subr.bf16.mxu0 0
        %693 = vmatpush1.bf16.msra.mxu0 0
        %694 = vmatprep.subr.bf16.mxu0 0
        %695 = vmatpush1.bf16.msra.mxu0 0
        %696 = vmatprep.subr.bf16.mxu0 0
        %697 = vmatpush1.bf16.msra.mxu0 0
        %698 = vmatprep.subr.bf16.mxu0 0
        %699 = vmatpush1.bf16.msra.mxu0 0
        %700 = vmatprep.subr.bf16.mxu0 0
        %701 = vmatpush1.bf16.msra.mxu0 0
        %702 = vmatprep.subr.bf16.mxu0 0
        %703 = vmatpush1.bf16.msra.mxu0 %v686
        %704 = vmatprep.subr.bf16.mxu0 0
        %705 = vmatpush2.bf16.msra.mxu0 0
        %706 = vmatprep.subr.bf16.mxu0 0
        %707 = vmatpush2.bf16.msra.mxu0 0
        %708 = vmatprep.subr.bf16.mxu0 0
        %709 = vmatpush2.bf16.msra.mxu0 0
        %710 = vmatprep.subr.bf16.mxu0 0
        %711 = vmatpush2.bf16.msra.mxu0 0
        %712 = vmatprep.subr.bf16.mxu0 0
        %713 = vmatpush2.bf16.msra.mxu0 0
        %714 = vmatprep.subr.bf16.mxu0 0
        %715 = vmatpush2.bf16.msra.mxu0 0
        %716 = vmatprep.subr.bf16.mxu0 0
        %717 = vmatpush2.bf16.msra.mxu0 0
        %718 = vmatprep.subr.bf16.mxu0 0
        %719 = vmatpush2.bf16.msra.mxu0 0
        %720 = vmatprep.mubr.bf16.mxu0 0
        %721 = vmatmul.mubr.bf16.gmra.mxu0 %v682
        %v722 = vpop.f32.mrf.mxu0
        %v723 = vadd.f32 0.0, %v722
        %v724 = vpop.f32.mrf.mxu0
        %v725 = vpop.f32.mrf.mxu0
        %v726 = vpop.f32.mrf.mxu0
        %727 = vdwg.mxu0
        %v728 = vrcp.pop %v679
        %v729 = vmul.f32 1.0, %v728
        %v730 = vmul.f32 %v723, %v729
        %v731 = vpack.c.bf16 %v730, %v730
        %v732 = vld [vmem:[#allocation10] sm:$0xf]
        %734 = vrot.lane.b32.xlu0 %v481, 120
        %v735 = vpop.permute.xlu0 %734
        %737 = vrot.lane.b32.xlu0 %v552, 120
        %v738 = vpop.permute.xlu0 %737
        %v740 = vsel %vm624, %v735, 0
        %v743 = vsel %vm624, %v738, 0
        %745 = vmatprep.subr.bf16.mxu0 0
        %746 = vmatpush1.bf16.xpose.msra.mxu0 0
        %747 = vmatprep.subr.bf16.mxu0 0
        %748 = vmatpush1.bf16.xpose.msra.mxu0 0
        %749 = vmatprep.subr.bf16.mxu0 0
        %750 = vmatpush1.bf16.xpose.msra.mxu0 0
        %751 = vmatprep.subr.bf16.mxu0 0
        %752 = vmatpush1.bf16.xpose.msra.mxu0 0
        %753 = vmatprep.subr.bf16.mxu0 0
        %754 = vmatpush1.bf16.xpose.msra.mxu0 0
        %755 = vmatprep.subr.bf16.mxu0 0
        %756 = vmatpush1.bf16.xpose.msra.mxu0 0
        %757 = vmatprep.subr.bf16.mxu0 0
        %758 = vmatpush1.bf16.xpose.msra.mxu0 0
        %759 = vmatprep.subr.bf16.mxu0 0
        %760 = vmatpush1.bf16.xpose.msra.mxu0 %v743
        %761 = vmatprep.subr.bf16.mxu0 0
        %762 = vmatpush2.bf16.xpose.msra.mxu0 0
        %763 = vmatprep.subr.bf16.mxu0 0
        %764 = vmatpush2.bf16.xpose.msra.mxu0 0
        %765 = vmatprep.subr.bf16.mxu0 0
        %766 = vmatpush2.bf16.xpose.msra.mxu0 0
        %767 = vmatprep.subr.bf16.mxu0 0
        %768 = vmatpush2.bf16.xpose.msra.mxu0 0
        %769 = vmatprep.subr.bf16.mxu0 0
        %770 = vmatpush2.bf16.xpose.msra.mxu0 0
        %771 = vmatprep.subr.bf16.mxu0 0
        %772 = vmatpush2.bf16.xpose.msra.mxu0 0
        %773 = vmatprep.subr.bf16.mxu0 0
        %774 = vmatpush2.bf16.xpose.msra.mxu0 0
        %775 = vmatprep.subr.bf16.mxu0 0
        %776 = vmatpush2.bf16.xpose.msra.mxu0 0
        %777 = vmatprep.mubr.bf16.mxu0 0
        %778 = vmatmul.mubr.bf16.gmra.mxu0 %v740
        %v779 = vpop.f32.mrf.mxu0
        %v780 = vadd.f32 0.0, %v779
        %v781 = vpop.f32.mrf.mxu0
        %v782 = vpop.f32.mrf.mxu0
        %v783 = vpop.f32.mrf.mxu0
        %784 = vdwg.mxu0
        %v785 = vsel %vm624, %v780, -inf
        %786 = vmax.xlane.f32.xlu0 %v785
        %v787 = vpop.xlane.xlu0 %786
        %v788 = vsub.f32 %v780, %v787
        %v789 = vmul.f32 %v788, 1.442695
        %v790 = vpow.pop %v789
        %v791 = vsel %vm624, %v790, 0.0
        %792 = vadd.xlane.f32.xlu0 %v791
        %v793 = vpop.xlane.xlu0 %792
        %v794 = vpack.c.bf16 %v790, %v790
        %796 = vrot.lane.b32.xlu0 %v623, 120
        %v797 = vpop.permute.xlu0 %796
        %v799 = vsel %vm624, %v794, 0
        %v802 = vsel %vm684, %v797, 0
        %804 = vmatprep.subr.bf16.mxu0 0
        %805 = vmatpush1.bf16.msra.mxu0 0
        %806 = vmatprep.subr.bf16.mxu0 0
        %807 = vmatpush1.bf16.msra.mxu0 0
        %808 = vmatprep.subr.bf16.mxu0 0
        %809 = vmatpush1.bf16.msra.mxu0 0
        %810 = vmatprep.subr.bf16.mxu0 0
        %811 = vmatpush1.bf16.msra.mxu0 0
        %812 = vmatprep.subr.bf16.mxu0 0
        %813 = vmatpush1.bf16.msra.mxu0 0
        %814 = vmatprep.subr.bf16.mxu0 0
        %815 = vmatpush1.bf16.msra.mxu0 0
        %816 = vmatprep.subr.bf16.mxu0 0
        %817 = vmatpush1.bf16.msra.mxu0 0
        %818 = vmatprep.subr.bf16.mxu0 0
        %819 = vmatpush1.bf16.msra.mxu0 %v802
        %820 = vmatprep.subr.bf16.mxu0 0
        %821 = vmatpush2.bf16.msra.mxu0 0
        %822 = vmatprep.subr.bf16.mxu0 0
        %823 = vmatpush2.bf16.msra.mxu0 0
        %824 = vmatprep.subr.bf16.mxu0 0
        %825 = vmatpush2.bf16.msra.mxu0 0
        %826 = vmatprep.subr.bf16.mxu0 0
        %827 = vmatpush2.bf16.msra.mxu0 0
        %828 = vmatprep.subr.bf16.mxu0 0
        %829 = vmatpush2.bf16.msra.mxu0 0
        %830 = vmatprep.subr.bf16.mxu0 0
        %831 = vmatpush2.bf16.msra.mxu0 0
        %832 = vmatprep.subr.bf16.mxu0 0
        %833 = vmatpush2.bf16.msra.mxu0 0
        %834 = vmatprep.subr.bf16.mxu0 0
        %835 = vmatpush2.bf16.msra.mxu0 0
        %836 = vmatprep.mubr.bf16.mxu0 0
        %837 = vmatmul.mubr.bf16.gmra.mxu0 %v799
        %v838 = vpop.f32.mrf.mxu0
        %v839 = vadd.f32 0.0, %v838
        %v840 = vpop.f32.mrf.mxu0
        %v841 = vpop.f32.mrf.mxu0
        %v842 = vpop.f32.mrf.mxu0
        %843 = vdwg.mxu0
        %v844 = vrcp.pop %v793
        %v845 = vmul.f32 1.0, %v844
        %v846 = vmul.f32 %v839, %v845
        %v847 = vpack.c.bf16 %v846, %v846
        %s848 = scalar_lea.vmem [#allocation10], 4
        %v849 = vld [vmem:[%s848] sm:$0xf]
        %v851 = vsel %vm624, %v847, 0
        %v854 = vsel %vm684, %v849, 0
        %856 = vmatprep.subr.bf16.mxu0 0
        %857 = vmatpush1.bf16.msra.mxu0 0
        %858 = vmatprep.subr.bf16.mxu0 0
        %859 = vmatpush1.bf16.msra.mxu0 0
        %860 = vmatprep.subr.bf16.mxu0 0
        %861 = vmatpush1.bf16.msra.mxu0 0
        %862 = vmatprep.subr.bf16.mxu0 0
        %863 = vmatpush1.bf16.msra.mxu0 0
        %864 = vmatprep.subr.bf16.mxu0 0
        %865 = vmatpush1.bf16.msra.mxu0 0
        %866 = vmatprep.subr.bf16.mxu0 0
        %867 = vmatpush1.bf16.msra.mxu0 0
        %868 = vmatprep.subr.bf16.mxu0 0
        %869 = vmatpush1.bf16.msra.mxu0 0
        %870 = vmatprep.subr.bf16.mxu0 0
        %871 = vmatpush1.bf16.msra.mxu0 %v854
        %872 = vmatprep.subr.bf16.mxu0 0
        %873 = vmatpush2.bf16.msra.mxu0 0
        %874 = vmatprep.subr.bf16.mxu0 0
        %875 = vmatpush2.bf16.msra.mxu0 0
        %876 = vmatprep.subr.bf16.mxu0 0
        %877 = vmatpush2.bf16.msra.mxu0 0
        %878 = vmatprep.subr.bf16.mxu0 0
        %879 = vmatpush2.bf16.msra.mxu0 0
        %880 = vmatprep.subr.bf16.mxu0 0
        %881 = vmatpush2.bf16.msra.mxu0 0
        %882 = vmatprep.subr.bf16.mxu0 0
        %883 = vmatpush2.bf16.msra.mxu0 0
        %884 = vmatprep.subr.bf16.mxu0 0
        %885 = vmatpush2.bf16.msra.mxu0 0
        %886 = vmatprep.subr.bf16.mxu0 0
        %887 = vmatpush2.bf16.msra.mxu0 0
        %888 = vmatprep.mubr.bf16.mxu0 0
        %889 = vmatmul.mubr.bf16.gmra.mxu0 %v851
        %v890 = vpop.f32.mrf.mxu0
        %v891 = vadd.f32 0.0, %v890
        %v892 = vpop.f32.mrf.mxu0
        %v893 = vpop.f32.mrf.mxu0
        %v894 = vpop.f32.mrf.mxu0
        %895 = vdwg.mxu0
        %v897 = vsel %vm624, %v731, 0
        %v900 = vsel %vm684, %v732, 0
        %902 = vmatprep.subr.bf16.mxu0 0
        %903 = vmatpush1.bf16.msra.mxu0 0
        %904 = vmatprep.subr.bf16.mxu0 0
        %905 = vmatpush1.bf16.msra.mxu0 0
        %906 = vmatprep.subr.bf16.mxu0 0
        %907 = vmatpush1.bf16.msra.mxu0 0
        %908 = vmatprep.subr.bf16.mxu0 0
        %909 = vmatpush1.bf16.msra.mxu0 0
        %910 = vmatprep.subr.bf16.mxu0 0
        %911 = vmatpush1.bf16.msra.mxu0 0
        %912 = vmatprep.subr.bf16.mxu0 0
        %913 = vmatpush1.bf16.msra.mxu0 0
        %914 = vmatprep.subr.bf16.mxu0 0
        %915 = vmatpush1.bf16.msra.mxu0 0
        %916 = vmatprep.subr.bf16.mxu0 0
        %917 = vmatpush1.bf16.msra.mxu0 %v900
        %918 = vmatprep.subr.bf16.mxu0 0
        %919 = vmatpush2.bf16.msra.mxu0 0
        %920 = vmatprep.subr.bf16.mxu0 0
        %921 = vmatpush2.bf16.msra.mxu0 0
        %922 = vmatprep.subr.bf16.mxu0 0
        %923 = vmatpush2.bf16.msra.mxu0 0
        %924 = vmatprep.subr.bf16.mxu0 0
        %925 = vmatpush2.bf16.msra.mxu0 0
        %926 = vmatprep.subr.bf16.mxu0 0
        %927 = vmatpush2.bf16.msra.mxu0 0
        %928 = vmatprep.subr.bf16.mxu0 0
        %929 = vmatpush2.bf16.msra.mxu0 0
        %930 = vmatprep.subr.bf16.mxu0 0
        %931 = vmatpush2.bf16.msra.mxu0 0
        %932 = vmatprep.subr.bf16.mxu0 0
        %933 = vmatpush2.bf16.msra.mxu0 0
        %934 = vmatprep.mubr.bf16.mxu0 0
        %935 = vmatmul.mubr.bf16.gmra.mxu0 %v897
        %v936 = vpop.f32.mrf.mxu0
        %v937 = vadd.f32 %v891, %v936
        %v938 = vpop.f32.mrf.mxu0
        %v939 = vpop.f32.mrf.mxu0
        %v940 = vpop.f32.mrf.mxu0
        %941 = vdwg.mxu0
        %942 = vrot.lane.b32.xlu0 %v481, 112
        %v943 = vpop.permute.xlu0 %942
        %944 = vrot.lane.b32.xlu0 %v552, 112
        %v945 = vpop.permute.xlu0 %944
        %v947 = vsel %vm624, %v943, 0
        %v950 = vsel %vm624, %v945, 0
        %952 = vmatprep.subr.bf16.mxu0 0
        %953 = vmatpush1.bf16.xpose.msra.mxu0 0
        %954 = vmatprep.subr.bf16.mxu0 0
        %955 = vmatpush1.bf16.xpose.msra.mxu0 0
        %956 = vmatprep.subr.bf16.mxu0 0
        %957 = vmatpush1.bf16.xpose.msra.mxu0 0
        %958 = vmatprep.subr.bf16.mxu0 0
        %959 = vmatpush1.bf16.xpose.msra.mxu0 0
        %960 = vmatprep.subr.bf16.mxu0 0
        %961 = vmatpush1.bf16.xpose.msra.mxu0 0
        %962 = vmatprep.subr.bf16.mxu0 0
        %963 = vmatpush1.bf16.xpose.msra.mxu0 0
        %964 = vmatprep.subr.bf16.mxu0 0
        %965 = vmatpush1.bf16.xpose.msra.mxu0 0
        %966 = vmatprep.subr.bf16.mxu0 0
        %967 = vmatpush1.bf16.xpose.msra.mxu0 %v950
        %968 = vmatprep.subr.bf16.mxu0 0
        %969 = vmatpush2.bf16.xpose.msra.mxu0 0
        %970 = vmatprep.subr.bf16.mxu0 0
        %971 = vmatpush2.bf16.xpose.msra.mxu0 0
        %972 = vmatprep.subr.bf16.mxu0 0
        %973 = vmatpush2.bf16.xpose.msra.mxu0 0
        %974 = vmatprep.subr.bf16.mxu0 0
        %975 = vmatpush2.bf16.xpose.msra.mxu0 0
        %976 = vmatprep.subr.bf16.mxu0 0
        %977 = vmatpush2.bf16.xpose.msra.mxu0 0
        %978 = vmatprep.subr.bf16.mxu0 0
        %979 = vmatpush2.bf16.xpose.msra.mxu0 0
        %980 = vmatprep.subr.bf16.mxu0 0
        %981 = vmatpush2.bf16.xpose.msra.mxu0 0
        %982 = vmatprep.subr.bf16.mxu0 0
        %983 = vmatpush2.bf16.xpose.msra.mxu0 0
        %984 = vmatprep.mubr.bf16.mxu0 0
        %985 = vmatmul.mubr.bf16.gmra.mxu0 %v947
        %v986 = vpop.f32.mrf.mxu0
        %v987 = vadd.f32 0.0, %v986
        %v988 = vpop.f32.mrf.mxu0
        %v989 = vpop.f32.mrf.mxu0
        %v990 = vpop.f32.mrf.mxu0
        %991 = vdwg.mxu0
        %v992 = vsel %vm624, %v987, -inf
        %993 = vmax.xlane.f32.xlu0 %v992
        %v994 = vpop.xlane.xlu0 %993
        %v995 = vsub.f32 %v987, %v994
        %v996 = vmul.f32 %v995, 1.442695
        %v997 = vpow.pop %v996
        %v998 = vsel %vm624, %v997, 0.0
        %999 = vadd.xlane.f32.xlu0 %v998
        %v1000 = vpop.xlane.xlu0 %999
        %v1001 = vpack.c.bf16 %v997, %v997
        %1002 = vrot.lane.b32.xlu0 %v623, 112
        %v1003 = vpop.permute.xlu0 %1002
        %v1005 = vsel %vm624, %v1001, 0
        %v1008 = vsel %vm684, %v1003, 0
        %1010 = vmatprep.subr.bf16.mxu0 0
        %1011 = vmatpush1.bf16.msra.mxu0 0
        %1012 = vmatprep.subr.bf16.mxu0 0
        %1013 = vmatpush1.bf16.msra.mxu0 0
        %1014 = vmatprep.subr.bf16.mxu0 0
        %1015 = vmatpush1.bf16.msra.mxu0 0
        %1016 = vmatprep.subr.bf16.mxu0 0
        %1017 = vmatpush1.bf16.msra.mxu0 0
        %1018 = vmatprep.subr.bf16.mxu0 0
        %1019 = vmatpush1.bf16.msra.mxu0 0
        %1020 = vmatprep.subr.bf16.mxu0 0
        %1021 = vmatpush1.bf16.msra.mxu0 0
        %1022 = vmatprep.subr.bf16.mxu0 0
        %1023 = vmatpush1.bf16.msra.mxu0 0
        %1024 = vmatprep.subr.bf16.mxu0 0
        %1025 = vmatpush1.bf16.msra.mxu0 %v1008
        %1026 = vmatprep.subr.bf16.mxu0 0
        %1027 = vmatpush2.bf16.msra.mxu0 0
        %1028 = vmatprep.subr.bf16.mxu0 0
        %1029 = vmatpush2.bf16.msra.mxu0 0
        %1030 = vmatprep.subr.bf16.mxu0 0
        %1031 = vmatpush2.bf16.msra.mxu0 0
        %1032 = vmatprep.subr.bf16.mxu0 0
        %1033 = vmatpush2.bf16.msra.mxu0 0
        %1034 = vmatprep.subr.bf16.mxu0 0
        %1035 = vmatpush2.bf16.msra.mxu0 0
        %1036 = vmatprep.subr.bf16.mxu0 0
        %1037 = vmatpush2.bf16.msra.mxu0 0
        %1038 = vmatprep.subr.bf16.mxu0 0
        %1039 = vmatpush2.bf16.msra.mxu0 0
        %1040 = vmatprep.subr.bf16.mxu0 0
        %1041 = vmatpush2.bf16.msra.mxu0 0
        %1042 = vmatprep.mubr.bf16.mxu0 0
        %1043 = vmatmul.mubr.bf16.gmra.mxu0 %v1005
        %v1044 = vpop.f32.mrf.mxu0
        %v1045 = vadd.f32 0.0, %v1044
        %v1046 = vpop.f32.mrf.mxu0
        %v1047 = vpop.f32.mrf.mxu0
        %v1048 = vpop.f32.mrf.mxu0
        %1049 = vdwg.mxu0
        %v1050 = vrcp.pop %v1000
        %v1051 = vmul.f32 1.0, %v1050
        %v1052 = vmul.f32 %v1045, %v1051
        %v1053 = vpack.c.bf16 %v1052, %v1052
        %s1054 = scalar_lea.vmem [#allocation10], 8
        %v1055 = vld [vmem:[%s1054] sm:$0xf]
        %v1057 = vsel %vm624, %v1053, 0
        %v1060 = vsel %vm684, %v1055, 0
        %1062 = vmatprep.subr.bf16.mxu0 0
        %1063 = vmatpush1.bf16.msra.mxu0 0
        %1064 = vmatprep.subr.bf16.mxu0 0
        %1065 = vmatpush1.bf16.msra.mxu0 0
        %1066 = vmatprep.subr.bf16.mxu0 0
        %1067 = vmatpush1.bf16.msra.mxu0 0
        %1068 = vmatprep.subr.bf16.mxu0 0
        %1069 = vmatpush1.bf16.msra.mxu0 0
        %1070 = vmatprep.subr.bf16.mxu0 0
        %1071 = vmatpush1.bf16.msra.mxu0 0
        %1072 = vmatprep.subr.bf16.mxu0 0
        %1073 = vmatpush1.bf16.msra.mxu0 0
        %1074 = vmatprep.subr.bf16.mxu0 0
        %1075 = vmatpush1.bf16.msra.mxu0 0
        %1076 = vmatprep.subr.bf16.mxu0 0
        %1077 = vmatpush1.bf16.msra.mxu0 %v1060
        %1078 = vmatprep.subr.bf16.mxu0 0
        %1079 = vmatpush2.bf16.msra.mxu0 0
        %1080 = vmatprep.subr.bf16.mxu0 0
        %1081 = vmatpush2.bf16.msra.mxu0 0
        %1082 = vmatprep.subr.bf16.mxu0 0
        %1083 = vmatpush2.bf16.msra.mxu0 0
        %1084 = vmatprep.subr.bf16.mxu0 0
        %1085 = vmatpush2.bf16.msra.mxu0 0
        %1086 = vmatprep.subr.bf16.mxu0 0
        %1087 = vmatpush2.bf16.msra.mxu0 0
        %1088 = vmatprep.subr.bf16.mxu0 0
        %1089 = vmatpush2.bf16.msra.mxu0 0
        %1090 = vmatprep.subr.bf16.mxu0 0
        %1091 = vmatpush2.bf16.msra.mxu0 0
        %1092 = vmatprep.subr.bf16.mxu0 0
        %1093 = vmatpush2.bf16.msra.mxu0 0
        %1094 = vmatprep.mubr.bf16.mxu0 0
        %1095 = vmatmul.mubr.bf16.gmra.mxu0 %v1057
        %v1096 = vpop.f32.mrf.mxu0
        %v1097 = vadd.f32 0.0, %v1096
        %v1098 = vpop.f32.mrf.mxu0
        %v1099 = vpop.f32.mrf.mxu0
        %v1100 = vpop.f32.mrf.mxu0
        %1101 = vdwg.mxu0
        %v1102 = vadd.f32 %v937, %v1097
        %1103 = vrot.lane.b32.xlu0 %v481, 104
        %v1104 = vpop.permute.xlu0 %1103
        %1105 = vrot.lane.b32.xlu0 %v552, 104
        %v1106 = vpop.permute.xlu0 %1105
        %v1108 = vsel %vm624, %v1104, 0
        %v1111 = vsel %vm624, %v1106, 0
        %1113 = vmatprep.subr.bf16.mxu0 0
        %1114 = vmatpush1.bf16.xpose.msra.mxu0 0
        %1115 = vmatprep.subr.bf16.mxu0 0
        %1116 = vmatpush1.bf16.xpose.msra.mxu0 0
        %1117 = vmatprep.subr.bf16.mxu0 0
        %1118 = vmatpush1.bf16.xpose.msra.mxu0 0
        %1119 = vmatprep.subr.bf16.mxu0 0
        %1120 = vmatpush1.bf16.xpose.msra.mxu0 0
        %1121 = vmatprep.subr.bf16.mxu0 0
        %1122 = vmatpush1.bf16.xpose.msra.mxu0 0
        %1123 = vmatprep.subr.bf16.mxu0 0
        %1124 = vmatpush1.bf16.xpose.msra.mxu0 0
        %1125 = vmatprep.subr.bf16.mxu0 0
        %1126 = vmatpush1.bf16.xpose.msra.mxu0 0
        %1127 = vmatprep.subr.bf16.mxu0 0
        %1128 = vmatpush1.bf16.xpose.msra.mxu0 %v1111
        %1129 = vmatprep.subr.bf16.mxu0 0
        %1130 = vmatpush2.bf16.xpose.msra.mxu0 0
        %1131 = vmatprep.subr.bf16.mxu0 0
        %1132 = vmatpush2.bf16.xpose.msra.mxu0 0
        %1133 = vmatprep.subr.bf16.mxu0 0
        %1134 = vmatpush2.bf16.xpose.msra.mxu0 0
        %1135 = vmatprep.subr.bf16.mxu0 0
        %1136 = vmatpush2.bf16.xpose.msra.mxu0 0
        %1137 = vmatprep.subr.bf16.mxu0 0
        %1138 = vmatpush2.bf16.xpose.msra.mxu0 0
        %1139 = vmatprep.subr.bf16.mxu0 0
        %1140 = vmatpush2.bf16.xpose.msra.mxu0 0
        %1141 = vmatprep.subr.bf16.mxu0 0
        %1142 = vmatpush2.bf16.xpose.msra.mxu0 0
        %1143 = vmatprep.subr.bf16.mxu0 0
        %1144 = vmatpush2.bf16.xpose.msra.mxu0 0
        %1145 = vmatprep.mubr.bf16.mxu0 0
        %1146 = vmatmul.mubr.bf16.gmra.mxu0 %v1108
        %v1147 = vpop.f32.mrf.mxu0
        %v1148 = vadd.f32 0.0, %v1147
        %v1149 = vpop.f32.mrf.mxu0
        %v1150 = vpop.f32.mrf.mxu0
        %v1151 = vpop.f32.mrf.mxu0
        %1152 = vdwg.mxu0
        %v1153 = vsel %vm624, %v1148, -inf
        %1154 = vmax.xlane.f32.xlu0 %v1153
        %v1155 = vpop.xlane.xlu0 %1154
        %v1156 = vsub.f32 %v1148, %v1155
        %v1157 = vmul.f32 %v1156, 1.442695
        %v1158 = vpow.pop %v1157
        %v1159 = vsel %vm624, %v1158, 0.0
        %1160 = vadd.xlane.f32.xlu0 %v1159
        %v1161 = vpop.xlane.xlu0 %1160
        %v1162 = vpack.c.bf16 %v1158, %v1158
        %1163 = vrot.lane.b32.xlu0 %v623, 104
        %v1164 = vpop.permute.xlu0 %1163
        %v1166 = vsel %vm624, %v1162, 0
        %v1169 = vsel %vm684, %v1164, 0
        %1171 = vmatprep.subr.bf16.mxu0 0
        %1172 = vmatpush1.bf16.msra.mxu0 0
        %1173 = vmatprep.subr.bf16.mxu0 0
        %1174 = vmatpush1.bf16.msra.mxu0 0
        %1175 = vmatprep.subr.bf16.mxu0 0
        %1176 = vmatpush1.bf16.msra.mxu0 0
        %1177 = vmatprep.subr.bf16.mxu0 0
        %1178 = vmatpush1.bf16.msra.mxu0 0
        %1179 = vmatprep.subr.bf16.mxu0 0
        %1180 = vmatpush1.bf16.msra.mxu0 0
        %1181 = vmatprep.subr.bf16.mxu0 0
        %1182 = vmatpush1.bf16.msra.mxu0 0
        %1183 = vmatprep.subr.bf16.mxu0 0
        %1184 = vmatpush1.bf16.msra.mxu0 0
        %1185 = vmatprep.subr.bf16.mxu0 0
        %1186 = vmatpush1.bf16.msra.mxu0 %v1169
        %1187 = vmatprep.subr.bf16.mxu0 0
        %1188 = vmatpush2.bf16.msra.mxu0 0
        %1189 = vmatprep.subr.bf16.mxu0 0
        %1190 = vmatpush2.bf16.msra.mxu0 0
        %1191 = vmatprep.subr.bf16.mxu0 0
        %1192 = vmatpush2.bf16.msra.mxu0 0
        %1193 = vmatprep.subr.bf16.mxu0 0
        %1194 = vmatpush2.bf16.msra.mxu0 0
        %1195 = vmatprep.subr.bf16.mxu0 0
        %1196 = vmatpush2.bf16.msra.mxu0 0
        %1197 = vmatprep.subr.bf16.mxu0 0
        %1198 = vmatpush2.bf16.msra.mxu0 0
        %1199 = vmatprep.subr.bf16.mxu0 0
        %1200 = vmatpush2.bf16.msra.mxu0 0
        %1201 = vmatprep.subr.bf16.mxu0 0
        %1202 = vmatpush2.bf16.msra.mxu0 0
        %1203 = vmatprep.mubr.bf16.mxu0 0
        %1204 = vmatmul.mubr.bf16.gmra.mxu0 %v1166
        %v1205 = vpop.f32.mrf.mxu0
        %v1206 = vadd.f32 0.0, %v1205
        %v1207 = vpop.f32.mrf.mxu0
        %v1208 = vpop.f32.mrf.mxu0
        %v1209 = vpop.f32.mrf.mxu0
        %1210 = vdwg.mxu0
        %v1211 = vrcp.pop %v1161
        %v1212 = vmul.f32 1.0, %v1211
        %v1213 = vmul.f32 %v1206, %v1212
        %v1214 = vpack.c.bf16 %v1213, %v1213
        %s1215 = scalar_lea.vmem [#allocation10], 12
        %v1216 = vld [vmem:[%s1215] sm:$0xf]
        %v1218 = vsel %vm624, %v1214, 0
        %v1221 = vsel %vm684, %v1216, 0
        %1223 = vmatprep.subr.bf16.mxu0 0
        %1224 = vmatpush1.bf16.msra.mxu0 0
        %1225 = vmatprep.subr.bf16.mxu0 0
        %1226 = vmatpush1.bf16.msra.mxu0 0
        %1227 = vmatprep.subr.bf16.mxu0 0
        %1228 = vmatpush1.bf16.msra.mxu0 0
        %1229 = vmatprep.subr.bf16.mxu0 0
        %1230 = vmatpush1.bf16.msra.mxu0 0
        %1231 = vmatprep.subr.bf16.mxu0 0
        %1232 = vmatpush1.bf16.msra.mxu0 0
        %1233 = vmatprep.subr.bf16.mxu0 0
        %1234 = vmatpush1.bf16.msra.mxu0 0
        %1235 = vmatprep.subr.bf16.mxu0 0
        %1236 = vmatpush1.bf16.msra.mxu0 0
        %1237 = vmatprep.subr.bf16.mxu0 0
        %1238 = vmatpush1.bf16.msra.mxu0 %v1221
        %1239 = vmatprep.subr.bf16.mxu0 0
        %1240 = vmatpush2.bf16.msra.mxu0 0
        %1241 = vmatprep.subr.bf16.mxu0 0
        %1242 = vmatpush2.bf16.msra.mxu0 0
        %1243 = vmatprep.subr.bf16.mxu0 0
        %1244 = vmatpush2.bf16.msra.mxu0 0
        %1245 = vmatprep.subr.bf16.mxu0 0
        %1246 = vmatpush2.bf16.msra.mxu0 0
        %1247 = vmatprep.subr.bf16.mxu0 0
        %1248 = vmatpush2.bf16.msra.mxu0 0
        %1249 = vmatprep.subr.bf16.mxu0 0
        %1250 = vmatpush2.bf16.msra.mxu0 0
        %1251 = vmatprep.subr.bf16.mxu0 0
        %1252 = vmatpush2.bf16.msra.mxu0 0
        %1253 = vmatprep.subr.bf16.mxu0 0
        %1254 = vmatpush2.bf16.msra.mxu0 0
        %1255 = vmatprep.mubr.bf16.mxu0 0
        %1256 = vmatmul.mubr.bf16.gmra.mxu0 %v1218
        %v1257 = vpop.f32.mrf.mxu0
        %v1258 = vadd.f32 0.0, %v1257
        %v1259 = vpop.f32.mrf.mxu0
        %v1260 = vpop.f32.mrf.mxu0
        %v1261 = vpop.f32.mrf.mxu0
        %1262 = vdwg.mxu0
        %v1263 = vadd.f32 %v1102, %v1258
        %v1264 = vld [vmem:[%s6] sm:$0x1]
        %v1266 = vlaneseq
        %v1267 = vshrl.u32 %v1266, 7
        %v1268 = vsub.s32 0, %v1267
        %v1269 = vrot.slane %v1264, %v1268
        %v1271 = vadd.f32 %v1263, %v1269
        %1272 = vst.msk [vmem:[%s410] sm:$0xff] %vm437, %v1271
        %s1273 = sand.u32 %s214, 1
        %s1274 = scalar_lea.sflag [#allocation4], %s1273
        %s1275 = sand.u32 %s214, 1
        %s1276 = smul.addr %s1275, 8
        %s1277 = scalar_lea.vmem [#allocation11], %s1276
        // Predicated region
        $region69: #{tpu_custom_call.1} parent=47 // pred_check
          %p1278 = pneg %p224
        $region70: #{tpu_custom_call.1} parent=47 // pred_check_branch
          %1280 = sbr.rel (%p1278) target = $region72
        $region71: #{tpu_custom_call.1} parent=47 // pred_region
          %s1282 = ssub.s32 128, 128
          %1283 = vsyncadd %s1274, %s1282
          %s1284 = sadd.s32 %s33, %s32
          %s1285 = smul.addr %s1284, 128
          %s1286 = scalar_lea.hbm %s7, %s1285
          %s1288 = sshll.u32 %s1277, 4
          %s1289 = int_to_ptr.vmem [resolvable:$true] %s1288
          %1291 = dma.vmem_to_hbm [thread:$0]  %s1289, 128, %s1286, %s1274
        $region72: #{tpu_custom_call.1} parent=47 // pred_fallthru
          _
      $region48: #{tpu_custom_call.1} parent=5 // pred_fallthru
        _
      %p1292 = scmp.le.s32.totalorder 2, %s23
      // Predicated region
      $region73: #{tpu_custom_call.1} parent=5 // pred_check
        %p1293 = pneg %p1292
      $region74: #{tpu_custom_call.1} parent=5 // pred_check_branch
        %1295 = sbr.rel (%p1293) target = $region76
      $region75: #{tpu_custom_call.1} parent=5 // pred_region
        %s1296 = ssub.s32 %s23, 2
        // Predicated region
        $region77: #{tpu_custom_call.1} parent=75 // pred_check
          %p1297 = pneg %p230
        $region78: #{tpu_custom_call.1} parent=75 // pred_check_branch
          %1299 = sbr.rel (%p1297) target = $region80
        $region79: #{tpu_custom_call.1} parent=75 // pred_region
          %s1300 = sand.u32 %s215, 1
          %s1301 = scalar_lea.sflag [#allocation4], %s1300
          %s1302 = sand.u32 %s215, 1
          %s1303 = smul.addr %s1302, 8
          %s1304 = scalar_lea.vmem [#allocation11], %s1303
          %1305 = dma.done %s1301, 128
        $region80: #{tpu_custom_call.1} parent=75 // pred_fallthru
          _
      $region76: #{tpu_custom_call.1} parent=5 // pred_fallthru
        _
    $region6: #{tpu_custom_call.1} parent=1 // loop_footer
      %s27 = sadd.s32 1, %s23
    $region7: #{tpu_custom_call.1} parent=1 // loop_footer_branch
      %22 = sbr.rel target = $region3
    $region8: #{tpu_custom_call.1} parent=1 // loop_exit
      _
    %1306 = vsyncpa [#allocation3], 1
    %s1307 = scalar_lea.sflag [#allocation3], 1
    %1308 = vsyncpa %s1307, 1
    %1309 = vsyncpa [#allocation6], 1
    %s1310 = scalar_lea.sflag [#allocation6], 1
    %1311 = vsyncpa %s1310, 1
    %1312 = vsyncpa [#allocation9], 1
    %1313 = vsyncpa [#allocation4], 1
    %s1314 = scalar_lea.sflag [#allocation4], 1
    %1315 = vsyncpa %s1314, 1

</llo_original>
